<compile_context>
chip_gen: v7x
topology: tpu7x:2x2x1
jax: 0.10.0
libtpu: 0.0.40
codegen_flags: <defaults>
</compile_context>

<pallas_src>
import functools

import jax
import jax.numpy as jnp
from jax.experimental import pallas as pl
from jax.experimental.pallas import tpu as pltpu


# ---------------------------------------------------------------------------
# Small helpers
# ---------------------------------------------------------------------------
def _round_up(x, m):
    return (x + m - 1) // m * m


def _atom_group(num_atoms):
    # per-action lane group (atoms padded up to a full 128-lane vreg tile)
    return _round_up(num_atoms, 128)


def conv_out(s, k, stride):
    return (s - k) // stride + 1


# ---------------------------------------------------------------------------
# Fused forward kernel
# ---------------------------------------------------------------------------
def _conv_rows(a, w_ref, b_ref, *, kh, stride, out_rows, irs):
    """One conv (or fc) layer on a 'row image' activation value.

    a:      (R_phys, L) value; logical input row r lives at physical row r*irs
            (other physical rows hold don't-care data).  L = W_in*C_in, lanes
            ordered (w, c).
    w_ref:  (kh*L, W_out*C_out) banded weight ref, kernel-row major.
    b_ref:  (1, W_out*C_out) f32 bias ref.
    Returns (span, W_out*C_out) f32 post-ReLU; logical output row oh lives at
    physical row oh * irs * stride.
    """
    L = a.shape[-1]
    span = irs * stride * (out_rows - 1) + 1
    acc = jnp.dot(a[0:span, :], w_ref[pl.ds(0, L), :],
                  preferred_element_type=jnp.float32)
    for i in range(1, kh):
        acc = acc + jnp.dot(a[i * irs:i * irs + span, :],
                            w_ref[pl.ds(i * L, L), :],
                            preferred_element_type=jnp.float32)
    return jnp.maximum(acc + b_ref[...], 0.0)


def _fused_forward_kernel(x_ref, w1_ref, b1_ref, w2_ref, b2_ref, w3_ref, b3_ref,
                          fw1_ref, fb1_ref, fw2_ref, fb2_ref, o_ref, *,
                          layer_cfg, num_actions, group):
    bf16 = jnp.bfloat16
    a = x_ref[0]                                   # (H, W*C) bf16 raw pixels
    irs = 1
    layer_refs = ((w1_ref, b1_ref), (w2_ref, b2_ref), (w3_ref, b3_ref),
                  (fw1_ref, fb1_ref))              # conv1, conv2, conv3, fc1(+ReLU)
    for (kh, stride, out_rows), (w_ref, b_ref) in zip(layer_cfg, layer_refs):
        a = _conv_rows(a, w_ref, b_ref, kh=kh, stride=stride,
                       out_rows=out_rows, irs=irs).astype(bf16)
        irs *= stride

    # a is now the fc1 output: (1, 512) bf16.  fc2 + per-action softmax (f32 epilogue).
    logits = jnp.dot(a, fw2_ref[...],
                     preferred_element_type=jnp.float32) + fb2_ref[...]   # (1, A*group)
    probs = []
    for act in range(num_actions):                 # static unroll, A is small
        s = logits[:, act * group:(act + 1) * group]      # 128-lane aligned slice
        m = jnp.max(s, axis=-1, keepdims=True)
        e = jnp.exp(s - m)                         # pad lanes: exp(-1e9 - m) == 0
        d = jnp.sum(e, axis=-1, keepdims=True)
        probs.append(e * pl.reciprocal(d, approx=False))   # exact: rows sum to 1
    o_ref[0] = jnp.concatenate(probs, axis=-1)     # one lane-dense (1, A*group) store


def forward(packed, x, *, num_actions, num_atoms):
    """x: (B, C, H, W) raw pixels in [0, 255]. Returns softmax probs (B, A, atoms)."""
    B, C, H, W = x.shape
    group = _atom_group(num_atoms)
    # bf16 cast BEFORE the layout transpose (halves that op's HBM traffic); pixel
    # values 0..255 are exact in bf16; /255 is folded into conv1's packed weight.
    xr = jnp.transpose(x.astype(jnp.bfloat16), (0, 2, 3, 1)).reshape(B, H, W * C)

    h1 = conv_out(H, 8, 4)
    h2 = conv_out(h1, 4, 2)
    h3 = conv_out(h2, 3, 1)
    layer_cfg = ((8, 4, h1), (4, 2, h2), (3, 1, h3), (h3, 1, 1))

    assert packed["w1"].shape[0] == 8 * W * C
    assert packed["fc2_w"].shape[1] == num_actions * group
    A_G = num_actions * group

    kernel = functools.partial(_fused_forward_kernel, layer_cfg=layer_cfg,
                               num_actions=num_actions, group=group)

    def _const2(shape):
        return pl.BlockSpec(shape, lambda b: (0, 0))

    out = pl.pallas_call(
        kernel,
        out_shape=jax.ShapeDtypeStruct((B, 1, A_G), jnp.float32),
        grid_spec=pltpu.PrefetchScalarGridSpec(
            num_scalar_prefetch=0,
            grid=(B,),
            in_specs=[
                pl.BlockSpec((1, H, W * C), lambda b: (b, 0, 0)),
                _const2(packed["w1"].shape), _const2(packed["b1"].shape),
                _const2(packed["w2"].shape), _const2(packed["b2"].shape),
                _const2(packed["w3"].shape), _const2(packed["b3"].shape),
                _const2(packed["fc1_w"].shape), _const2(packed["fc1_b"].shape),
                _const2(packed["fc2_w"].shape), _const2(packed["fc2_b"].shape),
            ],
            out_specs=pl.BlockSpec((1, 1, A_G), lambda b: (b, 0, 0)),
        ),
        compiler_params=pltpu.CompilerParams(
            dimension_semantics=("parallel",)),
    )(xr, packed["w1"], packed["b1"], packed["w2"], packed["b2"],
      packed["w3"], packed["b3"], packed["fc1_w"], packed["fc1_b"],
      packed["fc2_w"], packed["fc2_b"])

    # pure layout plumbing: slice the 128-wide atom groups back to `num_atoms`
    return out.reshape(B, num_actions, group)[:, :, :num_atoms]


# ---------------------------------------------------------------------------
# Parameters: raw (torch layout) init + init-time packing to matmul-ready layouts
# ---------------------------------------------------------------------------
def init_params(key, input_shape, num_actions, num_atoms):
    C, H, W = input_shape
    ortho = jax.nn.initializers.orthogonal(scale=1.0)   # layer_init: orthogonal, bias=0
    k1, k2, k3, k4, k5 = jax.random.split(key, 5)

    w1 = ortho(k1, (32, C * 8 * 8)).reshape(32, C, 8, 8)
    b1 = jnp.zeros((32,), jnp.float32)
    w2 = ortho(k2, (64, 32 * 4 * 4)).reshape(64, 32, 4, 4)
    b2 = jnp.zeros((64,), jnp.float32)
    w3 = ortho(k3, (64, 64 * 3 * 3)).reshape(64, 64, 3, 3)
    b3 = jnp.zeros((64,), jnp.float32)

    h1, w1s = conv_out(H, 8, 4), conv_out(W, 8, 4)
    h2, w2s = conv_out(h1, 4, 2), conv_out(w1s, 4, 2)
    h3, w3s = conv_out(h2, 3, 1), conv_out(w2s, 3, 1)
    feat = 64 * h3 * w3s

    fc1_w = ortho(k4, (512, feat))                       # PyTorch Linear: (out, in)
    fc1_b = jnp.zeros((512,), jnp.float32)
    fc2_w = ortho(k5, (num_actions * num_atoms, 512))
    fc2_b = jnp.zeros((num_actions * num_atoms,), jnp.float32)

    return dict(w1=w1, b1=b1, w2=w2, b2=b2, w3=w3, b3=b3,
                fc1_w=fc1_w, fc1_b=fc1_b, fc2_w=fc2_w, fc2_b=fc2_b)


def pack_conv_banded(w, b, *, w_in, stride, scale=1.0):
    """torch conv weight (Cout, Cin, kh, kw) -> banded ((kh*w_in*Cin), w_out*Cout) bf16.

    Row order: (kernel-row i, input-column w, Cin); column order: (output-column, Cout).
    The width direction of the conv is folded into the band structure so the kernel
    only loops over kernel rows.
    """
    cout, cin, kh, kw = w.shape
    w_out = (w_in - kw) // stride + 1
    wt = (jnp.transpose(w, (2, 3, 1, 0)).astype(jnp.float32)) * scale   # (kh, kw, cin, cout)
    big = jnp.zeros((kh, w_in, cin, w_out, cout), jnp.float32)
    for wo in range(w_out):
        big = big.at[:, stride * wo:stride * wo + kw, :, wo, :].set(wt)
    w2d = big.reshape(kh * w_in * cin, w_out * cout).astype(jnp.bfloat16)
    b2d = jnp.tile(b, (w_out,)).reshape(1, w_out * cout).astype(jnp.float32)
    return w2d, b2d


def pack_fc1(w, b, *, c, h, w_sp):
    """torch (512, C*H*W) -> ((H*W*C), 512) bf16 with rows ordered (h, w, c)."""
    out, feat = w.shape
    assert feat == c * h * w_sp
    wt = w.reshape(out, c, h, w_sp).transpose(2, 3, 1, 0).reshape(h * w_sp * c, out)
    return wt.astype(jnp.bfloat16), b.reshape(1, out).astype(jnp.float32)


def pack_fc2(w, b, *, num_actions, num_atoms, group):
    """torch (A*atoms, 512) -> (512, A*group) bf16; pad atoms get weight 0 / bias -1e9."""
    out, k = w.shape
    assert out == num_actions * num_atoms
    w3 = w.reshape(num_actions, num_atoms, k)
    w3 = jnp.pad(w3, ((0, 0), (0, group - num_atoms), (0, 0)))
    w2d = jnp.transpose(w3, (2, 0, 1)).reshape(k, num_actions * group).astype(jnp.bfloat16)
    b3 = jnp.pad(b.reshape(num_actions, num_atoms),
                 ((0, 0), (0, group - num_atoms)), constant_values=-1e9)
    b2d = b3.reshape(1, num_actions * group).astype(jnp.float32)
    return w2d, b2d


def pack_params(raw, input_shape, num_actions, num_atoms):
    C, H, W = input_shape
    h1, w1s = conv_out(H, 8, 4), conv_out(W, 8, 4)
    h2, w2s = conv_out(h1, 4, 2), conv_out(w1s, 4, 2)
    h3, w3s = conv_out(h2, 3, 1), conv_out(w2s, 3, 1)
    group = _atom_group(num_atoms)

    # /255 folded into conv1's packed weight (x*s @ W == x @ s*W); bias unchanged.
    cw1, cb1 = pack_conv_banded(raw["w1"], raw["b1"], w_in=W, stride=4, scale=1.0 / 255.0)
    cw2, cb2 = pack_conv_banded(raw["w2"], raw["b2"], w_in=w1s, stride=2)
    cw3, cb3 = pack_conv_banded(raw["w3"], raw["b3"], w_in=w2s, stride=1)
    fw1, fb1 = pack_fc1(raw["fc1_w"], raw["fc1_b"], c=raw["w3"].shape[0], h=h3, w_sp=w3s)
    fw2, fb2 = pack_fc2(raw["fc2_w"], raw["fc2_b"], num_actions=num_actions,
                        num_atoms=num_atoms, group=group)
    return dict(w1=cw1, b1=cb1, w2=cw2, b2=cb2, w3=cw3, b3=cb3,
                fc1_w=fw1, fc1_b=fb1, fc2_w=fw2, fc2_b=fb2)


# ---------------------------------------------------------------------------
# Pure-JAX f32 reference (matches the PyTorch module exactly)
# ---------------------------------------------------------------------------
def reference_forward(raw, x, num_actions, num_atoms):
    x = x.astype(jnp.float32) / 255.0

    def conv(x, w, b, stride):
        y = jax.lax.conv_general_dilated(
            x, w, (stride, stride), "VALID",
            dimension_numbers=("NCHW", "OIHW", "NCHW"))
        return jax.nn.relu(y + b[None, :, None, None])

    x = conv(x, raw["w1"], raw["b1"], 4)
    x = conv(x, raw["w2"], raw["b2"], 2)
    x = conv(x, raw["w3"], raw["b3"], 1)
    x = x.reshape(x.shape[0], -1)
    x = jax.nn.relu(x @ raw["fc1_w"].T + raw["fc1_b"])
    x = x @ raw["fc2_w"].T + raw["fc2_b"]
    return jax.nn.softmax(x.reshape(-1, num_actions, num_atoms), axis=-1)


# ---------------------------------------------------------------------------
# Main
# ---------------------------------------------------------------------------
if __name__ == "__main__":
    B = 2
    input_shape = (4, 36, 36)          # (C, H, W): minimal spatial size for the 8/4, 4/2, 3/1 stack
    num_actions = 6
    num_atoms = 51
    v_min, v_max = -10.0, 10.0
    atoms = jnp.linspace(v_min, v_max, num_atoms)   # used only by act(); kept for parity

    key = jax.random.PRNGKey(0)
    kp, kx = jax.random.split(key)
    raw = init_params(kp, input_shape, num_actions, num_atoms)
    packed = pack_params(raw, input_shape, num_actions, num_atoms)

    x = jax.random.randint(kx, (B,) + input_shape, 0, 256).astype(jnp.float32)

    fwd = jax.jit(functools.partial(forward, num_actions=num_actions,
                                    num_atoms=num_atoms))
    prob = jax.block_until_ready(fwd(packed, x))

    assert prob.shape == (B, num_actions, num_atoms), prob.shape
    sums = jnp.sum(prob, axis=-1)
    assert bool(jnp.all(jnp.abs(sums - 1.0) < 1e-4)), sums
    assert bool(jnp.all(prob >= 0.0))

    # end-to-end check against the f32 reference (bf16 MXU path -> loose tolerance)
    ref = reference_forward(raw, x, num_actions, num_atoms)
    err = float(jnp.max(jnp.abs(prob - ref)))
    assert err < 5e-2, err

    # greedy action like .act(): Q = sum(prob * atoms)
    q = jnp.sum(prob * atoms[None, None, :], axis=-1)
    _ = jax.block_until_ready(jnp.argmax(q, axis=-1))

    print("KERNEL_OK")
</pallas_src>

<mosaic_0001>
module attributes {stable_mosaic.version = 11 : i64} {
  func.func @_fused_forward_kernel(%arg0: i32, %arg1: memref<1x36x144xbf16, #tpu.memory_space<vmem>>, %arg2: memref<1152x256xbf16, #tpu.memory_space<vmem>>, %arg3: memref<1x256xf32, #tpu.memory_space<vmem>>, %arg4: memref<1024x192xbf16, #tpu.memory_space<vmem>>, %arg5: memref<1x192xf32, #tpu.memory_space<vmem>>, %arg6: memref<576x64xbf16, #tpu.memory_space<vmem>>, %arg7: memref<1x64xf32, #tpu.memory_space<vmem>>, %arg8: memref<64x512xbf16, #tpu.memory_space<vmem>>, %arg9: memref<1x512xf32, #tpu.memory_space<vmem>>, %arg10: memref<512x768xbf16, #tpu.memory_space<vmem>>, %arg11: memref<1x768xf32, #tpu.memory_space<vmem>>, %arg12: memref<1x1x768xf32, #tpu.memory_space<vmem>>) attributes {dimension_semantics = [#tpu.dimension_semantics<parallel>], iteration_bounds = array<i64: 2>, scalar_prefetch = 0 : i64, scratch_operands = 0 : i64, tpu.core_type = #tpu.core_type<tc>, window_params = [{transform_indices = @transform_0, window_bounds = array<i64: 1, 36, 144>}, {pipeline_mode = #tpu.pipeline_mode<synchronous>, transform_indices = @transform_1, window_bounds = array<i64: 1152, 256>}, {pipeline_mode = #tpu.pipeline_mode<synchronous>, transform_indices = @transform_2, window_bounds = array<i64: 1, 256>}, {pipeline_mode = #tpu.pipeline_mode<synchronous>, transform_indices = @transform_3, window_bounds = array<i64: 1024, 192>}, {pipeline_mode = #tpu.pipeline_mode<synchronous>, transform_indices = @transform_4, window_bounds = array<i64: 1, 192>}, {pipeline_mode = #tpu.pipeline_mode<synchronous>, transform_indices = @transform_5, window_bounds = array<i64: 576, 64>}, {pipeline_mode = #tpu.pipeline_mode<synchronous>, transform_indices = @transform_6, window_bounds = array<i64: 1, 64>}, {pipeline_mode = #tpu.pipeline_mode<synchronous>, transform_indices = @transform_7, window_bounds = array<i64: 64, 512>}, {pipeline_mode = #tpu.pipeline_mode<synchronous>, transform_indices = @transform_8, window_bounds = array<i64: 1, 512>}, {pipeline_mode = #tpu.pipeline_mode<synchronous>, transform_indices = @transform_9, window_bounds = array<i64: 512, 768>}, {pipeline_mode = #tpu.pipeline_mode<synchronous>, transform_indices = @transform_10, window_bounds = array<i64: 1, 768>}, {transform_indices = @transform_11, window_bounds = array<i64: 1, 1, 768>}]} {
    %c0 = arith.constant 0 : index
    %c0_0 = arith.constant 0 : index
    %c0_1 = arith.constant 0 : index
    %0 = vector.load %arg1[%c0, %c0_0, %c0_1] : memref<1x36x144xbf16, #tpu.memory_space<vmem>>, vector<1x36x144xbf16>
    %1 = vector.shape_cast %0 : vector<1x36x144xbf16> to vector<36x144xbf16>
    %2 = vector.extract_strided_slice %1 {offsets = [0, 0], sizes = [29, 144], strides = [1, 1]} : vector<36x144xbf16> to vector<29x144xbf16>
    %c0_2 = arith.constant 0 : index
    %c0_3 = arith.constant 0 : index
    %3 = vector.load %arg2[%c0_2, %c0_3] : memref<1152x256xbf16, #tpu.memory_space<vmem>>, vector<144x256xbf16>
    %cst = arith.constant dense<0.000000e+00> : vector<29x256xf32>
    %4 = tpu.matmul %2, %3, %cst {dimension_numbers = #tpu.dot_dimension_numbers<[1], [0], [0], [1], [0, 0, 1, 1], [], []>} : vector<29x144xbf16>, vector<144x256xbf16>, vector<29x256xf32> -> vector<29x256xf32>
    %5 = vector.extract_strided_slice %1 {offsets = [1, 0], sizes = [29, 144], strides = [1, 1]} : vector<36x144xbf16> to vector<29x144xbf16>
    %c144 = arith.constant 144 : index
    %c0_4 = arith.constant 0 : index
    %6 = vector.load %arg2[%c144, %c0_4] : memref<1152x256xbf16, #tpu.memory_space<vmem>>, vector<144x256xbf16>
    %cst_5 = arith.constant dense<0.000000e+00> : vector<29x256xf32>
    %7 = tpu.matmul %5, %6, %cst_5 {dimension_numbers = #tpu.dot_dimension_numbers<[1], [0], [0], [1], [0, 0, 1, 1], [], []>} : vector<29x144xbf16>, vector<144x256xbf16>, vector<29x256xf32> -> vector<29x256xf32>
    %8 = arith.addf %4, %7 : vector<29x256xf32>
    %9 = vector.extract_strided_slice %1 {offsets = [2, 0], sizes = [29, 144], strides = [1, 1]} : vector<36x144xbf16> to vector<29x144xbf16>
    %c288 = arith.constant 288 : index
    %c0_6 = arith.constant 0 : index
    %10 = vector.load %arg2[%c288, %c0_6] : memref<1152x256xbf16, #tpu.memory_space<vmem>>, vector<144x256xbf16>
    %cst_7 = arith.constant dense<0.000000e+00> : vector<29x256xf32>
    %11 = tpu.matmul %9, %10, %cst_7 {dimension_numbers = #tpu.dot_dimension_numbers<[1], [0], [0], [1], [0, 0, 1, 1], [], []>} : vector<29x144xbf16>, vector<144x256xbf16>, vector<29x256xf32> -> vector<29x256xf32>
    %12 = arith.addf %8, %11 : vector<29x256xf32>
    %13 = vector.extract_strided_slice %1 {offsets = [3, 0], sizes = [29, 144], strides = [1, 1]} : vector<36x144xbf16> to vector<29x144xbf16>
    %c432 = arith.constant 432 : index
    %c0_8 = arith.constant 0 : index
    %14 = vector.load %arg2[%c432, %c0_8] : memref<1152x256xbf16, #tpu.memory_space<vmem>>, vector<144x256xbf16>
    %cst_9 = arith.constant dense<0.000000e+00> : vector<29x256xf32>
    %15 = tpu.matmul %13, %14, %cst_9 {dimension_numbers = #tpu.dot_dimension_numbers<[1], [0], [0], [1], [0, 0, 1, 1], [], []>} : vector<29x144xbf16>, vector<144x256xbf16>, vector<29x256xf32> -> vector<29x256xf32>
    %16 = arith.addf %12, %15 : vector<29x256xf32>
    %17 = vector.extract_strided_slice %1 {offsets = [4, 0], sizes = [29, 144], strides = [1, 1]} : vector<36x144xbf16> to vector<29x144xbf16>
    %c576 = arith.constant 576 : index
    %c0_10 = arith.constant 0 : index
    %18 = vector.load %arg2[%c576, %c0_10] : memref<1152x256xbf16, #tpu.memory_space<vmem>>, vector<144x256xbf16>
    %cst_11 = arith.constant dense<0.000000e+00> : vector<29x256xf32>
    %19 = tpu.matmul %17, %18, %cst_11 {dimension_numbers = #tpu.dot_dimension_numbers<[1], [0], [0], [1], [0, 0, 1, 1], [], []>} : vector<29x144xbf16>, vector<144x256xbf16>, vector<29x256xf32> -> vector<29x256xf32>
    %20 = arith.addf %16, %19 : vector<29x256xf32>
    %21 = vector.extract_strided_slice %1 {offsets = [5, 0], sizes = [29, 144], strides = [1, 1]} : vector<36x144xbf16> to vector<29x144xbf16>
    %c720 = arith.constant 720 : index
    %c0_12 = arith.constant 0 : index
    %22 = vector.load %arg2[%c720, %c0_12] : memref<1152x256xbf16, #tpu.memory_space<vmem>>, vector<144x256xbf16>
    %cst_13 = arith.constant dense<0.000000e+00> : vector<29x256xf32>
    %23 = tpu.matmul %21, %22, %cst_13 {dimension_numbers = #tpu.dot_dimension_numbers<[1], [0], [0], [1], [0, 0, 1, 1], [], []>} : vector<29x144xbf16>, vector<144x256xbf16>, vector<29x256xf32> -> vector<29x256xf32>
    %24 = arith.addf %20, %23 : vector<29x256xf32>
    %25 = vector.extract_strided_slice %1 {offsets = [6, 0], sizes = [29, 144], strides = [1, 1]} : vector<36x144xbf16> to vector<29x144xbf16>
    %c864 = arith.constant 864 : index
    %c0_14 = arith.constant 0 : index
    %26 = vector.load %arg2[%c864, %c0_14] : memref<1152x256xbf16, #tpu.memory_space<vmem>>, vector<144x256xbf16>
    %cst_15 = arith.constant dense<0.000000e+00> : vector<29x256xf32>
    %27 = tpu.matmul %25, %26, %cst_15 {dimension_numbers = #tpu.dot_dimension_numbers<[1], [0], [0], [1], [0, 0, 1, 1], [], []>} : vector<29x144xbf16>, vector<144x256xbf16>, vector<29x256xf32> -> vector<29x256xf32>
    %28 = arith.addf %24, %27 : vector<29x256xf32>
    %29 = vector.extract_strided_slice %1 {offsets = [7, 0], sizes = [29, 144], strides = [1, 1]} : vector<36x144xbf16> to vector<29x144xbf16>
    %c1008 = arith.constant 1008 : index
    %c0_16 = arith.constant 0 : index
    %30 = vector.load %arg2[%c1008, %c0_16] : memref<1152x256xbf16, #tpu.memory_space<vmem>>, vector<144x256xbf16>
    %cst_17 = arith.constant dense<0.000000e+00> : vector<29x256xf32>
    %31 = tpu.matmul %29, %30, %cst_17 {dimension_numbers = #tpu.dot_dimension_numbers<[1], [0], [0], [1], [0, 0, 1, 1], [], []>} : vector<29x144xbf16>, vector<144x256xbf16>, vector<29x256xf32> -> vector<29x256xf32>
    %32 = arith.addf %28, %31 : vector<29x256xf32>
    %c0_18 = arith.constant 0 : index
    %c0_19 = arith.constant 0 : index
    %33 = vector.load %arg3[%c0_18, %c0_19] : memref<1x256xf32, #tpu.memory_space<vmem>>, vector<1x256xf32>
    %34 = vector.broadcast %33 : vector<1x256xf32> to vector<29x256xf32>
    %35 = arith.addf %32, %34 : vector<29x256xf32>
    %cst_20 = arith.constant 0.000000e+00 : f32
    %36 = vector.broadcast %cst_20 : f32 to vector<29x256xf32>
    %37 = arith.maximumf %35, %36 : vector<29x256xf32>
    %38 = arith.truncf %37 : vector<29x256xf32> to vector<29x256xbf16>
    %39 = vector.extract_strided_slice %38 {offsets = [0, 0], sizes = [17, 256], strides = [1, 1]} : vector<29x256xbf16> to vector<17x256xbf16>
    %c0_21 = arith.constant 0 : index
    %c0_22 = arith.constant 0 : index
    %40 = vector.load %arg4[%c0_21, %c0_22] : memref<1024x192xbf16, #tpu.memory_space<vmem>>, vector<256x192xbf16>
    %cst_23 = arith.constant dense<0.000000e+00> : vector<17x192xf32>
    %41 = tpu.matmul %39, %40, %cst_23 {dimension_numbers = #tpu.dot_dimension_numbers<[1], [0], [0], [1], [0, 0, 1, 1], [], []>} : vector<17x256xbf16>, vector<256x192xbf16>, vector<17x192xf32> -> vector<17x192xf32>
    %42 = vector.extract_strided_slice %38 {offsets = [4, 0], sizes = [17, 256], strides = [1, 1]} : vector<29x256xbf16> to vector<17x256xbf16>
    %c256 = arith.constant 256 : index
    %c0_24 = arith.constant 0 : index
    %43 = vector.load %arg4[%c256, %c0_24] : memref<1024x192xbf16, #tpu.memory_space<vmem>>, vector<256x192xbf16>
    %cst_25 = arith.constant dense<0.000000e+00> : vector<17x192xf32>
    %44 = tpu.matmul %42, %43, %cst_25 {dimension_numbers = #tpu.dot_dimension_numbers<[1], [0], [0], [1], [0, 0, 1, 1], [], []>} : vector<17x256xbf16>, vector<256x192xbf16>, vector<17x192xf32> -> vector<17x192xf32>
    %45 = arith.addf %41, %44 : vector<17x192xf32>
    %46 = vector.extract_strided_slice %38 {offsets = [8, 0], sizes = [17, 256], strides = [1, 1]} : vector<29x256xbf16> to vector<17x256xbf16>
    %c512 = arith.constant 512 : index
    %c0_26 = arith.constant 0 : index
    %47 = vector.load %arg4[%c512, %c0_26] : memref<1024x192xbf16, #tpu.memory_space<vmem>>, vector<256x192xbf16>
    %cst_27 = arith.constant dense<0.000000e+00> : vector<17x192xf32>
    %48 = tpu.matmul %46, %47, %cst_27 {dimension_numbers = #tpu.dot_dimension_numbers<[1], [0], [0], [1], [0, 0, 1, 1], [], []>} : vector<17x256xbf16>, vector<256x192xbf16>, vector<17x192xf32> -> vector<17x192xf32>
    %49 = arith.addf %45, %48 : vector<17x192xf32>
    %50 = vector.extract_strided_slice %38 {offsets = [12, 0], sizes = [17, 256], strides = [1, 1]} : vector<29x256xbf16> to vector<17x256xbf16>
    %c768 = arith.constant 768 : index
    %c0_28 = arith.constant 0 : index
    %51 = vector.load %arg4[%c768, %c0_28] : memref<1024x192xbf16, #tpu.memory_space<vmem>>, vector<256x192xbf16>
    %cst_29 = arith.constant dense<0.000000e+00> : vector<17x192xf32>
    %52 = tpu.matmul %50, %51, %cst_29 {dimension_numbers = #tpu.dot_dimension_numbers<[1], [0], [0], [1], [0, 0, 1, 1], [], []>} : vector<17x256xbf16>, vector<256x192xbf16>, vector<17x192xf32> -> vector<17x192xf32>
    %53 = arith.addf %49, %52 : vector<17x192xf32>
    %c0_30 = arith.constant 0 : index
    %c0_31 = arith.constant 0 : index
    %54 = vector.load %arg5[%c0_30, %c0_31] : memref<1x192xf32, #tpu.memory_space<vmem>>, vector<1x192xf32>
    %55 = vector.broadcast %54 : vector<1x192xf32> to vector<17x192xf32>
    %56 = arith.addf %53, %55 : vector<17x192xf32>
    %cst_32 = arith.constant 0.000000e+00 : f32
    %57 = vector.broadcast %cst_32 : f32 to vector<17x192xf32>
    %58 = arith.maximumf %56, %57 : vector<17x192xf32>
    %59 = arith.truncf %58 : vector<17x192xf32> to vector<17x192xbf16>
    %60 = vector.extract_strided_slice %59 {offsets = [0, 0], sizes = [1, 192], strides = [1, 1]} : vector<17x192xbf16> to vector<1x192xbf16>
    %c0_33 = arith.constant 0 : index
    %c0_34 = arith.constant 0 : index
    %61 = vector.load %arg6[%c0_33, %c0_34] : memref<576x64xbf16, #tpu.memory_space<vmem>>, vector<192x64xbf16>
    %cst_35 = arith.constant dense<0.000000e+00> : vector<1x64xf32>
    %62 = tpu.matmul %60, %61, %cst_35 {dimension_numbers = #tpu.dot_dimension_numbers<[1], [0], [0], [1], [0, 0, 1, 1], [], []>} : vector<1x192xbf16>, vector<192x64xbf16>, vector<1x64xf32> -> vector<1x64xf32>
    %63 = vector.extract_strided_slice %59 {offsets = [8, 0], sizes = [1, 192], strides = [1, 1]} : vector<17x192xbf16> to vector<1x192xbf16>
    %c192 = arith.constant 192 : index
    %c0_36 = arith.constant 0 : index
    %64 = vector.load %arg6[%c192, %c0_36] : memref<576x64xbf16, #tpu.memory_space<vmem>>, vector<192x64xbf16>
    %cst_37 = arith.constant dense<0.000000e+00> : vector<1x64xf32>
    %65 = tpu.matmul %63, %64, %cst_37 {dimension_numbers = #tpu.dot_dimension_numbers<[1], [0], [0], [1], [0, 0, 1, 1], [], []>} : vector<1x192xbf16>, vector<192x64xbf16>, vector<1x64xf32> -> vector<1x64xf32>
    %66 = arith.addf %62, %65 : vector<1x64xf32>
    %67 = vector.extract_strided_slice %59 {offsets = [16, 0], sizes = [1, 192], strides = [1, 1]} : vector<17x192xbf16> to vector<1x192xbf16>
    %c384 = arith.constant 384 : index
    %c0_38 = arith.constant 0 : index
    %68 = vector.load %arg6[%c384, %c0_38] : memref<576x64xbf16, #tpu.memory_space<vmem>>, vector<192x64xbf16>
    %cst_39 = arith.constant dense<0.000000e+00> : vector<1x64xf32>
    %69 = tpu.matmul %67, %68, %cst_39 {dimension_numbers = #tpu.dot_dimension_numbers<[1], [0], [0], [1], [0, 0, 1, 1], [], []>} : vector<1x192xbf16>, vector<192x64xbf16>, vector<1x64xf32> -> vector<1x64xf32>
    %70 = arith.addf %66, %69 : vector<1x64xf32>
    %c0_40 = arith.constant 0 : index
    %c0_41 = arith.constant 0 : index
    %71 = vector.load %arg7[%c0_40, %c0_41] : memref<1x64xf32, #tpu.memory_space<vmem>>, vector<1x64xf32>
    %72 = arith.addf %70, %71 : vector<1x64xf32>
    %cst_42 = arith.constant 0.000000e+00 : f32
    %73 = vector.broadcast %cst_42 : f32 to vector<1x64xf32>
    %74 = arith.maximumf %72, %73 : vector<1x64xf32>
    %75 = arith.truncf %74 : vector<1x64xf32> to vector<1x64xbf16>
    %c0_43 = arith.constant 0 : index
    %c0_44 = arith.constant 0 : index
    %76 = vector.load %arg8[%c0_43, %c0_44] : memref<64x512xbf16, #tpu.memory_space<vmem>>, vector<64x512xbf16>
    %cst_45 = arith.constant dense<0.000000e+00> : vector<1x512xf32>
    %77 = tpu.matmul %75, %76, %cst_45 {dimension_numbers = #tpu.dot_dimension_numbers<[1], [0], [0], [1], [0, 0, 1, 1], [], []>} : vector<1x64xbf16>, vector<64x512xbf16>, vector<1x512xf32> -> vector<1x512xf32>
    %c0_46 = arith.constant 0 : index
    %c0_47 = arith.constant 0 : index
    %78 = vector.load %arg9[%c0_46, %c0_47] : memref<1x512xf32, #tpu.memory_space<vmem>>, vector<1x512xf32>
    %79 = arith.addf %77, %78 : vector<1x512xf32>
    %cst_48 = arith.constant 0.000000e+00 : f32
    %80 = vector.broadcast %cst_48 : f32 to vector<1x512xf32>
    %81 = arith.maximumf %79, %80 : vector<1x512xf32>
    %82 = arith.truncf %81 : vector<1x512xf32> to vector<1x512xbf16>
    %c0_49 = arith.constant 0 : index
    %c0_50 = arith.constant 0 : index
    %83 = vector.load %arg10[%c0_49, %c0_50] : memref<512x768xbf16, #tpu.memory_space<vmem>>, vector<512x768xbf16>
    %cst_51 = arith.constant dense<0.000000e+00> : vector<1x768xf32>
    %84 = tpu.matmul %82, %83, %cst_51 {dimension_numbers = #tpu.dot_dimension_numbers<[1], [0], [0], [1], [0, 0, 1, 1], [], []>} : vector<1x512xbf16>, vector<512x768xbf16>, vector<1x768xf32> -> vector<1x768xf32>
    %c0_52 = arith.constant 0 : index
    %c0_53 = arith.constant 0 : index
    %85 = vector.load %arg11[%c0_52, %c0_53] : memref<1x768xf32, #tpu.memory_space<vmem>>, vector<1x768xf32>
    %86 = arith.addf %84, %85 : vector<1x768xf32>
    %87 = vector.extract_strided_slice %86 {offsets = [0, 0], sizes = [1, 128], strides = [1, 1]} : vector<1x768xf32> to vector<1x128xf32>
    %cst_54 = arith.constant dense<0xFF800000> : vector<1xf32>
    %88 = vector.multi_reduction <maximumf>, %87, %cst_54 [1] : vector<1x128xf32> to vector<1xf32>
    %89 = vector.shape_cast %88 : vector<1xf32> to vector<1x1xf32>
    %90 = vector.broadcast %89 : vector<1x1xf32> to vector<1x128xf32>
    %91 = arith.subf %87, %90 : vector<1x128xf32>
    %92 = math.exp %91 : vector<1x128xf32>
    %cst_55 = arith.constant dense<0.000000e+00> : vector<1xf32>
    %93 = vector.multi_reduction <add>, %92, %cst_55 [1] : vector<1x128xf32> to vector<1xf32>
    %94 = vector.shape_cast %93 : vector<1xf32> to vector<1x1xf32>
    %95 = tpu.reciprocal %94 : vector<1x1xf32> -> vector<1x1xf32>
    %96 = vector.broadcast %95 : vector<1x1xf32> to vector<1x128xf32>
    %97 = arith.mulf %92, %96 : vector<1x128xf32>
    %98 = vector.extract_strided_slice %86 {offsets = [0, 128], sizes = [1, 128], strides = [1, 1]} : vector<1x768xf32> to vector<1x128xf32>
    %cst_56 = arith.constant dense<0xFF800000> : vector<1xf32>
    %99 = vector.multi_reduction <maximumf>, %98, %cst_56 [1] : vector<1x128xf32> to vector<1xf32>
    %100 = vector.shape_cast %99 : vector<1xf32> to vector<1x1xf32>
    %101 = vector.broadcast %100 : vector<1x1xf32> to vector<1x128xf32>
    %102 = arith.subf %98, %101 : vector<1x128xf32>
    %103 = math.exp %102 : vector<1x128xf32>
    %cst_57 = arith.constant dense<0.000000e+00> : vector<1xf32>
    %104 = vector.multi_reduction <add>, %103, %cst_57 [1] : vector<1x128xf32> to vector<1xf32>
    %105 = vector.shape_cast %104 : vector<1xf32> to vector<1x1xf32>
    %106 = tpu.reciprocal %105 : vector<1x1xf32> -> vector<1x1xf32>
    %107 = vector.broadcast %106 : vector<1x1xf32> to vector<1x128xf32>
    %108 = arith.mulf %103, %107 : vector<1x128xf32>
    %109 = vector.extract_strided_slice %86 {offsets = [0, 256], sizes = [1, 128], strides = [1, 1]} : vector<1x768xf32> to vector<1x128xf32>
    %cst_58 = arith.constant dense<0xFF800000> : vector<1xf32>
    %110 = vector.multi_reduction <maximumf>, %109, %cst_58 [1] : vector<1x128xf32> to vector<1xf32>
    %111 = vector.shape_cast %110 : vector<1xf32> to vector<1x1xf32>
    %112 = vector.broadcast %111 : vector<1x1xf32> to vector<1x128xf32>
    %113 = arith.subf %109, %112 : vector<1x128xf32>
    %114 = math.exp %113 : vector<1x128xf32>
    %cst_59 = arith.constant dense<0.000000e+00> : vector<1xf32>
    %115 = vector.multi_reduction <add>, %114, %cst_59 [1] : vector<1x128xf32> to vector<1xf32>
    %116 = vector.shape_cast %115 : vector<1xf32> to vector<1x1xf32>
    %117 = tpu.reciprocal %116 : vector<1x1xf32> -> vector<1x1xf32>
    %118 = vector.broadcast %117 : vector<1x1xf32> to vector<1x128xf32>
    %119 = arith.mulf %114, %118 : vector<1x128xf32>
    %120 = vector.extract_strided_slice %86 {offsets = [0, 384], sizes = [1, 128], strides = [1, 1]} : vector<1x768xf32> to vector<1x128xf32>
    %cst_60 = arith.constant dense<0xFF800000> : vector<1xf32>
    %121 = vector.multi_reduction <maximumf>, %120, %cst_60 [1] : vector<1x128xf32> to vector<1xf32>
    %122 = vector.shape_cast %121 : vector<1xf32> to vector<1x1xf32>
    %123 = vector.broadcast %122 : vector<1x1xf32> to vector<1x128xf32>
    %124 = arith.subf %120, %123 : vector<1x128xf32>
    %125 = math.exp %124 : vector<1x128xf32>
    %cst_61 = arith.constant dense<0.000000e+00> : vector<1xf32>
    %126 = vector.multi_reduction <add>, %125, %cst_61 [1] : vector<1x128xf32> to vector<1xf32>
    %127 = vector.shape_cast %126 : vector<1xf32> to vector<1x1xf32>
    %128 = tpu.reciprocal %127 : vector<1x1xf32> -> vector<1x1xf32>
    %129 = vector.broadcast %128 : vector<1x1xf32> to vector<1x128xf32>
    %130 = arith.mulf %125, %129 : vector<1x128xf32>
    %131 = vector.extract_strided_slice %86 {offsets = [0, 512], sizes = [1, 128], strides = [1, 1]} : vector<1x768xf32> to vector<1x128xf32>
    %cst_62 = arith.constant dense<0xFF800000> : vector<1xf32>
    %132 = vector.multi_reduction <maximumf>, %131, %cst_62 [1] : vector<1x128xf32> to vector<1xf32>
    %133 = vector.shape_cast %132 : vector<1xf32> to vector<1x1xf32>
    %134 = vector.broadcast %133 : vector<1x1xf32> to vector<1x128xf32>
    %135 = arith.subf %131, %134 : vector<1x128xf32>
    %136 = math.exp %135 : vector<1x128xf32>
    %cst_63 = arith.constant dense<0.000000e+00> : vector<1xf32>
    %137 = vector.multi_reduction <add>, %136, %cst_63 [1] : vector<1x128xf32> to vector<1xf32>
    %138 = vector.shape_cast %137 : vector<1xf32> to vector<1x1xf32>
    %139 = tpu.reciprocal %138 : vector<1x1xf32> -> vector<1x1xf32>
    %140 = vector.broadcast %139 : vector<1x1xf32> to vector<1x128xf32>
    %141 = arith.mulf %136, %140 : vector<1x128xf32>
    %142 = vector.extract_strided_slice %86 {offsets = [0, 640], sizes = [1, 128], strides = [1, 1]} : vector<1x768xf32> to vector<1x128xf32>
    %cst_64 = arith.constant dense<0xFF800000> : vector<1xf32>
    %143 = vector.multi_reduction <maximumf>, %142, %cst_64 [1] : vector<1x128xf32> to vector<1xf32>
    %144 = vector.shape_cast %143 : vector<1xf32> to vector<1x1xf32>
    %145 = vector.broadcast %144 : vector<1x1xf32> to vector<1x128xf32>
    %146 = arith.subf %142, %145 : vector<1x128xf32>
    %147 = math.exp %146 : vector<1x128xf32>
    %cst_65 = arith.constant dense<0.000000e+00> : vector<1xf32>
    %148 = vector.multi_reduction <add>, %147, %cst_65 [1] : vector<1x128xf32> to vector<1xf32>
    %149 = vector.shape_cast %148 : vector<1xf32> to vector<1x1xf32>
    %150 = tpu.reciprocal %149 : vector<1x1xf32> -> vector<1x1xf32>
    %151 = vector.broadcast %150 : vector<1x1xf32> to vector<1x128xf32>
    %152 = arith.mulf %147, %151 : vector<1x128xf32>
    %153 = tpu.concatenate %97, %108, %119, %130, %141, %152 in 1 : vector<1x128xf32>, vector<1x128xf32>, vector<1x128xf32>, vector<1x128xf32>, vector<1x128xf32>, vector<1x128xf32> -> vector<1x768xf32>
    %c0_66 = arith.constant 0 : index
    %c0_67 = arith.constant 0 : index
    %c0_68 = arith.constant 0 : index
    %154 = vector.load %arg12[%c0_66, %c0_67, %c0_68] : memref<1x1x768xf32, #tpu.memory_space<vmem>>, vector<1x1x768xf32>
    %155 = vector.shape_cast %154 : vector<1x1x768xf32> to vector<1x768xf32>
    %156 = vector.shape_cast %153 : vector<1x768xf32> to vector<1x1x768xf32>
    tpu.vector_store %arg12[%c0_66, %c0_67, %c0_68], %156 {strides = array<i32>} : memref<1x1x768xf32, #tpu.memory_space<vmem>>, vector<1x1x768xf32>,
    return
  }
  func.func @transform_0(%arg0: i32) -> (i32, i32, i32) {
    %c0_i32 = arith.constant 0 : i32
    %c0_i32_0 = arith.constant 0 : i32
    %c0_i32_1 = arith.constant 0 : i32
    return %arg0, %c0_i32, %c0_i32_0 : i32, i32, i32
  }
  func.func @transform_1(%arg0: i32) -> (i32, i32) {
    %c0_i32 = arith.constant 0 : i32
    %c0_i32_0 = arith.constant 0 : i32
    %c0_i32_1 = arith.constant 0 : i32
    return %c0_i32, %c0_i32_0 : i32, i32
  }
  func.func @transform_2(%arg0: i32) -> (i32, i32) {
    %c0_i32 = arith.constant 0 : i32
    %c0_i32_0 = arith.constant 0 : i32
    %c0_i32_1 = arith.constant 0 : i32
    return %c0_i32, %c0_i32_0 : i32, i32
  }
  func.func @transform_3(%arg0: i32) -> (i32, i32) {
    %c0_i32 = arith.constant 0 : i32
    %c0_i32_0 = arith.constant 0 : i32
    %c0_i32_1 = arith.constant 0 : i32
    return %c0_i32, %c0_i32_0 : i32, i32
  }
  func.func @transform_4(%arg0: i32) -> (i32, i32) {
    %c0_i32 = arith.constant 0 : i32
    %c0_i32_0 = arith.constant 0 : i32
    %c0_i32_1 = arith.constant 0 : i32
    return %c0_i32, %c0_i32_0 : i32, i32
  }
  func.func @transform_5(%arg0: i32) -> (i32, i32) {
    %c0_i32 = arith.constant 0 : i32
    %c0_i32_0 = arith.constant 0 : i32
    %c0_i32_1 = arith.constant 0 : i32
    return %c0_i32, %c0_i32_0 : i32, i32
  }
  func.func @transform_6(%arg0: i32) -> (i32, i32) {
    %c0_i32 = arith.constant 0 : i32
    %c0_i32_0 = arith.constant 0 : i32
    %c0_i32_1 = arith.constant 0 : i32
    return %c0_i32, %c0_i32_0 : i32, i32
  }
  func.func @transform_7(%arg0: i32) -> (i32, i32) {
    %c0_i32 = arith.constant 0 : i32
    %c0_i32_0 = arith.constant 0 : i32
    %c0_i32_1 = arith.constant 0 : i32
    return %c0_i32, %c0_i32_0 : i32, i32
  }
  func.func @transform_8(%arg0: i32) -> (i32, i32) {
    %c0_i32 = arith.constant 0 : i32
    %c0_i32_0 = arith.constant 0 : i32
    %c0_i32_1 = arith.constant 0 : i32
    return %c0_i32, %c0_i32_0 : i32, i32
  }
  func.func @transform_9(%arg0: i32) -> (i32, i32) {
    %c0_i32 = arith.constant 0 : i32
    %c0_i32_0 = arith.constant 0 : i32
    %c0_i32_1 = arith.constant 0 : i32
    return %c0_i32, %c0_i32_0 : i32, i32
  }
  func.func @transform_10(%arg0: i32) -> (i32, i32) {
    %c0_i32 = arith.constant 0 : i32
    %c0_i32_0 = arith.constant 0 : i32
    %c0_i32_1 = arith.constant 0 : i32
    return %c0_i32, %c0_i32_0 : i32, i32
  }
  func.func @transform_11(%arg0: i32) -> (i32, i32, i32) {
    %c0_i32 = arith.constant 0 : i32
    %c0_i32_0 = arith.constant 0 : i32
    %c0_i32_1 = arith.constant 0 : i32
    return %arg0, %c0_i32, %c0_i32_0 : i32, i32, i32
  }
}

</mosaic_0001>

<llo_original>
// kernel: forward.1
$region0: #{forward.1}
  #allocation0 [shape = 'u32[]', space=smem, size = 0x4, offset = 0x4, fixed_abs, tag = 'smem constant byte address 0x4 - core index']
  #allocation1 [shape = 'u32[144,128]{1,0:T(1,128)}', space=vmem, size = 0x12000, scoped, tag = 'internal scratch']
  %s0 = inlined_call_operand.vmem [shape: bf16[2,36,144], index: 0, kind: input, shape index: {}]
  %s1 = inlined_call_operand.vmem [shape: bf16[1152,256], index: 1, kind: input, shape index: {}]
  %s2 = inlined_call_operand.vmem [shape: f32[1,256], index: 2, kind: input, shape index: {}]
  %s3 = inlined_call_operand.vmem [shape: bf16[1024,192], index: 3, kind: input, shape index: {}]
  %s4 = inlined_call_operand.vmem [shape: f32[1,192], index: 4, kind: input, shape index: {}]
  %s5 = inlined_call_operand.vmem [shape: bf16[576,64], index: 5, kind: input, shape index: {}]
  %s6 = inlined_call_operand.vmem [shape: f32[1,64], index: 6, kind: input, shape index: {}]
  %s7 = inlined_call_operand.vmem [shape: bf16[64,512], index: 7, kind: input, shape index: {}]
  %s8 = inlined_call_operand.vmem [shape: f32[1,512], index: 8, kind: input, shape index: {}]
  %s9 = inlined_call_operand.vmem [shape: bf16[512,768], index: 9, kind: input, shape index: {}]
  %s10 = inlined_call_operand.vmem [shape: f32[1,768], index: 10, kind: input, shape index: {}]
  %s11 = inlined_call_operand.vmem [shape: f32[2,1,768], index: 11, kind: output, shape index: {}]
  %s12 = sld [smem:[#allocation0]]
  $region77: #{forward.1} parent=0
    _
  %s14 = ssub.s32 1, %s12
  %s15 = scalar_select 0, %s14, %s12
  loop: start=0, step=1, limit=4
  $region2: #{forward.1} parent=0 // loop_pre_header
    _
  $region3: #{forward.1} parent=0 // loop_header
    %s17 = sphi 0, %s21
    %p18 = scmp.ge.s32.totalorder %s17, 4
    %s27 = sphi 0, %s29
    %s30 = sphi 0, %s27
    %s31 = sphi 0, %s30
    %s47 = sphi 0, %s31
    %s51 = sphi 0, %s51
    %s53 = sphi 0, %s51
    %s54 = sphi 0, %s53
    %s68 = sphi 0, %s54
    %s72 = sphi 0, %s72
    %s74 = sphi 0, %s72
    %s75 = sphi 0, %s74
    %s89 = sphi 0, %s75
    %s93 = sphi 0, %s93
    %s95 = sphi 0, %s93
    %s96 = sphi 0, %s95
    %s110 = sphi 0, %s96
    %s114 = sphi 0, %s114
    %s116 = sphi 0, %s114
    %s117 = sphi 0, %s116
    %s131 = sphi 0, %s117
    %s135 = sphi 0, %s135
    %s137 = sphi 0, %s135
    %s138 = sphi 0, %s137
    %s152 = sphi 0, %s138
    %s156 = sphi 0, %s156
    %s158 = sphi 0, %s156
    %s159 = sphi 0, %s158
    %s173 = sphi 0, %s159
    %s177 = sphi 0, %s177
    %s179 = sphi 0, %s177
    %s180 = sphi 0, %s179
    %s194 = sphi 0, %s180
    %s198 = sphi 0, %s198
    %s200 = sphi 0, %s198
    %s201 = sphi 0, %s200
    %s215 = sphi 0, %s201
    %s219 = sphi 0, %s219
    %s221 = sphi 0, %s219
    %s222 = sphi 0, %s221
    %s236 = sphi 0, %s222
    %s240 = sphi 0, %s240
    %s242 = sphi 0, %s240
    %s243 = sphi 0, %s242
    %s257 = sphi 0, %s243
    %s263 = sphi 0, %s265
    %s266 = sphi 0, %s263
    %s267 = sphi 0, %s266
    %s283 = sphi 0, %s267
  $region4: #{forward.1} parent=0 // loop_header_branch
    %20 = sbr.rel (%p18) target = $region8
  $region5: #{forward.1} parent=0 // loop_body
    %s22 = ssub.s32 %s17, 1
    %s23 = ssub.s32 %s17, 2
    %s24 = sadd.s32 %s17, 1
    %s25 = ssub.s32 %s17, %s24
    %p26 = scmp.eq.s32.totalorder %s25, 0
    %s28 = sadd.s32 %s27, 1
    %s29 = scalar_select %p26, %s27, %s28
    %p32 = pneg %p26
    %p33 = scmp.eq.s32.totalorder %s17, 1
    %p34 = por %p32, %p33
    %p35 = scmp.ne.s32.totalorder %s27, %s30
    %p36 = scmp.eq.s32.totalorder %s17, 0
    %p37 = por %p35, %p36
    %p38 = scmp.ne.s32.totalorder %s27, %s30
    %p39 = scmp.eq.s32.totalorder %s22, 1
    %p40 = por %p38, %p39
    %p41 = scmp.ne.s32.totalorder %s30, %s31
    %p42 = scmp.eq.s32.totalorder %s22, 0
    %p43 = por %p41, %p42
    %p44 = scmp.ne.s32.totalorder %s30, %s31
    %p45 = scmp.eq.s32.totalorder %s23, 1
    %p46 = por %p44, %p45
    %p48 = scmp.ne.s32.totalorder %s31, %s47
    %p49 = scmp.eq.s32.totalorder %s23, 0
    %p50 = por %p48, %p49
    %s52 = sadd.s32 %s51, 1
    %p55 = scmp.eq.s32.totalorder %s17, 1
    %p56 = scmp.ne.s32.totalorder %s51, %s53
    %p57 = scmp.eq.s32.totalorder %s17, 0
    %p58 = por %p56, %p57
    %p59 = scmp.ne.s32.totalorder %s51, %s53
    %p60 = scmp.eq.s32.totalorder %s22, 1
    %p61 = por %p59, %p60
    %p62 = scmp.ne.s32.totalorder %s53, %s54
    %p63 = scmp.eq.s32.totalorder %s22, 0
    %p64 = por %p62, %p63
    %p65 = scmp.ne.s32.totalorder %s53, %s54
    %p66 = scmp.eq.s32.totalorder %s23, 1
    %p67 = por %p65, %p66
    %p69 = scmp.ne.s32.totalorder %s54, %s68
    %p70 = scmp.eq.s32.totalorder %s23, 0
    %p71 = por %p69, %p70
    %s73 = sadd.s32 %s72, 1
    %p76 = scmp.eq.s32.totalorder %s17, 1
    %p77 = scmp.ne.s32.totalorder %s72, %s74
    %p78 = scmp.eq.s32.totalorder %s17, 0
    %p79 = por %p77, %p78
    %p80 = scmp.ne.s32.totalorder %s72, %s74
    %p81 = scmp.eq.s32.totalorder %s22, 1
    %p82 = por %p80, %p81
    %p83 = scmp.ne.s32.totalorder %s74, %s75
    %p84 = scmp.eq.s32.totalorder %s22, 0
    %p85 = por %p83, %p84
    %p86 = scmp.ne.s32.totalorder %s74, %s75
    %p87 = scmp.eq.s32.totalorder %s23, 1
    %p88 = por %p86, %p87
    %p90 = scmp.ne.s32.totalorder %s75, %s89
    %p91 = scmp.eq.s32.totalorder %s23, 0
    %p92 = por %p90, %p91
    %s94 = sadd.s32 %s93, 1
    %p97 = scmp.eq.s32.totalorder %s17, 1
    %p98 = scmp.ne.s32.totalorder %s93, %s95
    %p99 = scmp.eq.s32.totalorder %s17, 0
    %p100 = por %p98, %p99
    %p101 = scmp.ne.s32.totalorder %s93, %s95
    %p102 = scmp.eq.s32.totalorder %s22, 1
    %p103 = por %p101, %p102
    %p104 = scmp.ne.s32.totalorder %s95, %s96
    %p105 = scmp.eq.s32.totalorder %s22, 0
    %p106 = por %p104, %p105
    %p107 = scmp.ne.s32.totalorder %s95, %s96
    %p108 = scmp.eq.s32.totalorder %s23, 1
    %p109 = por %p107, %p108
    %p111 = scmp.ne.s32.totalorder %s96, %s110
    %p112 = scmp.eq.s32.totalorder %s23, 0
    %p113 = por %p111, %p112
    %s115 = sadd.s32 %s114, 1
    %p118 = scmp.eq.s32.totalorder %s17, 1
    %p119 = scmp.ne.s32.totalorder %s114, %s116
    %p120 = scmp.eq.s32.totalorder %s17, 0
    %p121 = por %p119, %p120
    %p122 = scmp.ne.s32.totalorder %s114, %s116
    %p123 = scmp.eq.s32.totalorder %s22, 1
    %p124 = por %p122, %p123
    %p125 = scmp.ne.s32.totalorder %s116, %s117
    %p126 = scmp.eq.s32.totalorder %s22, 0
    %p127 = por %p125, %p126
    %p128 = scmp.ne.s32.totalorder %s116, %s117
    %p129 = scmp.eq.s32.totalorder %s23, 1
    %p130 = por %p128, %p129
    %p132 = scmp.ne.s32.totalorder %s117, %s131
    %p133 = scmp.eq.s32.totalorder %s23, 0
    %p134 = por %p132, %p133
    %s136 = sadd.s32 %s135, 1
    %p139 = scmp.eq.s32.totalorder %s17, 1
    %p140 = scmp.ne.s32.totalorder %s135, %s137
    %p141 = scmp.eq.s32.totalorder %s17, 0
    %p142 = por %p140, %p141
    %p143 = scmp.ne.s32.totalorder %s135, %s137
    %p144 = scmp.eq.s32.totalorder %s22, 1
    %p145 = por %p143, %p144
    %p146 = scmp.ne.s32.totalorder %s137, %s138
    %p147 = scmp.eq.s32.totalorder %s22, 0
    %p148 = por %p146, %p147
    %p149 = scmp.ne.s32.totalorder %s137, %s138
    %p150 = scmp.eq.s32.totalorder %s23, 1
    %p151 = por %p149, %p150
    %p153 = scmp.ne.s32.totalorder %s138, %s152
    %p154 = scmp.eq.s32.totalorder %s23, 0
    %p155 = por %p153, %p154
    %s157 = sadd.s32 %s156, 1
    %p160 = scmp.eq.s32.totalorder %s17, 1
    %p161 = scmp.ne.s32.totalorder %s156, %s158
    %p162 = scmp.eq.s32.totalorder %s17, 0
    %p163 = por %p161, %p162
    %p164 = scmp.ne.s32.totalorder %s156, %s158
    %p165 = scmp.eq.s32.totalorder %s22, 1
    %p166 = por %p164, %p165
    %p167 = scmp.ne.s32.totalorder %s158, %s159
    %p168 = scmp.eq.s32.totalorder %s22, 0
    %p169 = por %p167, %p168
    %p170 = scmp.ne.s32.totalorder %s158, %s159
    %p171 = scmp.eq.s32.totalorder %s23, 1
    %p172 = por %p170, %p171
    %p174 = scmp.ne.s32.totalorder %s159, %s173
    %p175 = scmp.eq.s32.totalorder %s23, 0
    %p176 = por %p174, %p175
    %s178 = sadd.s32 %s177, 1
    %p181 = scmp.eq.s32.totalorder %s17, 1
    %p182 = scmp.ne.s32.totalorder %s177, %s179
    %p183 = scmp.eq.s32.totalorder %s17, 0
    %p184 = por %p182, %p183
    %p185 = scmp.ne.s32.totalorder %s177, %s179
    %p186 = scmp.eq.s32.totalorder %s22, 1
    %p187 = por %p185, %p186
    %p188 = scmp.ne.s32.totalorder %s179, %s180
    %p189 = scmp.eq.s32.totalorder %s22, 0
    %p190 = por %p188, %p189
    %p191 = scmp.ne.s32.totalorder %s179, %s180
    %p192 = scmp.eq.s32.totalorder %s23, 1
    %p193 = por %p191, %p192
    %p195 = scmp.ne.s32.totalorder %s180, %s194
    %p196 = scmp.eq.s32.totalorder %s23, 0
    %p197 = por %p195, %p196
    %s199 = sadd.s32 %s198, 1
    %p202 = scmp.eq.s32.totalorder %s17, 1
    %p203 = scmp.ne.s32.totalorder %s198, %s200
    %p204 = scmp.eq.s32.totalorder %s17, 0
    %p205 = por %p203, %p204
    %p206 = scmp.ne.s32.totalorder %s198, %s200
    %p207 = scmp.eq.s32.totalorder %s22, 1
    %p208 = por %p206, %p207
    %p209 = scmp.ne.s32.totalorder %s200, %s201
    %p210 = scmp.eq.s32.totalorder %s22, 0
    %p211 = por %p209, %p210
    %p212 = scmp.ne.s32.totalorder %s200, %s201
    %p213 = scmp.eq.s32.totalorder %s23, 1
    %p214 = por %p212, %p213
    %p216 = scmp.ne.s32.totalorder %s201, %s215
    %p217 = scmp.eq.s32.totalorder %s23, 0
    %p218 = por %p216, %p217
    %s220 = sadd.s32 %s219, 1
    %p223 = scmp.eq.s32.totalorder %s17, 1
    %p224 = scmp.ne.s32.totalorder %s219, %s221
    %p225 = scmp.eq.s32.totalorder %s17, 0
    %p226 = por %p224, %p225
    %p227 = scmp.ne.s32.totalorder %s219, %s221
    %p228 = scmp.eq.s32.totalorder %s22, 1
    %p229 = por %p227, %p228
    %p230 = scmp.ne.s32.totalorder %s221, %s222
    %p231 = scmp.eq.s32.totalorder %s22, 0
    %p232 = por %p230, %p231
    %p233 = scmp.ne.s32.totalorder %s221, %s222
    %p234 = scmp.eq.s32.totalorder %s23, 1
    %p235 = por %p233, %p234
    %p237 = scmp.ne.s32.totalorder %s222, %s236
    %p238 = scmp.eq.s32.totalorder %s23, 0
    %p239 = por %p237, %p238
    %s241 = sadd.s32 %s240, 1
    %p244 = scmp.eq.s32.totalorder %s17, 1
    %p245 = scmp.ne.s32.totalorder %s240, %s242
    %p246 = scmp.eq.s32.totalorder %s17, 0
    %p247 = por %p245, %p246
    %p248 = scmp.ne.s32.totalorder %s240, %s242
    %p249 = scmp.eq.s32.totalorder %s22, 1
    %p250 = por %p248, %p249
    %p251 = scmp.ne.s32.totalorder %s242, %s243
    %p252 = scmp.eq.s32.totalorder %s22, 0
    %p253 = por %p251, %p252
    %p254 = scmp.ne.s32.totalorder %s242, %s243
    %p255 = scmp.eq.s32.totalorder %s23, 1
    %p256 = por %p254, %p255
    %p258 = scmp.ne.s32.totalorder %s243, %s257
    %p259 = scmp.eq.s32.totalorder %s23, 0
    %p260 = por %p258, %p259
    %s261 = ssub.s32 %s17, %s24
    %p262 = scmp.eq.s32.totalorder %s261, 0
    %s264 = sadd.s32 %s263, 1
    %s265 = scalar_select %p262, %s263, %s264
    %p268 = pneg %p262
    %p269 = scmp.eq.s32.totalorder %s17, 1
    %p270 = por %p268, %p269
    %p271 = scmp.ne.s32.totalorder %s263, %s266
    %p272 = scmp.eq.s32.totalorder %s17, 0
    %p273 = por %p271, %p272
    %p274 = scmp.ne.s32.totalorder %s263, %s266
    %p275 = scmp.eq.s32.totalorder %s22, 1
    %p276 = por %p274, %p275
    %p277 = scmp.ne.s32.totalorder %s266, %s267
    %p278 = scmp.eq.s32.totalorder %s22, 0
    %p279 = por %p277, %p278
    %p280 = scmp.ne.s32.totalorder %s266, %s267
    %p281 = scmp.eq.s32.totalorder %s23, 1
    %p282 = por %p280, %p281
    %p284 = scmp.ne.s32.totalorder %s267, %s283
    %p285 = scmp.eq.s32.totalorder %s23, 0
    %p286 = por %p284, %p285
    %p287 = scmp.le.s32.totalorder 1, %s17
    %p288 = scmp.lt.s32.totalorder %s17, 3
    %p289 = pnand %p287, %p288
    %p290 = pneg %p289
    // Predicated region
    $region9: #{forward.1} parent=5 // pred_check
      _
    $region10: #{forward.1} parent=5 // pred_check_branch
      %292 = sbr.rel (%p289) target = $region12
    $region11: #{forward.1} parent=5 // pred_region
      %s293 = ssub.s32 %s17, 1
      // Predicated region
      $region13: #{forward.1} parent=11 // pred_check
        %p294 = pneg %p64
      $region14: #{forward.1} parent=11 // pred_check_branch
        %296 = sbr.rel (%p294) target = $region16
      $region15: #{forward.1} parent=11 // pred_region
        _
      $region16: #{forward.1} parent=11 // pred_fallthru
        _
      // Predicated region
      $region17: #{forward.1} parent=11 // pred_check
        %p297 = pneg %p85
      $region18: #{forward.1} parent=11 // pred_check_branch
        %299 = sbr.rel (%p297) target = $region20
      $region19: #{forward.1} parent=11 // pred_region
        _
      $region20: #{forward.1} parent=11 // pred_fallthru
        _
      // Predicated region
      $region21: #{forward.1} parent=11 // pred_check
        %p300 = pneg %p106
      $region22: #{forward.1} parent=11 // pred_check_branch
        %302 = sbr.rel (%p300) target = $region24
      $region23: #{forward.1} parent=11 // pred_region
        _
      $region24: #{forward.1} parent=11 // pred_fallthru
        _
      // Predicated region
      $region25: #{forward.1} parent=11 // pred_check
        %p303 = pneg %p127
      $region26: #{forward.1} parent=11 // pred_check_branch
        %305 = sbr.rel (%p303) target = $region28
      $region27: #{forward.1} parent=11 // pred_region
        _
      $region28: #{forward.1} parent=11 // pred_fallthru
        _
      // Predicated region
      $region29: #{forward.1} parent=11 // pred_check
        %p306 = pneg %p148
      $region30: #{forward.1} parent=11 // pred_check_branch
        %308 = sbr.rel (%p306) target = $region32
      $region31: #{forward.1} parent=11 // pred_region
        _
      $region32: #{forward.1} parent=11 // pred_fallthru
        _
      // Predicated region
      $region33: #{forward.1} parent=11 // pred_check
        %p309 = pneg %p169
      $region34: #{forward.1} parent=11 // pred_check_branch
        %311 = sbr.rel (%p309) target = $region36
      $region35: #{forward.1} parent=11 // pred_region
        _
      $region36: #{forward.1} parent=11 // pred_fallthru
        _
      // Predicated region
      $region37: #{forward.1} parent=11 // pred_check
        %p312 = pneg %p190
      $region38: #{forward.1} parent=11 // pred_check_branch
        %314 = sbr.rel (%p312) target = $region40
      $region39: #{forward.1} parent=11 // pred_region
        _
      $region40: #{forward.1} parent=11 // pred_fallthru
        _
      // Predicated region
      $region41: #{forward.1} parent=11 // pred_check
        %p315 = pneg %p211
      $region42: #{forward.1} parent=11 // pred_check_branch
        %317 = sbr.rel (%p315) target = $region44
      $region43: #{forward.1} parent=11 // pred_region
        _
      $region44: #{forward.1} parent=11 // pred_fallthru
        _
      // Predicated region
      $region45: #{forward.1} parent=11 // pred_check
        %p318 = pneg %p232
      $region46: #{forward.1} parent=11 // pred_check_branch
        %320 = sbr.rel (%p318) target = $region48
      $region47: #{forward.1} parent=11 // pred_region
        _
      $region48: #{forward.1} parent=11 // pred_fallthru
        _
      // Predicated region
      $region49: #{forward.1} parent=11 // pred_check
        %p321 = pneg %p253
      $region50: #{forward.1} parent=11 // pred_check_branch
        %323 = sbr.rel (%p321) target = $region52
      $region51: #{forward.1} parent=11 // pred_region
        _
      $region52: #{forward.1} parent=11 // pred_fallthru
        _
    $region12: #{forward.1} parent=5 // pred_fallthru
      _
    %p324 = scmp.lt.s32.totalorder %s17, 2
    // Predicated region
    $region53: #{forward.1} parent=5 // pred_check
      %p325 = pneg %p324
    $region54: #{forward.1} parent=5 // pred_check_branch
      %327 = sbr.rel (%p325) target = $region56
    $region55: #{forward.1} parent=5 // pred_region
      // Predicated region
      $region57: #{forward.1} parent=55 // pred_check
        %p328 = pneg %p37
      $region58: #{forward.1} parent=55 // pred_check_branch
        %330 = sbr.rel (%p328) target = $region60
      $region59: #{forward.1} parent=55 // pred_region
        %p331 = scmp.lt.s32.totalorder %s17, 1
        %s332 = scalar_select %p331, %s17, 1
        %s333 = smul.addr %s332, 10
        %s334 = smul.addr %s333, 4
        %s335 = scalar_lea.vmem %s0, %s334
      $region60: #{forward.1} parent=55 // pred_fallthru
        _
    $region56: #{forward.1} parent=5 // pred_fallthru
      _
    %p336 = scmp.le.s32.totalorder 1, %s17
    %p337 = scmp.lt.s32.totalorder %s17, 3
    %p338 = pnand %p336, %p337
    %p339 = pneg %p338
    // Predicated region
    $region61: #{forward.1} parent=5 // pred_check
      _
    $region62: #{forward.1} parent=5 // pred_check_branch
      %341 = sbr.rel (%p338) target = $region64
    $region63: #{forward.1} parent=5 // pred_region
      %s342 = ssub.s32 %s17, 1
      %p343 = scmp.lt.s32.totalorder %s22, 1
      %s344 = scalar_select %p343, %s22, 1
      %s345 = smul.addr %s344, 10
      %s346 = smul.addr %s345, 4
      %s347 = scalar_lea.vmem %s0, %s346
      %p348 = pneg %p43
      %p349 = pneg %p40
      %p350 = pneg %p64
      %p351 = pneg %p61
      %p352 = pneg %p85
      %p353 = pneg %p82
      %p354 = pneg %p106
      %p355 = pneg %p103
      %p356 = pneg %p127
      %p357 = pneg %p124
      %p358 = pneg %p148
      %p359 = pneg %p145
      %p360 = pneg %p169
      %p361 = pneg %p166
      %p362 = pneg %p190
      %p363 = pneg %p187
      %p364 = pneg %p211
      %p365 = pneg %p208
      %p366 = pneg %p232
      %p367 = pneg %p229
      %p368 = pneg %p253
      %p369 = pneg %p250
      %p370 = pneg %p279
      %p371 = pneg %p276
      %p372 = scmp.lt.s32.totalorder %s22, 1
      %s373 = scalar_select %p372, %s22, 1
      %s374 = smul.addr %s373, 6
      %s375 = scalar_lea.vmem %s11, %s374
      %p376 = scmp.lt.s32.totalorder %s22, 1
      %s377 = scalar_select %p376, %s22, 1
      %s378 = smul.addr %s377, 10
      %s379 = smul.addr %s378, 4
      %s380 = scalar_lea.vmem %s0, %s379
      %p381 = scmp.lt.s32.totalorder %s22, 1
      %s382 = scalar_select %p381, %s22, 1
      %s383 = smul.addr %s382, 6
      %s384 = scalar_lea.vmem %s11, %s383
      %v386 = vld [vmem:[%s380] sm:$0xff]
      %v387 = vld [vmem:[%s380 + $0x8] sm:$0xff]
      %v388 = vld [vmem:[%s380 + $0x10] sm:$0xff]
      %v389 = vld [vmem:[%s380 + $0x18] sm:$0xff]
      %v390 = vld [vmem:[%s380 + $0x20] sm:$0x33]
      %v391 = vld [vmem:[%s1] sm:$0xff]
      %v392 = vld [vmem:[%s1 + $0x8] sm:$0xff]
      %v393 = vld [vmem:[%s1 + $0x10] sm:$0xff]
      %v394 = vld [vmem:[%s1 + $0x18] sm:$0xff]
      %v395 = vld [vmem:[%s1 + $0x20] sm:$0xff]
      %v396 = vld [vmem:[%s1 + $0x28] sm:$0xff]
      %v397 = vld [vmem:[%s1 + $0x30] sm:$0xff]
      %v398 = vld [vmem:[%s1 + $0x38] sm:$0xff]
      %v399 = vld [vmem:[%s1 + $0x40] sm:$0xff]
      %v400 = vld [vmem:[%s1 + $0x48] sm:$0xff]
      %v401 = vld [vmem:[%s1 + $0x50] sm:$0xff]
      %v402 = vld [vmem:[%s1 + $0x58] sm:$0xff]
      %v403 = vld [vmem:[%s1 + $0x60] sm:$0xff]
      %v404 = vld [vmem:[%s1 + $0x68] sm:$0xff]
      %v405 = vld [vmem:[%s1 + $0x70] sm:$0xff]
      %v406 = vld [vmem:[%s1 + $0x78] sm:$0xff]
      %v407 = vld [vmem:[%s1 + $0x80] sm:$0xff]
      %v408 = vld [vmem:[%s1 + $0x88] sm:$0xff]
      %v409 = vld [vmem:[%s1 + $0x90] sm:$0xff]
      %v410 = vld [vmem:[%s1 + $0x98] sm:$0xff]
      %v411 = vld [vmem:[%s1 + $0xa0] sm:$0xff]
      %v412 = vld [vmem:[%s1 + $0xa8] sm:$0xff]
      %v413 = vld [vmem:[%s1 + $0xb0] sm:$0xff]
      %v414 = vld [vmem:[%s1 + $0xb8] sm:$0xff]
      %v415 = vld [vmem:[%s1 + $0xc0] sm:$0xff]
      %v416 = vld [vmem:[%s1 + $0xc8] sm:$0xff]
      %v417 = vld [vmem:[%s1 + $0xd0] sm:$0xff]
      %v418 = vld [vmem:[%s1 + $0xd8] sm:$0xff]
      %v419 = vld [vmem:[%s1 + $0xe0] sm:$0xff]
      %v420 = vld [vmem:[%s1 + $0xe8] sm:$0xff]
      %v421 = vld [vmem:[%s1 + $0xf0] sm:$0xff]
      %v422 = vld [vmem:[%s1 + $0xf8] sm:$0xff]
      %v423 = vld [vmem:[%s1 + $0x100] sm:$0xff]
      %v424 = vld [vmem:[%s1 + $0x108] sm:$0xff]
      %v425 = vld [vmem:[%s1 + $0x110] sm:$0xff]
      %v426 = vld [vmem:[%s1 + $0x118] sm:$0xff]
      %v431 = vunpack.c.l.b16 %v386
      %v432 = vunpack.c.h.b16 %v386
      %v433 = vunpack.c.l.b16 %v387
      %v434 = vunpack.c.h.b16 %v387
      %v435 = vunpack.c.l.b16 %v388
      %v436 = vunpack.c.h.b16 %v388
      %v437 = vunpack.c.l.b16 %v389
      %v438 = vunpack.c.h.b16 %v389
      %v439 = vpack.c.b16 %v433, %v431
      %v440 = vpack.c.b16 %v434, %v432
      %v441 = vpack.c.b16 %v437, %v435
      %v442 = vpack.c.b16 %v438, %v436
      %vm443 = vsmask.f32 7424
      %v445 = vshrl.u32 %v439, 16
      %v447 = vshll.u32 %v439, 16
      %v449 = vrot.slane %v447, 1
      %v450 = vor.u32 %v445, %v449
      %v452 = vshll.u32 %v441, 16
      %v454 = vrot.slane %v452, 1
      %v455 = vsel %vm443, %v450, %v454
      %v457 = vshrl.u32 %v440, 16
      %v459 = vshll.u32 %v440, 16
      %v461 = vrot.slane %v459, 1
      %v462 = vor.u32 %v457, %v461
      %v464 = vshll.u32 %v442, 16
      %v466 = vrot.slane %v464, 1
      %v467 = vsel %vm443, %v462, %v466
      %v468 = vshrl.u32 %v441, 16
      %v470 = vor.u32 %v468, %v454
      %v471 = vshrl.u32 %v442, 16
      %v473 = vor.u32 %v471, %v466
      %v494 = vunpack.c.l.b16 %v409
      %v495 = vunpack.c.h.b16 %v409
      %v496 = vunpack.c.l.b16 %v410
      %v497 = vunpack.c.h.b16 %v410
      %v498 = vunpack.c.l.b16 %v411
      %v499 = vunpack.c.h.b16 %v411
      %v500 = vunpack.c.l.b16 %v412
      %v501 = vunpack.c.h.b16 %v412
      %v502 = vunpack.c.l.b16 %v413
      %v503 = vunpack.c.h.b16 %v413
      %v504 = vunpack.c.l.b16 %v414
      %v505 = vunpack.c.h.b16 %v414
      %v506 = vunpack.c.l.b16 %v415
      %v507 = vunpack.c.h.b16 %v415
      %v508 = vunpack.c.l.b16 %v416
      %v509 = vunpack.c.h.b16 %v416
      %v510 = vunpack.c.l.b16 %v417
      %v511 = vunpack.c.h.b16 %v417
      %v512 = vunpack.c.l.b16 %v418
      %v513 = vunpack.c.h.b16 %v418
      %v514 = vunpack.c.l.b16 %v419
      %v515 = vunpack.c.h.b16 %v419
      %v516 = vunpack.c.l.b16 %v420
      %v517 = vunpack.c.h.b16 %v420
      %v518 = vunpack.c.l.b16 %v421
      %v519 = vunpack.c.h.b16 %v421
      %v520 = vunpack.c.l.b16 %v422
      %v521 = vunpack.c.h.b16 %v422
      %v522 = vunpack.c.l.b16 %v423
      %v523 = vunpack.c.h.b16 %v423
      %v524 = vunpack.c.l.b16 %v424
      %v525 = vunpack.c.h.b16 %v424
      %v526 = vunpack.c.l.b16 %v425
      %v527 = vunpack.c.h.b16 %v425
      %v528 = vunpack.c.l.b16 %v426
      %v529 = vunpack.c.h.b16 %v426
      %v530 = vpack.c.b16 %v496, %v494
      %v531 = vpack.c.b16 %v497, %v495
      %v532 = vpack.c.b16 %v500, %v498
      %v533 = vpack.c.b16 %v501, %v499
      %v534 = vpack.c.b16 %v504, %v502
      %v535 = vpack.c.b16 %v505, %v503
      %v536 = vpack.c.b16 %v508, %v506
      %v537 = vpack.c.b16 %v509, %v507
      %v538 = vpack.c.b16 %v512, %v510
      %v539 = vpack.c.b16 %v513, %v511
      %v540 = vpack.c.b16 %v516, %v514
      %v541 = vpack.c.b16 %v517, %v515
      %v542 = vpack.c.b16 %v520, %v518
      %v543 = vpack.c.b16 %v521, %v519
      %v544 = vpack.c.b16 %v524, %v522
      %v545 = vpack.c.b16 %v525, %v523
      %v546 = vpack.c.b16 %v528, %v526
      %v547 = vpack.c.b16 %v529, %v527
      %vm566 = vcmask 130048
      %v568 = vsel %vm566, %v467, 0
      %v571 = vsel %vm566, %v473, 0
      %573 = vmatprep.subr.bf16.mxu0 %v531
      %574 = vmatpush1.bf16.msra.mxu0 %v530
      %575 = vmatprep.subr.bf16.mxu0 %v533
      %576 = vmatpush1.bf16.msra.mxu0 %v532
      %577 = vmatprep.subr.bf16.mxu0 %v535
      %578 = vmatpush1.bf16.msra.mxu0 %v534
      %579 = vmatprep.subr.bf16.mxu0 %v537
      %580 = vmatpush1.bf16.msra.mxu0 %v536
      %581 = vmatprep.subr.bf16.mxu0 %v539
      %582 = vmatpush1.bf16.msra.mxu0 %v538
      %583 = vmatprep.subr.bf16.mxu0 %v541
      %584 = vmatpush1.bf16.msra.mxu0 %v540
      %585 = vmatprep.subr.bf16.mxu0 %v543
      %586 = vmatpush1.bf16.msra.mxu0 %v542
      %587 = vmatprep.subr.bf16.mxu0 %v545
      %588 = vmatpush1.bf16.msra.mxu0 %v544
      %589 = vmatprep.subr.bf16.mxu0 %v547
      %590 = vmatpush1.bf16.msra.mxu0 %v546
      %591 = vmatprep.subr.bf16.mxu0 0
      %592 = vmatpush1.bf16.msra.mxu0 0
      %593 = vmatprep.subr.bf16.mxu0 0
      %594 = vmatpush1.bf16.msra.mxu0 0
      %595 = vmatprep.subr.bf16.mxu0 0
      %596 = vmatpush1.bf16.msra.mxu0 0
      %597 = vmatprep.subr.bf16.mxu0 0
      %598 = vmatpush1.bf16.msra.mxu0 0
      %599 = vmatprep.subr.bf16.mxu0 0
      %600 = vmatpush1.bf16.msra.mxu0 0
      %601 = vmatprep.subr.bf16.mxu0 0
      %602 = vmatpush1.bf16.msra.mxu0 0
      %603 = vmatprep.subr.bf16.mxu0 0
      %604 = vmatpush1.bf16.msra.mxu0 0
      %605 = vmatprep.mubr.bf16.mxu0 %v568
      %606 = vmatmul.mubr.bf16.gmra.mrb[0].mxu0 %v455
      %v607 = vpop.f32.mrb[0].mxu0
      %v608 = vadd.f32 0.0, %v607
      %v609 = vpop.f32.mrb[0].mxu0
      %v610 = vadd.f32 0.0, %v609
      %v611 = vpop.f32.mrb[0].mxu0
      %v612 = vadd.f32 0.0, %v611
      %v613 = vpop.f32.mrb[0].mxu0
      %v614 = vadd.f32 0.0, %v613
      %615 = vmatprep.mubr.bf16.mxu0 %v571
      %616 = vmatmul.mubr.bf16.gmra.mrb[0].mxu0 %v470
      %v617 = vpop.f32.mrb[0].mxu0
      %v618 = vadd.f32 0.0, %v617
      %v619 = vpop.f32.mrb[0].mxu0
      %v620 = vadd.f32 0.0, %v619
      %v621 = vpop.f32.mrb[0].mxu0
      %v622 = vadd.f32 0.0, %v621
      %v623 = vpop.f32.mrb[0].mxu0
      %v624 = vadd.f32 0.0, %v623
      %625 = vdwg.mxu0
      %v646 = vunpack.c.l.b16 %v391
      %v647 = vunpack.c.h.b16 %v391
      %v648 = vunpack.c.l.b16 %v392
      %v649 = vunpack.c.h.b16 %v392
      %v650 = vunpack.c.l.b16 %v393
      %v651 = vunpack.c.h.b16 %v393
      %v652 = vunpack.c.l.b16 %v394
      %v653 = vunpack.c.h.b16 %v394
      %v654 = vunpack.c.l.b16 %v395
      %v655 = vunpack.c.h.b16 %v395
      %v656 = vunpack.c.l.b16 %v396
      %v657 = vunpack.c.h.b16 %v396
      %v658 = vunpack.c.l.b16 %v397
      %v659 = vunpack.c.h.b16 %v397
      %v660 = vunpack.c.l.b16 %v398
      %v661 = vunpack.c.h.b16 %v398
      %v662 = vunpack.c.l.b16 %v399
      %v663 = vunpack.c.h.b16 %v399
      %v664 = vunpack.c.l.b16 %v400
      %v665 = vunpack.c.h.b16 %v400
      %v666 = vunpack.c.l.b16 %v401
      %v667 = vunpack.c.h.b16 %v401
      %v668 = vunpack.c.l.b16 %v402
      %v669 = vunpack.c.h.b16 %v402
      %v670 = vunpack.c.l.b16 %v403
      %v671 = vunpack.c.h.b16 %v403
      %v672 = vunpack.c.l.b16 %v404
      %v673 = vunpack.c.h.b16 %v404
      %v674 = vunpack.c.l.b16 %v405
      %v675 = vunpack.c.h.b16 %v405
      %v676 = vunpack.c.l.b16 %v406
      %v677 = vunpack.c.h.b16 %v406
      %v678 = vunpack.c.l.b16 %v407
      %v679 = vunpack.c.h.b16 %v407
      %v680 = vunpack.c.l.b16 %v408
      %v681 = vunpack.c.h.b16 %v408
      %v682 = vpack.c.b16 %v648, %v646
      %v683 = vpack.c.b16 %v649, %v647
      %v684 = vpack.c.b16 %v652, %v650
      %v685 = vpack.c.b16 %v653, %v651
      %v686 = vpack.c.b16 %v656, %v654
      %v687 = vpack.c.b16 %v657, %v655
      %v688 = vpack.c.b16 %v660, %v658
      %v689 = vpack.c.b16 %v661, %v659
      %v690 = vpack.c.b16 %v664, %v662
      %v691 = vpack.c.b16 %v665, %v663
      %v692 = vpack.c.b16 %v668, %v666
      %v693 = vpack.c.b16 %v669, %v667
      %v694 = vpack.c.b16 %v672, %v670
      %v695 = vpack.c.b16 %v673, %v671
      %v696 = vpack.c.b16 %v676, %v674
      %v697 = vpack.c.b16 %v677, %v675
      %v698 = vpack.c.b16 %v680, %v678
      %v699 = vpack.c.b16 %v681, %v679
      %v718 = vsel %vm566, %v440, 0
      %v720 = vsel %vm566, %v442, 0
      %722 = vmatprep.subr.bf16.mxu0 %v683
      %723 = vmatpush1.bf16.msra.mxu0 %v682
      %724 = vmatprep.subr.bf16.mxu0 %v685
      %725 = vmatpush1.bf16.msra.mxu0 %v684
      %726 = vmatprep.subr.bf16.mxu0 %v687
      %727 = vmatpush1.bf16.msra.mxu0 %v686
      %728 = vmatprep.subr.bf16.mxu0 %v689
      %729 = vmatpush1.bf16.msra.mxu0 %v688
      %730 = vmatprep.subr.bf16.mxu0 %v691
      %731 = vmatpush1.bf16.msra.mxu0 %v690
      %732 = vmatprep.subr.bf16.mxu0 %v693
      %733 = vmatpush1.bf16.msra.mxu0 %v692
      %734 = vmatprep.subr.bf16.mxu0 %v695
      %735 = vmatpush1.bf16.msra.mxu0 %v694
      %736 = vmatprep.subr.bf16.mxu0 %v697
      %737 = vmatpush1.bf16.msra.mxu0 %v696
      %738 = vmatprep.subr.bf16.mxu0 %v699
      %739 = vmatpush1.bf16.msra.mxu0 %v698
      %740 = vmatprep.subr.bf16.mxu0 0
      %741 = vmatpush1.bf16.msra.mxu0 0
      %742 = vmatprep.subr.bf16.mxu0 0
      %743 = vmatpush1.bf16.msra.mxu0 0
      %744 = vmatprep.subr.bf16.mxu0 0
      %745 = vmatpush1.bf16.msra.mxu0 0
      %746 = vmatprep.subr.bf16.mxu0 0
      %747 = vmatpush1.bf16.msra.mxu0 0
      %748 = vmatprep.subr.bf16.mxu0 0
      %749 = vmatpush1.bf16.msra.mxu0 0
      %750 = vmatprep.subr.bf16.mxu0 0
      %751 = vmatpush1.bf16.msra.mxu0 0
      %752 = vmatprep.subr.bf16.mxu0 0
      %753 = vmatpush1.bf16.msra.mxu0 0
      %754 = vmatprep.mubr.bf16.mxu0 %v718
      %755 = vmatmul.mubr.bf16.gmra.mrb[0].mxu0 %v439
      %v756 = vpop.f32.mrb[0].mxu0
      %v757 = vadd.f32 %v608, %v756
      %v758 = vpop.f32.mrb[0].mxu0
      %v759 = vadd.f32 %v610, %v758
      %v760 = vpop.f32.mrb[0].mxu0
      %v761 = vadd.f32 %v612, %v760
      %v762 = vpop.f32.mrb[0].mxu0
      %v763 = vadd.f32 %v614, %v762
      %764 = vmatprep.mubr.bf16.mxu0 %v720
      %765 = vmatmul.mubr.bf16.gmra.mrb[0].mxu0 %v441
      %v766 = vpop.f32.mrb[0].mxu0
      %v767 = vadd.f32 %v618, %v766
      %v768 = vpop.f32.mrb[0].mxu0
      %v769 = vadd.f32 %v620, %v768
      %v770 = vpop.f32.mrb[0].mxu0
      %v771 = vadd.f32 %v622, %v770
      %v772 = vpop.f32.mrb[0].mxu0
      %v773 = vadd.f32 %v624, %v772
      %774 = vdwg.mxu0
      %v775 = vld [vmem:[%s1 + $0x120] sm:$0xff]
      %v776 = vld [vmem:[%s1 + $0x128] sm:$0xff]
      %v777 = vld [vmem:[%s1 + $0x130] sm:$0xff]
      %v778 = vld [vmem:[%s1 + $0x138] sm:$0xff]
      %v779 = vld [vmem:[%s1 + $0x140] sm:$0xff]
      %v780 = vld [vmem:[%s1 + $0x148] sm:$0xff]
      %v781 = vld [vmem:[%s1 + $0x150] sm:$0xff]
      %v782 = vld [vmem:[%s1 + $0x158] sm:$0xff]
      %v783 = vld [vmem:[%s1 + $0x160] sm:$0xff]
      %v784 = vld [vmem:[%s1 + $0x168] sm:$0xff]
      %v785 = vld [vmem:[%s1 + $0x170] sm:$0xff]
      %v786 = vld [vmem:[%s1 + $0x178] sm:$0xff]
      %v787 = vld [vmem:[%s1 + $0x180] sm:$0xff]
      %v788 = vld [vmem:[%s1 + $0x188] sm:$0xff]
      %v789 = vld [vmem:[%s1 + $0x190] sm:$0xff]
      %v790 = vld [vmem:[%s1 + $0x198] sm:$0xff]
      %v791 = vld [vmem:[%s1 + $0x1a0] sm:$0xff]
      %v792 = vld [vmem:[%s1 + $0x1a8] sm:$0xff]
      %vm793 = vcmask 1046528
      %v794 = vrot.slane %v439, 1
      %v795 = vrot.slane %v441, 1
      %v796 = vsel %vm793, %v794, %v795
      %v797 = vrot.slane %v440, 1
      %v798 = vrot.slane %v442, 1
      %v799 = vsel %vm793, %v797, %v798
      %v820 = vunpack.c.l.b16 %v775
      %v821 = vunpack.c.h.b16 %v775
      %v822 = vunpack.c.l.b16 %v776
      %v823 = vunpack.c.h.b16 %v776
      %v824 = vunpack.c.l.b16 %v777
      %v825 = vunpack.c.h.b16 %v777
      %v826 = vunpack.c.l.b16 %v778
      %v827 = vunpack.c.h.b16 %v778
      %v828 = vunpack.c.l.b16 %v779
      %v829 = vunpack.c.h.b16 %v779
      %v830 = vunpack.c.l.b16 %v780
      %v831 = vunpack.c.h.b16 %v780
      %v832 = vunpack.c.l.b16 %v781
      %v833 = vunpack.c.h.b16 %v781
      %v834 = vunpack.c.l.b16 %v782
      %v835 = vunpack.c.h.b16 %v782
      %v836 = vunpack.c.l.b16 %v783
      %v837 = vunpack.c.h.b16 %v783
      %v838 = vunpack.c.l.b16 %v784
      %v839 = vunpack.c.h.b16 %v784
      %v840 = vunpack.c.l.b16 %v785
      %v841 = vunpack.c.h.b16 %v785
      %v842 = vunpack.c.l.b16 %v786
      %v843 = vunpack.c.h.b16 %v786
      %v844 = vunpack.c.l.b16 %v787
      %v845 = vunpack.c.h.b16 %v787
      %v846 = vunpack.c.l.b16 %v788
      %v847 = vunpack.c.h.b16 %v788
      %v848 = vunpack.c.l.b16 %v789
      %v849 = vunpack.c.h.b16 %v789
      %v850 = vunpack.c.l.b16 %v790
      %v851 = vunpack.c.h.b16 %v790
      %v852 = vunpack.c.l.b16 %v791
      %v853 = vunpack.c.h.b16 %v791
      %v854 = vunpack.c.l.b16 %v792
      %v855 = vunpack.c.h.b16 %v792
      %v856 = vpack.c.b16 %v822, %v820
      %v857 = vpack.c.b16 %v823, %v821
      %v858 = vpack.c.b16 %v826, %v824
      %v859 = vpack.c.b16 %v827, %v825
      %v860 = vpack.c.b16 %v830, %v828
      %v861 = vpack.c.b16 %v831, %v829
      %v862 = vpack.c.b16 %v834, %v832
      %v863 = vpack.c.b16 %v835, %v833
      %v864 = vpack.c.b16 %v838, %v836
      %v865 = vpack.c.b16 %v839, %v837
      %v866 = vpack.c.b16 %v842, %v840
      %v867 = vpack.c.b16 %v843, %v841
      %v868 = vpack.c.b16 %v846, %v844
      %v869 = vpack.c.b16 %v847, %v845
      %v870 = vpack.c.b16 %v850, %v848
      %v871 = vpack.c.b16 %v851, %v849
      %v872 = vpack.c.b16 %v854, %v852
      %v873 = vpack.c.b16 %v855, %v853
      %v893 = vsel %vm566, %v799, 0
      %v896 = vsel %vm566, %v798, 0
      %898 = vmatprep.subr.bf16.mxu0 %v857
      %899 = vmatpush1.bf16.msra.mxu0 %v856
      %900 = vmatprep.subr.bf16.mxu0 %v859
      %901 = vmatpush1.bf16.msra.mxu0 %v858
      %902 = vmatprep.subr.bf16.mxu0 %v861
      %903 = vmatpush1.bf16.msra.mxu0 %v860
      %904 = vmatprep.subr.bf16.mxu0 %v863
      %905 = vmatpush1.bf16.msra.mxu0 %v862
      %906 = vmatprep.subr.bf16.mxu0 %v865
      %907 = vmatpush1.bf16.msra.mxu0 %v864
      %908 = vmatprep.subr.bf16.mxu0 %v867
      %909 = vmatpush1.bf16.msra.mxu0 %v866
      %910 = vmatprep.subr.bf16.mxu0 %v869
      %911 = vmatpush1.bf16.msra.mxu0 %v868
      %912 = vmatprep.subr.bf16.mxu0 %v871
      %913 = vmatpush1.bf16.msra.mxu0 %v870
      %914 = vmatprep.subr.bf16.mxu0 %v873
      %915 = vmatpush1.bf16.msra.mxu0 %v872
      %916 = vmatprep.subr.bf16.mxu0 0
      %917 = vmatpush1.bf16.msra.mxu0 0
      %918 = vmatprep.subr.bf16.mxu0 0
      %919 = vmatpush1.bf16.msra.mxu0 0
      %920 = vmatprep.subr.bf16.mxu0 0
      %921 = vmatpush1.bf16.msra.mxu0 0
      %922 = vmatprep.subr.bf16.mxu0 0
      %923 = vmatpush1.bf16.msra.mxu0 0
      %924 = vmatprep.subr.bf16.mxu0 0
      %925 = vmatpush1.bf16.msra.mxu0 0
      %926 = vmatprep.subr.bf16.mxu0 0
      %927 = vmatpush1.bf16.msra.mxu0 0
      %928 = vmatprep.subr.bf16.mxu0 0
      %929 = vmatpush1.bf16.msra.mxu0 0
      %930 = vmatprep.mubr.bf16.mxu0 %v893
      %931 = vmatmul.mubr.bf16.gmra.mrb[0].mxu0 %v796
      %v932 = vpop.f32.mrb[0].mxu0
      %v933 = vadd.f32 0.0, %v932
      %v934 = vpop.f32.mrb[0].mxu0
      %v935 = vadd.f32 0.0, %v934
      %v936 = vpop.f32.mrb[0].mxu0
      %v937 = vadd.f32 0.0, %v936
      %v938 = vpop.f32.mrb[0].mxu0
      %v939 = vadd.f32 0.0, %v938
      %940 = vmatprep.mubr.bf16.mxu0 %v896
      %941 = vmatmul.mubr.bf16.gmra.mrb[0].mxu0 %v795
      %v942 = vpop.f32.mrb[0].mxu0
      %v943 = vadd.f32 0.0, %v942
      %v944 = vpop.f32.mrb[0].mxu0
      %v945 = vadd.f32 0.0, %v944
      %v946 = vpop.f32.mrb[0].mxu0
      %v947 = vadd.f32 0.0, %v946
      %v948 = vpop.f32.mrb[0].mxu0
      %v949 = vadd.f32 0.0, %v948
      %950 = vdwg.mxu0
      %v951 = vadd.f32 %v757, %v933
      %v952 = vadd.f32 %v759, %v935
      %v953 = vadd.f32 %v761, %v937
      %v954 = vadd.f32 %v763, %v939
      %v955 = vadd.f32 %v767, %v943
      %v956 = vadd.f32 %v769, %v945
      %v957 = vadd.f32 %v771, %v947
      %v958 = vadd.f32 %v773, %v949
      %v959 = vld [vmem:[%s1 + $0x1b0] sm:$0xff]
      %v960 = vld [vmem:[%s1 + $0x1b8] sm:$0xff]
      %v961 = vld [vmem:[%s1 + $0x1c0] sm:$0xff]
      %v962 = vld [vmem:[%s1 + $0x1c8] sm:$0xff]
      %v963 = vld [vmem:[%s1 + $0x1d0] sm:$0xff]
      %v964 = vld [vmem:[%s1 + $0x1d8] sm:$0xff]
      %v965 = vld [vmem:[%s1 + $0x1e0] sm:$0xff]
      %v966 = vld [vmem:[%s1 + $0x1e8] sm:$0xff]
      %v967 = vld [vmem:[%s1 + $0x1f0] sm:$0xff]
      %v968 = vld [vmem:[%s1 + $0x1f8] sm:$0xff]
      %v969 = vld [vmem:[%s1 + $0x200] sm:$0xff]
      %v970 = vld [vmem:[%s1 + $0x208] sm:$0xff]
      %v971 = vld [vmem:[%s1 + $0x210] sm:$0xff]
      %v972 = vld [vmem:[%s1 + $0x218] sm:$0xff]
      %v973 = vld [vmem:[%s1 + $0x220] sm:$0xff]
      %v974 = vld [vmem:[%s1 + $0x228] sm:$0xff]
      %v975 = vld [vmem:[%s1 + $0x230] sm:$0xff]
      %v976 = vld [vmem:[%s1 + $0x238] sm:$0xff]
      %vm977 = vsmask.f32 6400
      %v978 = vrot.slane %v445, 1
      %v979 = vrot.slane %v447, 2
      %v980 = vor.u32 %v978, %v979
      %v981 = vrot.slane %v468, 1
      %v982 = vrot.slane %v452, 2
      %v983 = vor.u32 %v981, %v982
      %v984 = vsel %vm977, %v980, %v983
      %v985 = vrot.slane %v457, 1
      %v986 = vrot.slane %v459, 2
      %v987 = vor.u32 %v985, %v986
      %v988 = vrot.slane %v471, 1
      %v989 = vrot.slane %v464, 2
      %v990 = vor.u32 %v988, %v989
      %v991 = vsel %vm977, %v987, %v990
      %v1012 = vunpack.c.l.b16 %v959
      %v1013 = vunpack.c.h.b16 %v959
      %v1014 = vunpack.c.l.b16 %v960
      %v1015 = vunpack.c.h.b16 %v960
      %v1016 = vunpack.c.l.b16 %v961
      %v1017 = vunpack.c.h.b16 %v961
      %v1018 = vunpack.c.l.b16 %v962
      %v1019 = vunpack.c.h.b16 %v962
      %v1020 = vunpack.c.l.b16 %v963
      %v1021 = vunpack.c.h.b16 %v963
      %v1022 = vunpack.c.l.b16 %v964
      %v1023 = vunpack.c.h.b16 %v964
      %v1024 = vunpack.c.l.b16 %v965
      %v1025 = vunpack.c.h.b16 %v965
      %v1026 = vunpack.c.l.b16 %v966
      %v1027 = vunpack.c.h.b16 %v966
      %v1028 = vunpack.c.l.b16 %v967
      %v1029 = vunpack.c.h.b16 %v967
      %v1030 = vunpack.c.l.b16 %v968
      %v1031 = vunpack.c.h.b16 %v968
      %v1032 = vunpack.c.l.b16 %v969
      %v1033 = vunpack.c.h.b16 %v969
      %v1034 = vunpack.c.l.b16 %v970
      %v1035 = vunpack.c.h.b16 %v970
      %v1036 = vunpack.c.l.b16 %v971
      %v1037 = vunpack.c.h.b16 %v971
      %v1038 = vunpack.c.l.b16 %v972
      %v1039 = vunpack.c.h.b16 %v972
      %v1040 = vunpack.c.l.b16 %v973
      %v1041 = vunpack.c.h.b16 %v973
      %v1042 = vunpack.c.l.b16 %v974
      %v1043 = vunpack.c.h.b16 %v974
      %v1044 = vunpack.c.l.b16 %v975
      %v1045 = vunpack.c.h.b16 %v975
      %v1046 = vunpack.c.l.b16 %v976
      %v1047 = vunpack.c.h.b16 %v976
      %v1048 = vpack.c.b16 %v1014, %v1012
      %v1049 = vpack.c.b16 %v1015, %v1013
      %v1050 = vpack.c.b16 %v1018, %v1016
      %v1051 = vpack.c.b16 %v1019, %v1017
      %v1052 = vpack.c.b16 %v1022, %v1020
      %v1053 = vpack.c.b16 %v1023, %v1021
      %v1054 = vpack.c.b16 %v1026, %v1024
      %v1055 = vpack.c.b16 %v1027, %v1025
      %v1056 = vpack.c.b16 %v1030, %v1028
      %v1057 = vpack.c.b16 %v1031, %v1029
      %v1058 = vpack.c.b16 %v1034, %v1032
      %v1059 = vpack.c.b16 %v1035, %v1033
      %v1060 = vpack.c.b16 %v1038, %v1036
      %v1061 = vpack.c.b16 %v1039, %v1037
      %v1062 = vpack.c.b16 %v1042, %v1040
      %v1063 = vpack.c.b16 %v1043, %v1041
      %v1064 = vpack.c.b16 %v1046, %v1044
      %v1065 = vpack.c.b16 %v1047, %v1045
      %v1085 = vsel %vm566, %v991, 0
      %v1088 = vsel %vm566, %v990, 0
      %1090 = vmatprep.subr.bf16.mxu0 %v1049
      %1091 = vmatpush1.bf16.msra.mxu0 %v1048
      %1092 = vmatprep.subr.bf16.mxu0 %v1051
      %1093 = vmatpush1.bf16.msra.mxu0 %v1050
      %1094 = vmatprep.subr.bf16.mxu0 %v1053
      %1095 = vmatpush1.bf16.msra.mxu0 %v1052
      %1096 = vmatprep.subr.bf16.mxu0 %v1055
      %1097 = vmatpush1.bf16.msra.mxu0 %v1054
      %1098 = vmatprep.subr.bf16.mxu0 %v1057
      %1099 = vmatpush1.bf16.msra.mxu0 %v1056
      %1100 = vmatprep.subr.bf16.mxu0 %v1059
      %1101 = vmatpush1.bf16.msra.mxu0 %v1058
      %1102 = vmatprep.subr.bf16.mxu0 %v1061
      %1103 = vmatpush1.bf16.msra.mxu0 %v1060
      %1104 = vmatprep.subr.bf16.mxu0 %v1063
      %1105 = vmatpush1.bf16.msra.mxu0 %v1062
      %1106 = vmatprep.subr.bf16.mxu0 %v1065
      %1107 = vmatpush1.bf16.msra.mxu0 %v1064
      %1108 = vmatprep.subr.bf16.mxu0 0
      %1109 = vmatpush1.bf16.msra.mxu0 0
      %1110 = vmatprep.subr.bf16.mxu0 0
      %1111 = vmatpush1.bf16.msra.mxu0 0
      %1112 = vmatprep.subr.bf16.mxu0 0
      %1113 = vmatpush1.bf16.msra.mxu0 0
      %1114 = vmatprep.subr.bf16.mxu0 0
      %1115 = vmatpush1.bf16.msra.mxu0 0
      %1116 = vmatprep.subr.bf16.mxu0 0
      %1117 = vmatpush1.bf16.msra.mxu0 0
      %1118 = vmatprep.subr.bf16.mxu0 0
      %1119 = vmatpush1.bf16.msra.mxu0 0
      %1120 = vmatprep.subr.bf16.mxu0 0
      %1121 = vmatpush1.bf16.msra.mxu0 0
      %1122 = vmatprep.mubr.bf16.mxu0 %v1085
      %1123 = vmatmul.mubr.bf16.gmra.mrb[0].mxu0 %v984
      %v1124 = vpop.f32.mrb[0].mxu0
      %v1125 = vadd.f32 0.0, %v1124
      %v1126 = vpop.f32.mrb[0].mxu0
      %v1127 = vadd.f32 0.0, %v1126
      %v1128 = vpop.f32.mrb[0].mxu0
      %v1129 = vadd.f32 0.0, %v1128
      %v1130 = vpop.f32.mrb[0].mxu0
      %v1131 = vadd.f32 0.0, %v1130
      %1132 = vmatprep.mubr.bf16.mxu0 %v1088
      %1133 = vmatmul.mubr.bf16.gmra.mrb[0].mxu0 %v983
      %v1134 = vpop.f32.mrb[0].mxu0
      %v1135 = vadd.f32 0.0, %v1134
      %v1136 = vpop.f32.mrb[0].mxu0
      %v1137 = vadd.f32 0.0, %v1136
      %v1138 = vpop.f32.mrb[0].mxu0
      %v1139 = vadd.f32 0.0, %v1138
      %v1140 = vpop.f32.mrb[0].mxu0
      %v1141 = vadd.f32 0.0, %v1140
      %1142 = vdwg.mxu0
      %v1143 = vadd.f32 %v951, %v1125
      %v1144 = vadd.f32 %v952, %v1127
      %v1145 = vadd.f32 %v953, %v1129
      %v1146 = vadd.f32 %v954, %v1131
      %v1147 = vadd.f32 %v955, %v1135
      %v1148 = vadd.f32 %v956, %v1137
      %v1149 = vadd.f32 %v957, %v1139
      %v1150 = vadd.f32 %v958, %v1141
      %v1151 = vld [vmem:[%s1 + $0x240] sm:$0xff]
      %v1152 = vld [vmem:[%s1 + $0x248] sm:$0xff]
      %v1153 = vld [vmem:[%s1 + $0x250] sm:$0xff]
      %v1154 = vld [vmem:[%s1 + $0x258] sm:$0xff]
      %v1155 = vld [vmem:[%s1 + $0x260] sm:$0xff]
      %v1156 = vld [vmem:[%s1 + $0x268] sm:$0xff]
      %v1157 = vld [vmem:[%s1 + $0x270] sm:$0xff]
      %v1158 = vld [vmem:[%s1 + $0x278] sm:$0xff]
      %v1159 = vld [vmem:[%s1 + $0x280] sm:$0xff]
      %v1160 = vld [vmem:[%s1 + $0x288] sm:$0xff]
      %v1161 = vld [vmem:[%s1 + $0x290] sm:$0xff]
      %v1162 = vld [vmem:[%s1 + $0x298] sm:$0xff]
      %v1163 = vld [vmem:[%s1 + $0x2a0] sm:$0xff]
      %v1164 = vld [vmem:[%s1 + $0x2a8] sm:$0xff]
      %v1165 = vld [vmem:[%s1 + $0x2b0] sm:$0xff]
      %v1166 = vld [vmem:[%s1 + $0x2b8] sm:$0xff]
      %v1167 = vld [vmem:[%s1 + $0x2c0] sm:$0xff]
      %v1168 = vld [vmem:[%s1 + $0x2c8] sm:$0xff]
      %v1170 = vunpack.c.l.b16 %v390
      %v1171 = vunpack.c.h.b16 %v390
      %v1172 = vpack.c.b16 %v1170, %v1170
      %v1173 = vpack.c.b16 %v1171, %v1171
      %vm1174 = vcmask 1045504
      %v1175 = vrot.slane %v439, 2
      %v1176 = vrot.slane %v441, 2
      %v1177 = vsel %vm1174, %v1175, %v1176
      %v1178 = vrot.slane %v440, 2
      %v1179 = vrot.slane %v442, 2
      %v1180 = vsel %vm1174, %v1178, %v1179
      %v1181 = vrot.slane %v1172, 2
      %v1182 = vsel %vm1174, %v1176, %v1181
      %v1183 = vrot.slane %v1173, 2
      %v1184 = vsel %vm1174, %v1179, %v1183
      %v1205 = vunpack.c.l.b16 %v1151
      %v1206 = vunpack.c.h.b16 %v1151
      %v1207 = vunpack.c.l.b16 %v1152
      %v1208 = vunpack.c.h.b16 %v1152
      %v1209 = vunpack.c.l.b16 %v1153
      %v1210 = vunpack.c.h.b16 %v1153
      %v1211 = vunpack.c.l.b16 %v1154
      %v1212 = vunpack.c.h.b16 %v1154
      %v1213 = vunpack.c.l.b16 %v1155
      %v1214 = vunpack.c.h.b16 %v1155
      %v1215 = vunpack.c.l.b16 %v1156
      %v1216 = vunpack.c.h.b16 %v1156
      %v1217 = vunpack.c.l.b16 %v1157
      %v1218 = vunpack.c.h.b16 %v1157
      %v1219 = vunpack.c.l.b16 %v1158
      %v1220 = vunpack.c.h.b16 %v1158
      %v1221 = vunpack.c.l.b16 %v1159
      %v1222 = vunpack.c.h.b16 %v1159
      %v1223 = vunpack.c.l.b16 %v1160
      %v1224 = vunpack.c.h.b16 %v1160
      %v1225 = vunpack.c.l.b16 %v1161
      %v1226 = vunpack.c.h.b16 %v1161
      %v1227 = vunpack.c.l.b16 %v1162
      %v1228 = vunpack.c.h.b16 %v1162
      %v1229 = vunpack.c.l.b16 %v1163
      %v1230 = vunpack.c.h.b16 %v1163
      %v1231 = vunpack.c.l.b16 %v1164
      %v1232 = vunpack.c.h.b16 %v1164
      %v1233 = vunpack.c.l.b16 %v1165
      %v1234 = vunpack.c.h.b16 %v1165
      %v1235 = vunpack.c.l.b16 %v1166
      %v1236 = vunpack.c.h.b16 %v1166
      %v1237 = vunpack.c.l.b16 %v1167
      %v1238 = vunpack.c.h.b16 %v1167
      %v1239 = vunpack.c.l.b16 %v1168
      %v1240 = vunpack.c.h.b16 %v1168
      %v1241 = vpack.c.b16 %v1207, %v1205
      %v1242 = vpack.c.b16 %v1208, %v1206
      %v1243 = vpack.c.b16 %v1211, %v1209
      %v1244 = vpack.c.b16 %v1212, %v1210
      %v1245 = vpack.c.b16 %v1215, %v1213
      %v1246 = vpack.c.b16 %v1216, %v1214
      %v1247 = vpack.c.b16 %v1219, %v1217
      %v1248 = vpack.c.b16 %v1220, %v1218
      %v1249 = vpack.c.b16 %v1223, %v1221
      %v1250 = vpack.c.b16 %v1224, %v1222
      %v1251 = vpack.c.b16 %v1227, %v1225
      %v1252 = vpack.c.b16 %v1228, %v1226
      %v1253 = vpack.c.b16 %v1231, %v1229
      %v1254 = vpack.c.b16 %v1232, %v1230
      %v1255 = vpack.c.b16 %v1235, %v1233
      %v1256 = vpack.c.b16 %v1236, %v1234
      %v1257 = vpack.c.b16 %v1239, %v1237
      %v1258 = vpack.c.b16 %v1240, %v1238
      %v1278 = vsel %vm566, %v1180, 0
      %v1281 = vsel %vm566, %v1184, 0
      %1283 = vmatprep.subr.bf16.mxu0 %v1242
      %1284 = vmatpush1.bf16.msra.mxu0 %v1241
      %1285 = vmatprep.subr.bf16.mxu0 %v1244
      %1286 = vmatpush1.bf16.msra.mxu0 %v1243
      %1287 = vmatprep.subr.bf16.mxu0 %v1246
      %1288 = vmatpush1.bf16.msra.mxu0 %v1245
      %1289 = vmatprep.subr.bf16.mxu0 %v1248
      %1290 = vmatpush1.bf16.msra.mxu0 %v1247
      %1291 = vmatprep.subr.bf16.mxu0 %v1250
      %1292 = vmatpush1.bf16.msra.mxu0 %v1249
      %1293 = vmatprep.subr.bf16.mxu0 %v1252
      %1294 = vmatpush1.bf16.msra.mxu0 %v1251
      %1295 = vmatprep.subr.bf16.mxu0 %v1254
      %1296 = vmatpush1.bf16.msra.mxu0 %v1253
      %1297 = vmatprep.subr.bf16.mxu0 %v1256
      %1298 = vmatpush1.bf16.msra.mxu0 %v1255
      %1299 = vmatprep.subr.bf16.mxu0 %v1258
      %1300 = vmatpush1.bf16.msra.mxu0 %v1257
      %1301 = vmatprep.subr.bf16.mxu0 0
      %1302 = vmatpush1.bf16.msra.mxu0 0
      %1303 = vmatprep.subr.bf16.mxu0 0
      %1304 = vmatpush1.bf16.msra.mxu0 0
      %1305 = vmatprep.subr.bf16.mxu0 0
      %1306 = vmatpush1.bf16.msra.mxu0 0
      %1307 = vmatprep.subr.bf16.mxu0 0
      %1308 = vmatpush1.bf16.msra.mxu0 0
      %1309 = vmatprep.subr.bf16.mxu0 0
      %1310 = vmatpush1.bf16.msra.mxu0 0
      %1311 = vmatprep.subr.bf16.mxu0 0
      %1312 = vmatpush1.bf16.msra.mxu0 0
      %1313 = vmatprep.subr.bf16.mxu0 0
      %1314 = vmatpush1.bf16.msra.mxu0 0
      %1315 = vmatprep.mubr.bf16.mxu0 %v1278
      %1316 = vmatmul.mubr.bf16.gmra.mrb[0].mxu0 %v1177
      %v1317 = vpop.f32.mrb[0].mxu0
      %v1318 = vadd.f32 0.0, %v1317
      %v1319 = vpop.f32.mrb[0].mxu0
      %v1320 = vadd.f32 0.0, %v1319
      %v1321 = vpop.f32.mrb[0].mxu0
      %v1322 = vadd.f32 0.0, %v1321
      %v1323 = vpop.f32.mrb[0].mxu0
      %v1324 = vadd.f32 0.0, %v1323
      %1325 = vmatprep.mubr.bf16.mxu0 %v1281
      %1326 = vmatmul.mubr.bf16.gmra.mrb[0].mxu0 %v1182
      %v1327 = vpop.f32.mrb[0].mxu0
      %v1328 = vadd.f32 0.0, %v1327
      %v1329 = vpop.f32.mrb[0].mxu0
      %v1330 = vadd.f32 0.0, %v1329
      %v1331 = vpop.f32.mrb[0].mxu0
      %v1332 = vadd.f32 0.0, %v1331
      %v1333 = vpop.f32.mrb[0].mxu0
      %v1334 = vadd.f32 0.0, %v1333
      %1335 = vdwg.mxu0
      %v1336 = vadd.f32 %v1143, %v1318
      %v1337 = vadd.f32 %v1144, %v1320
      %v1338 = vadd.f32 %v1145, %v1322
      %v1339 = vadd.f32 %v1146, %v1324
      %v1340 = vadd.f32 %v1147, %v1328
      %v1341 = vadd.f32 %v1148, %v1330
      %v1342 = vadd.f32 %v1149, %v1332
      %v1343 = vadd.f32 %v1150, %v1334
      %v1344 = vld [vmem:[%s1 + $0x2d0] sm:$0xff]
      %v1345 = vld [vmem:[%s1 + $0x2d8] sm:$0xff]
      %v1346 = vld [vmem:[%s1 + $0x2e0] sm:$0xff]
      %v1347 = vld [vmem:[%s1 + $0x2e8] sm:$0xff]
      %v1348 = vld [vmem:[%s1 + $0x2f0] sm:$0xff]
      %v1349 = vld [vmem:[%s1 + $0x2f8] sm:$0xff]
      %v1350 = vld [vmem:[%s1 + $0x300] sm:$0xff]
      %v1351 = vld [vmem:[%s1 + $0x308] sm:$0xff]
      %v1352 = vld [vmem:[%s1 + $0x310] sm:$0xff]
      %v1353 = vld [vmem:[%s1 + $0x318] sm:$0xff]
      %v1354 = vld [vmem:[%s1 + $0x320] sm:$0xff]
      %v1355 = vld [vmem:[%s1 + $0x328] sm:$0xff]
      %v1356 = vld [vmem:[%s1 + $0x330] sm:$0xff]
      %v1357 = vld [vmem:[%s1 + $0x338] sm:$0xff]
      %v1358 = vld [vmem:[%s1 + $0x340] sm:$0xff]
      %v1359 = vld [vmem:[%s1 + $0x348] sm:$0xff]
      %v1360 = vld [vmem:[%s1 + $0x350] sm:$0xff]
      %v1361 = vld [vmem:[%s1 + $0x358] sm:$0xff]
      %vm1362 = vsmask.f32 5376
      %v1363 = vrot.slane %v445, 2
      %v1364 = vrot.slane %v447, 3
      %v1365 = vor.u32 %v1363, %v1364
      %v1366 = vrot.slane %v468, 2
      %v1367 = vrot.slane %v452, 3
      %v1368 = vor.u32 %v1366, %v1367
      %v1369 = vsel %vm1362, %v1365, %v1368
      %v1370 = vrot.slane %v457, 2
      %v1371 = vrot.slane %v459, 3
      %v1372 = vor.u32 %v1370, %v1371
      %v1373 = vrot.slane %v471, 2
      %v1374 = vrot.slane %v464, 3
      %v1375 = vor.u32 %v1373, %v1374
      %v1376 = vsel %vm1362, %v1372, %v1375
      %v1378 = vshrl.u32 %v1172, 16
      %v1380 = vrot.slane %v1378, 2
      %v1381 = vshll.u32 %v1172, 16
      %v1383 = vrot.slane %v1381, 3
      %v1384 = vor.u32 %v1380, %v1383
      %v1385 = vsel %vm1362, %v1368, %v1384
      %v1387 = vshrl.u32 %v1173, 16
      %v1389 = vrot.slane %v1387, 2
      %v1390 = vshll.u32 %v1173, 16
      %v1392 = vrot.slane %v1390, 3
      %v1393 = vor.u32 %v1389, %v1392
      %v1394 = vsel %vm1362, %v1375, %v1393
      %v1415 = vunpack.c.l.b16 %v1344
      %v1416 = vunpack.c.h.b16 %v1344
      %v1417 = vunpack.c.l.b16 %v1345
      %v1418 = vunpack.c.h.b16 %v1345
      %v1419 = vunpack.c.l.b16 %v1346
      %v1420 = vunpack.c.h.b16 %v1346
      %v1421 = vunpack.c.l.b16 %v1347
      %v1422 = vunpack.c.h.b16 %v1347
      %v1423 = vunpack.c.l.b16 %v1348
      %v1424 = vunpack.c.h.b16 %v1348
      %v1425 = vunpack.c.l.b16 %v1349
      %v1426 = vunpack.c.h.b16 %v1349
      %v1427 = vunpack.c.l.b16 %v1350
      %v1428 = vunpack.c.h.b16 %v1350
      %v1429 = vunpack.c.l.b16 %v1351
      %v1430 = vunpack.c.h.b16 %v1351
      %v1431 = vunpack.c.l.b16 %v1352
      %v1432 = vunpack.c.h.b16 %v1352
      %v1433 = vunpack.c.l.b16 %v1353
      %v1434 = vunpack.c.h.b16 %v1353
      %v1435 = vunpack.c.l.b16 %v1354
      %v1436 = vunpack.c.h.b16 %v1354
      %v1437 = vunpack.c.l.b16 %v1355
      %v1438 = vunpack.c.h.b16 %v1355
      %v1439 = vunpack.c.l.b16 %v1356
      %v1440 = vunpack.c.h.b16 %v1356
      %v1441 = vunpack.c.l.b16 %v1357
      %v1442 = vunpack.c.h.b16 %v1357
      %v1443 = vunpack.c.l.b16 %v1358
      %v1444 = vunpack.c.h.b16 %v1358
      %v1445 = vunpack.c.l.b16 %v1359
      %v1446 = vunpack.c.h.b16 %v1359
      %v1447 = vunpack.c.l.b16 %v1360
      %v1448 = vunpack.c.h.b16 %v1360
      %v1449 = vunpack.c.l.b16 %v1361
      %v1450 = vunpack.c.h.b16 %v1361
      %v1451 = vpack.c.b16 %v1417, %v1415
      %v1452 = vpack.c.b16 %v1418, %v1416
      %v1453 = vpack.c.b16 %v1421, %v1419
      %v1454 = vpack.c.b16 %v1422, %v1420
      %v1455 = vpack.c.b16 %v1425, %v1423
      %v1456 = vpack.c.b16 %v1426, %v1424
      %v1457 = vpack.c.b16 %v1429, %v1427
      %v1458 = vpack.c.b16 %v1430, %v1428
      %v1459 = vpack.c.b16 %v1433, %v1431
      %v1460 = vpack.c.b16 %v1434, %v1432
      %v1461 = vpack.c.b16 %v1437, %v1435
      %v1462 = vpack.c.b16 %v1438, %v1436
      %v1463 = vpack.c.b16 %v1441, %v1439
      %v1464 = vpack.c.b16 %v1442, %v1440
      %v1465 = vpack.c.b16 %v1445, %v1443
      %v1466 = vpack.c.b16 %v1446, %v1444
      %v1467 = vpack.c.b16 %v1449, %v1447
      %v1468 = vpack.c.b16 %v1450, %v1448
      %v1488 = vsel %vm566, %v1376, 0
      %v1491 = vsel %vm566, %v1394, 0
      %1493 = vmatprep.subr.bf16.mxu0 %v1452
      %1494 = vmatpush1.bf16.msra.mxu0 %v1451
      %1495 = vmatprep.subr.bf16.mxu0 %v1454
      %1496 = vmatpush1.bf16.msra.mxu0 %v1453
      %1497 = vmatprep.subr.bf16.mxu0 %v1456
      %1498 = vmatpush1.bf16.msra.mxu0 %v1455
      %1499 = vmatprep.subr.bf16.mxu0 %v1458
      %1500 = vmatpush1.bf16.msra.mxu0 %v1457
      %1501 = vmatprep.subr.bf16.mxu0 %v1460
      %1502 = vmatpush1.bf16.msra.mxu0 %v1459
      %1503 = vmatprep.subr.bf16.mxu0 %v1462
      %1504 = vmatpush1.bf16.msra.mxu0 %v1461
      %1505 = vmatprep.subr.bf16.mxu0 %v1464
      %1506 = vmatpush1.bf16.msra.mxu0 %v1463
      %1507 = vmatprep.subr.bf16.mxu0 %v1466
      %1508 = vmatpush1.bf16.msra.mxu0 %v1465
      %1509 = vmatprep.subr.bf16.mxu0 %v1468
      %1510 = vmatpush1.bf16.msra.mxu0 %v1467
      %1511 = vmatprep.subr.bf16.mxu0 0
      %1512 = vmatpush1.bf16.msra.mxu0 0
      %1513 = vmatprep.subr.bf16.mxu0 0
      %1514 = vmatpush1.bf16.msra.mxu0 0
      %1515 = vmatprep.subr.bf16.mxu0 0
      %1516 = vmatpush1.bf16.msra.mxu0 0
      %1517 = vmatprep.subr.bf16.mxu0 0
      %1518 = vmatpush1.bf16.msra.mxu0 0
      %1519 = vmatprep.subr.bf16.mxu0 0
      %1520 = vmatpush1.bf16.msra.mxu0 0
      %1521 = vmatprep.subr.bf16.mxu0 0
      %1522 = vmatpush1.bf16.msra.mxu0 0
      %1523 = vmatprep.subr.bf16.mxu0 0
      %1524 = vmatpush1.bf16.msra.mxu0 0
      %1525 = vmatprep.mubr.bf16.mxu0 %v1488
      %1526 = vmatmul.mubr.bf16.gmra.mrb[0].mxu0 %v1369
      %v1527 = vpop.f32.mrb[0].mxu0
      %v1528 = vadd.f32 0.0, %v1527
      %v1529 = vpop.f32.mrb[0].mxu0
      %v1530 = vadd.f32 0.0, %v1529
      %v1531 = vpop.f32.mrb[0].mxu0
      %v1532 = vadd.f32 0.0, %v1531
      %v1533 = vpop.f32.mrb[0].mxu0
      %v1534 = vadd.f32 0.0, %v1533
      %1535 = vmatprep.mubr.bf16.mxu0 %v1491
      %1536 = vmatmul.mubr.bf16.gmra.mrb[0].mxu0 %v1385
      %v1537 = vpop.f32.mrb[0].mxu0
      %v1538 = vadd.f32 0.0, %v1537
      %v1539 = vpop.f32.mrb[0].mxu0
      %v1540 = vadd.f32 0.0, %v1539
      %v1541 = vpop.f32.mrb[0].mxu0
      %v1542 = vadd.f32 0.0, %v1541
      %v1543 = vpop.f32.mrb[0].mxu0
      %v1544 = vadd.f32 0.0, %v1543
      %1545 = vdwg.mxu0
      %v1546 = vadd.f32 %v1336, %v1528
      %v1547 = vadd.f32 %v1337, %v1530
      %v1548 = vadd.f32 %v1338, %v1532
      %v1549 = vadd.f32 %v1339, %v1534
      %v1550 = vadd.f32 %v1340, %v1538
      %v1551 = vadd.f32 %v1341, %v1540
      %v1552 = vadd.f32 %v1342, %v1542
      %v1553 = vadd.f32 %v1343, %v1544
      %v1554 = vld [vmem:[%s1 + $0x360] sm:$0xff]
      %v1555 = vld [vmem:[%s1 + $0x368] sm:$0xff]
      %v1556 = vld [vmem:[%s1 + $0x370] sm:$0xff]
      %v1557 = vld [vmem:[%s1 + $0x378] sm:$0xff]
      %v1558 = vld [vmem:[%s1 + $0x380] sm:$0xff]
      %v1559 = vld [vmem:[%s1 + $0x388] sm:$0xff]
      %v1560 = vld [vmem:[%s1 + $0x390] sm:$0xff]
      %v1561 = vld [vmem:[%s1 + $0x398] sm:$0xff]
      %v1562 = vld [vmem:[%s1 + $0x3a0] sm:$0xff]
      %v1563 = vld [vmem:[%s1 + $0x3a8] sm:$0xff]
      %v1564 = vld [vmem:[%s1 + $0x3b0] sm:$0xff]
      %v1565 = vld [vmem:[%s1 + $0x3b8] sm:$0xff]
      %v1566 = vld [vmem:[%s1 + $0x3c0] sm:$0xff]
      %v1567 = vld [vmem:[%s1 + $0x3c8] sm:$0xff]
      %v1568 = vld [vmem:[%s1 + $0x3d0] sm:$0xff]
      %v1569 = vld [vmem:[%s1 + $0x3d8] sm:$0xff]
      %v1570 = vld [vmem:[%s1 + $0x3e0] sm:$0xff]
      %v1571 = vld [vmem:[%s1 + $0x3e8] sm:$0xff]
      %vm1572 = vcmask 1044480
      %v1573 = vrot.slane %v439, 3
      %v1574 = vrot.slane %v441, 3
      %v1575 = vsel %vm1572, %v1573, %v1574
      %v1576 = vrot.slane %v440, 3
      %v1577 = vrot.slane %v442, 3
      %v1578 = vsel %vm1572, %v1576, %v1577
      %v1579 = vrot.slane %v1172, 3
      %v1580 = vsel %vm1572, %v1574, %v1579
      %v1581 = vrot.slane %v1173, 3
      %v1582 = vsel %vm1572, %v1577, %v1581
      %v1603 = vunpack.c.l.b16 %v1554
      %v1604 = vunpack.c.h.b16 %v1554
      %v1605 = vunpack.c.l.b16 %v1555
      %v1606 = vunpack.c.h.b16 %v1555
      %v1607 = vunpack.c.l.b16 %v1556
      %v1608 = vunpack.c.h.b16 %v1556
      %v1609 = vunpack.c.l.b16 %v1557
      %v1610 = vunpack.c.h.b16 %v1557
      %v1611 = vunpack.c.l.b16 %v1558
      %v1612 = vunpack.c.h.b16 %v1558
      %v1613 = vunpack.c.l.b16 %v1559
      %v1614 = vunpack.c.h.b16 %v1559
      %v1615 = vunpack.c.l.b16 %v1560
      %v1616 = vunpack.c.h.b16 %v1560
      %v1617 = vunpack.c.l.b16 %v1561
      %v1618 = vunpack.c.h.b16 %v1561
      %v1619 = vunpack.c.l.b16 %v1562
      %v1620 = vunpack.c.h.b16 %v1562
      %v1621 = vunpack.c.l.b16 %v1563
      %v1622 = vunpack.c.h.b16 %v1563
      %v1623 = vunpack.c.l.b16 %v1564
      %v1624 = vunpack.c.h.b16 %v1564
      %v1625 = vunpack.c.l.b16 %v1565
      %v1626 = vunpack.c.h.b16 %v1565
      %v1627 = vunpack.c.l.b16 %v1566
      %v1628 = vunpack.c.h.b16 %v1566
      %v1629 = vunpack.c.l.b16 %v1567
      %v1630 = vunpack.c.h.b16 %v1567
      %v1631 = vunpack.c.l.b16 %v1568
      %v1632 = vunpack.c.h.b16 %v1568
      %v1633 = vunpack.c.l.b16 %v1569
      %v1634 = vunpack.c.h.b16 %v1569
      %v1635 = vunpack.c.l.b16 %v1570
      %v1636 = vunpack.c.h.b16 %v1570
      %v1637 = vunpack.c.l.b16 %v1571
      %v1638 = vunpack.c.h.b16 %v1571
      %v1639 = vpack.c.b16 %v1605, %v1603
      %v1640 = vpack.c.b16 %v1606, %v1604
      %v1641 = vpack.c.b16 %v1609, %v1607
      %v1642 = vpack.c.b16 %v1610, %v1608
      %v1643 = vpack.c.b16 %v1613, %v1611
      %v1644 = vpack.c.b16 %v1614, %v1612
      %v1645 = vpack.c.b16 %v1617, %v1615
      %v1646 = vpack.c.b16 %v1618, %v1616
      %v1647 = vpack.c.b16 %v1621, %v1619
      %v1648 = vpack.c.b16 %v1622, %v1620
      %v1649 = vpack.c.b16 %v1625, %v1623
      %v1650 = vpack.c.b16 %v1626, %v1624
      %v1651 = vpack.c.b16 %v1629, %v1627
      %v1652 = vpack.c.b16 %v1630, %v1628
      %v1653 = vpack.c.b16 %v1633, %v1631
      %v1654 = vpack.c.b16 %v1634, %v1632
      %v1655 = vpack.c.b16 %v1637, %v1635
      %v1656 = vpack.c.b16 %v1638, %v1636
      %v1676 = vsel %vm566, %v1578, 0
      %v1679 = vsel %vm566, %v1582, 0
      %1681 = vmatprep.subr.bf16.mxu0 %v1640
      %1682 = vmatpush1.bf16.msra.mxu0 %v1639
      %1683 = vmatprep.subr.bf16.mxu0 %v1642
      %1684 = vmatpush1.bf16.msra.mxu0 %v1641
      %1685 = vmatprep.subr.bf16.mxu0 %v1644
      %1686 = vmatpush1.bf16.msra.mxu0 %v1643
      %1687 = vmatprep.subr.bf16.mxu0 %v1646
      %1688 = vmatpush1.bf16.msra.mxu0 %v1645
      %1689 = vmatprep.subr.bf16.mxu0 %v1648
      %1690 = vmatpush1.bf16.msra.mxu0 %v1647
      %1691 = vmatprep.subr.bf16.mxu0 %v1650
      %1692 = vmatpush1.bf16.msra.mxu0 %v1649
      %1693 = vmatprep.subr.bf16.mxu0 %v1652
      %1694 = vmatpush1.bf16.msra.mxu0 %v1651
      %1695 = vmatprep.subr.bf16.mxu0 %v1654
      %1696 = vmatpush1.bf16.msra.mxu0 %v1653
      %1697 = vmatprep.subr.bf16.mxu0 %v1656
      %1698 = vmatpush1.bf16.msra.mxu0 %v1655
      %1699 = vmatprep.subr.bf16.mxu0 0
      %1700 = vmatpush1.bf16.msra.mxu0 0
      %1701 = vmatprep.subr.bf16.mxu0 0
      %1702 = vmatpush1.bf16.msra.mxu0 0
      %1703 = vmatprep.subr.bf16.mxu0 0
      %1704 = vmatpush1.bf16.msra.mxu0 0
      %1705 = vmatprep.subr.bf16.mxu0 0
      %1706 = vmatpush1.bf16.msra.mxu0 0
      %1707 = vmatprep.subr.bf16.mxu0 0
      %1708 = vmatpush1.bf16.msra.mxu0 0
      %1709 = vmatprep.subr.bf16.mxu0 0
      %1710 = vmatpush1.bf16.msra.mxu0 0
      %1711 = vmatprep.subr.bf16.mxu0 0
      %1712 = vmatpush1.bf16.msra.mxu0 0
      %1713 = vmatprep.mubr.bf16.mxu0 %v1676
      %1714 = vmatmul.mubr.bf16.gmra.mrb[0].mxu0 %v1575
      %v1715 = vpop.f32.mrb[0].mxu0
      %v1716 = vadd.f32 0.0, %v1715
      %v1717 = vpop.f32.mrb[0].mxu0
      %v1718 = vadd.f32 0.0, %v1717
      %v1719 = vpop.f32.mrb[0].mxu0
      %v1720 = vadd.f32 0.0, %v1719
      %v1721 = vpop.f32.mrb[0].mxu0
      %v1722 = vadd.f32 0.0, %v1721
      %1723 = vmatprep.mubr.bf16.mxu0 %v1679
      %1724 = vmatmul.mubr.bf16.gmra.mrb[0].mxu0 %v1580
      %v1725 = vpop.f32.mrb[0].mxu0
      %v1726 = vadd.f32 0.0, %v1725
      %v1727 = vpop.f32.mrb[0].mxu0
      %v1728 = vadd.f32 0.0, %v1727
      %v1729 = vpop.f32.mrb[0].mxu0
      %v1730 = vadd.f32 0.0, %v1729
      %v1731 = vpop.f32.mrb[0].mxu0
      %v1732 = vadd.f32 0.0, %v1731
      %1733 = vdwg.mxu0
      %v1734 = vadd.f32 %v1546, %v1716
      %v1735 = vadd.f32 %v1547, %v1718
      %v1736 = vadd.f32 %v1548, %v1720
      %v1737 = vadd.f32 %v1549, %v1722
      %v1738 = vadd.f32 %v1550, %v1726
      %v1739 = vadd.f32 %v1551, %v1728
      %v1740 = vadd.f32 %v1552, %v1730
      %v1741 = vadd.f32 %v1553, %v1732
      %v1742 = vld [vmem:[%s1 + $0x3f0] sm:$0xff]
      %v1743 = vld [vmem:[%s1 + $0x3f8] sm:$0xff]
      %v1744 = vld [vmem:[%s1 + $0x400] sm:$0xff]
      %v1745 = vld [vmem:[%s1 + $0x408] sm:$0xff]
      %v1746 = vld [vmem:[%s1 + $0x410] sm:$0xff]
      %v1747 = vld [vmem:[%s1 + $0x418] sm:$0xff]
      %v1748 = vld [vmem:[%s1 + $0x420] sm:$0xff]
      %v1749 = vld [vmem:[%s1 + $0x428] sm:$0xff]
      %v1750 = vld [vmem:[%s1 + $0x430] sm:$0xff]
      %v1751 = vld [vmem:[%s1 + $0x438] sm:$0xff]
      %v1752 = vld [vmem:[%s1 + $0x440] sm:$0xff]
      %v1753 = vld [vmem:[%s1 + $0x448] sm:$0xff]
      %v1754 = vld [vmem:[%s1 + $0x450] sm:$0xff]
      %v1755 = vld [vmem:[%s1 + $0x458] sm:$0xff]
      %v1756 = vld [vmem:[%s1 + $0x460] sm:$0xff]
      %v1757 = vld [vmem:[%s1 + $0x468] sm:$0xff]
      %v1758 = vld [vmem:[%s1 + $0x470] sm:$0xff]
      %v1759 = vld [vmem:[%s1 + $0x478] sm:$0xff]
      %vm1760 = vsmask.f32 4352
      %v1761 = vrot.slane %v445, 3
      %v1762 = vrot.slane %v447, 4
      %v1763 = vor.u32 %v1761, %v1762
      %v1764 = vrot.slane %v468, 3
      %v1765 = vrot.slane %v452, 4
      %v1766 = vor.u32 %v1764, %v1765
      %v1767 = vsel %vm1760, %v1763, %v1766
      %v1768 = vrot.slane %v457, 3
      %v1769 = vrot.slane %v459, 4
      %v1770 = vor.u32 %v1768, %v1769
      %v1771 = vrot.slane %v471, 3
      %v1772 = vrot.slane %v464, 4
      %v1773 = vor.u32 %v1771, %v1772
      %v1774 = vsel %vm1760, %v1770, %v1773
      %v1775 = vrot.slane %v1378, 3
      %v1776 = vrot.slane %v1381, 4
      %v1777 = vor.u32 %v1775, %v1776
      %v1778 = vsel %vm1760, %v1766, %v1777
      %v1779 = vrot.slane %v1387, 3
      %v1780 = vrot.slane %v1390, 4
      %v1781 = vor.u32 %v1779, %v1780
      %v1782 = vsel %vm1760, %v1773, %v1781
      %v1803 = vunpack.c.l.b16 %v1742
      %v1804 = vunpack.c.h.b16 %v1742
      %v1805 = vunpack.c.l.b16 %v1743
      %v1806 = vunpack.c.h.b16 %v1743
      %v1807 = vunpack.c.l.b16 %v1744
      %v1808 = vunpack.c.h.b16 %v1744
      %v1809 = vunpack.c.l.b16 %v1745
      %v1810 = vunpack.c.h.b16 %v1745
      %v1811 = vunpack.c.l.b16 %v1746
      %v1812 = vunpack.c.h.b16 %v1746
      %v1813 = vunpack.c.l.b16 %v1747
      %v1814 = vunpack.c.h.b16 %v1747
      %v1815 = vunpack.c.l.b16 %v1748
      %v1816 = vunpack.c.h.b16 %v1748
      %v1817 = vunpack.c.l.b16 %v1749
      %v1818 = vunpack.c.h.b16 %v1749
      %v1819 = vunpack.c.l.b16 %v1750
      %v1820 = vunpack.c.h.b16 %v1750
      %v1821 = vunpack.c.l.b16 %v1751
      %v1822 = vunpack.c.h.b16 %v1751
      %v1823 = vunpack.c.l.b16 %v1752
      %v1824 = vunpack.c.h.b16 %v1752
      %v1825 = vunpack.c.l.b16 %v1753
      %v1826 = vunpack.c.h.b16 %v1753
      %v1827 = vunpack.c.l.b16 %v1754
      %v1828 = vunpack.c.h.b16 %v1754
      %v1829 = vunpack.c.l.b16 %v1755
      %v1830 = vunpack.c.h.b16 %v1755
      %v1831 = vunpack.c.l.b16 %v1756
      %v1832 = vunpack.c.h.b16 %v1756
      %v1833 = vunpack.c.l.b16 %v1757
      %v1834 = vunpack.c.h.b16 %v1757
      %v1835 = vunpack.c.l.b16 %v1758
      %v1836 = vunpack.c.h.b16 %v1758
      %v1837 = vunpack.c.l.b16 %v1759
      %v1838 = vunpack.c.h.b16 %v1759
      %v1839 = vpack.c.b16 %v1805, %v1803
      %v1840 = vpack.c.b16 %v1806, %v1804
      %v1841 = vpack.c.b16 %v1809, %v1807
      %v1842 = vpack.c.b16 %v1810, %v1808
      %v1843 = vpack.c.b16 %v1813, %v1811
      %v1844 = vpack.c.b16 %v1814, %v1812
      %v1845 = vpack.c.b16 %v1817, %v1815
      %v1846 = vpack.c.b16 %v1818, %v1816
      %v1847 = vpack.c.b16 %v1821, %v1819
      %v1848 = vpack.c.b16 %v1822, %v1820
      %v1849 = vpack.c.b16 %v1825, %v1823
      %v1850 = vpack.c.b16 %v1826, %v1824
      %v1851 = vpack.c.b16 %v1829, %v1827
      %v1852 = vpack.c.b16 %v1830, %v1828
      %v1853 = vpack.c.b16 %v1833, %v1831
      %v1854 = vpack.c.b16 %v1834, %v1832
      %v1855 = vpack.c.b16 %v1837, %v1835
      %v1856 = vpack.c.b16 %v1838, %v1836
      %v1876 = vsel %vm566, %v1774, 0
      %v1879 = vsel %vm566, %v1782, 0
      %1881 = vmatprep.subr.bf16.mxu0 %v1840
      %1882 = vmatpush1.bf16.msra.mxu0 %v1839
      %1883 = vmatprep.subr.bf16.mxu0 %v1842
      %1884 = vmatpush1.bf16.msra.mxu0 %v1841
      %1885 = vmatprep.subr.bf16.mxu0 %v1844
      %1886 = vmatpush1.bf16.msra.mxu0 %v1843
      %1887 = vmatprep.subr.bf16.mxu0 %v1846
      %1888 = vmatpush1.bf16.msra.mxu0 %v1845
      %1889 = vmatprep.subr.bf16.mxu0 %v1848
      %1890 = vmatpush1.bf16.msra.mxu0 %v1847
      %1891 = vmatprep.subr.bf16.mxu0 %v1850
      %1892 = vmatpush1.bf16.msra.mxu0 %v1849
      %1893 = vmatprep.subr.bf16.mxu0 %v1852
      %1894 = vmatpush1.bf16.msra.mxu0 %v1851
      %1895 = vmatprep.subr.bf16.mxu0 %v1854
      %1896 = vmatpush1.bf16.msra.mxu0 %v1853
      %1897 = vmatprep.subr.bf16.mxu0 %v1856
      %1898 = vmatpush1.bf16.msra.mxu0 %v1855
      %1899 = vmatprep.subr.bf16.mxu0 0
      %1900 = vmatpush1.bf16.msra.mxu0 0
      %1901 = vmatprep.subr.bf16.mxu0 0
      %1902 = vmatpush1.bf16.msra.mxu0 0
      %1903 = vmatprep.subr.bf16.mxu0 0
      %1904 = vmatpush1.bf16.msra.mxu0 0
      %1905 = vmatprep.subr.bf16.mxu0 0
      %1906 = vmatpush1.bf16.msra.mxu0 0
      %1907 = vmatprep.subr.bf16.mxu0 0
      %1908 = vmatpush1.bf16.msra.mxu0 0
      %1909 = vmatprep.subr.bf16.mxu0 0
      %1910 = vmatpush1.bf16.msra.mxu0 0
      %1911 = vmatprep.subr.bf16.mxu0 0
      %1912 = vmatpush1.bf16.msra.mxu0 0
      %1913 = vmatprep.mubr.bf16.mxu0 %v1876
      %1914 = vmatmul.mubr.bf16.gmra.mrb[0].mxu0 %v1767
      %v1915 = vpop.f32.mrb[0].mxu0
      %v1916 = vadd.f32 0.0, %v1915
      %v1917 = vpop.f32.mrb[0].mxu0
      %v1918 = vadd.f32 0.0, %v1917
      %v1919 = vpop.f32.mrb[0].mxu0
      %v1920 = vadd.f32 0.0, %v1919
      %v1921 = vpop.f32.mrb[0].mxu0
      %v1922 = vadd.f32 0.0, %v1921
      %1923 = vmatprep.mubr.bf16.mxu0 %v1879
      %1924 = vmatmul.mubr.bf16.gmra.mrb[0].mxu0 %v1778
      %v1925 = vpop.f32.mrb[0].mxu0
      %v1926 = vadd.f32 0.0, %v1925
      %v1927 = vpop.f32.mrb[0].mxu0
      %v1928 = vadd.f32 0.0, %v1927
      %v1929 = vpop.f32.mrb[0].mxu0
      %v1930 = vadd.f32 0.0, %v1929
      %v1931 = vpop.f32.mrb[0].mxu0
      %v1932 = vadd.f32 0.0, %v1931
      %1933 = vdwg.mxu0
      %v1934 = vadd.f32 %v1734, %v1916
      %v1935 = vadd.f32 %v1735, %v1918
      %v1936 = vadd.f32 %v1736, %v1920
      %v1937 = vadd.f32 %v1737, %v1922
      %v1938 = vadd.f32 %v1738, %v1926
      %v1939 = vadd.f32 %v1739, %v1928
      %v1940 = vadd.f32 %v1740, %v1930
      %v1941 = vadd.f32 %v1741, %v1932
      %v1942 = vld [vmem:[%s2] sm:$0x3]
      %v1944 = vlaneseq
      %v1945 = vshrl.u32 %v1944, 7
      %v1946 = vsub.s32 0, %v1945
      %v1947 = vrot.slane %v1942, %v1946
      %v1948 = vlaneseq
      %v1949 = vshrl.u32 %v1948, 7
      %v1950 = vsub.s32 1, %v1949
      %v1951 = vrot.slane %v1942, %v1950
      %v1954 = vadd.f32 %v1934, %v1947
      %v1955 = vadd.f32 %v1935, %v1951
      %v1956 = vadd.f32 %v1936, %v1947
      %v1957 = vadd.f32 %v1937, %v1951
      %v1958 = vadd.f32 %v1938, %v1947
      %v1959 = vadd.f32 %v1939, %v1951
      %v1960 = vadd.f32 %v1940, %v1947
      %v1961 = vadd.f32 %v1941, %v1951
      %v1962 = vmax.f32 %v1954, 0.0
      %v1963 = vmax.f32 %v1955, 0.0
      %v1964 = vmax.f32 %v1956, 0.0
      %v1965 = vmax.f32 %v1957, 0.0
      %v1966 = vmax.f32 %v1958, 0.0
      %v1967 = vmax.f32 %v1959, 0.0
      %v1968 = vmax.f32 %v1960, 0.0
      %v1969 = vmax.f32 %v1961, 0.0
      %v1970 = vpack.c.bf16 %v1964, %v1962
      %v1971 = vpack.c.bf16 %v1965, %v1963
      %v1972 = vpack.c.bf16 %v1968, %v1966
      %v1973 = vpack.c.bf16 %v1969, %v1967
      %v1974 = vld [vmem:[%s3] sm:$0xff]
      %v1975 = vld [vmem:[%s3 + $0x8] sm:$0xff]
      %v1976 = vld [vmem:[%s3 + $0x10] sm:$0xff]
      %v1977 = vld [vmem:[%s3 + $0x18] sm:$0xff]
      %v1978 = vld [vmem:[%s3 + $0x20] sm:$0xff]
      %v1979 = vld [vmem:[%s3 + $0x28] sm:$0xff]
      %v1980 = vld [vmem:[%s3 + $0x30] sm:$0xff]
      %v1981 = vld [vmem:[%s3 + $0x38] sm:$0xff]
      %v1982 = vld [vmem:[%s3 + $0x40] sm:$0xff]
      %v1983 = vld [vmem:[%s3 + $0x48] sm:$0xff]
      %v1984 = vld [vmem:[%s3 + $0x50] sm:$0xff]
      %v1985 = vld [vmem:[%s3 + $0x58] sm:$0xff]
      %v1986 = vld [vmem:[%s3 + $0x60] sm:$0xff]
      %v1987 = vld [vmem:[%s3 + $0x68] sm:$0xff]
      %v1988 = vld [vmem:[%s3 + $0x70] sm:$0xff]
      %v1989 = vld [vmem:[%s3 + $0x78] sm:$0xff]
      %v1990 = vld [vmem:[%s3 + $0x80] sm:$0xff]
      %v1991 = vld [vmem:[%s3 + $0x88] sm:$0xff]
      %v1992 = vld [vmem:[%s3 + $0x90] sm:$0xff]
      %v1993 = vld [vmem:[%s3 + $0x98] sm:$0xff]
      %v1994 = vld [vmem:[%s3 + $0xa0] sm:$0xff]
      %v1995 = vld [vmem:[%s3 + $0xa8] sm:$0xff]
      %v1996 = vld [vmem:[%s3 + $0xb0] sm:$0xff]
      %v1997 = vld [vmem:[%s3 + $0xb8] sm:$0xff]
      %v1998 = vld [vmem:[%s3 + $0xc0] sm:$0xff]
      %v1999 = vld [vmem:[%s3 + $0xc8] sm:$0xff]
      %v2000 = vld [vmem:[%s3 + $0xd0] sm:$0xff]
      %v2001 = vld [vmem:[%s3 + $0xd8] sm:$0xff]
      %v2002 = vld [vmem:[%s3 + $0xe0] sm:$0xff]
      %v2003 = vld [vmem:[%s3 + $0xe8] sm:$0xff]
      %v2004 = vld [vmem:[%s3 + $0xf0] sm:$0xff]
      %v2005 = vld [vmem:[%s3 + $0xf8] sm:$0xff]
      %v2006 = vld [vmem:[%s3 + $0x100] sm:$0xff]
      %v2007 = vld [vmem:[%s3 + $0x108] sm:$0xff]
      %v2008 = vld [vmem:[%s3 + $0x110] sm:$0xff]
      %v2009 = vld [vmem:[%s3 + $0x118] sm:$0xff]
      %v2010 = vld [vmem:[%s3 + $0x120] sm:$0xff]
      %v2011 = vld [vmem:[%s3 + $0x128] sm:$0xff]
      %v2012 = vld [vmem:[%s3 + $0x130] sm:$0xff]
      %v2013 = vld [vmem:[%s3 + $0x138] sm:$0xff]
      %v2014 = vld [vmem:[%s3 + $0x140] sm:$0xff]
      %v2015 = vld [vmem:[%s3 + $0x148] sm:$0xff]
      %v2016 = vld [vmem:[%s3 + $0x150] sm:$0xff]
      %v2017 = vld [vmem:[%s3 + $0x158] sm:$0xff]
      %v2018 = vld [vmem:[%s3 + $0x160] sm:$0xff]
      %v2019 = vld [vmem:[%s3 + $0x168] sm:$0xff]
      %v2020 = vld [vmem:[%s3 + $0x170] sm:$0xff]
      %v2021 = vld [vmem:[%s3 + $0x178] sm:$0xff]
      %v2022 = vld [vmem:[%s3 + $0x180] sm:$0xff]
      %v2023 = vld [vmem:[%s3 + $0x188] sm:$0xff]
      %v2024 = vld [vmem:[%s3 + $0x190] sm:$0xff]
      %v2025 = vld [vmem:[%s3 + $0x198] sm:$0xff]
      %v2026 = vld [vmem:[%s3 + $0x1a0] sm:$0xff]
      %v2027 = vld [vmem:[%s3 + $0x1a8] sm:$0xff]
      %v2028 = vld [vmem:[%s3 + $0x1b0] sm:$0xff]
      %v2029 = vld [vmem:[%s3 + $0x1b8] sm:$0xff]
      %v2030 = vld [vmem:[%s3 + $0x1c0] sm:$0xff]
      %v2031 = vld [vmem:[%s3 + $0x1c8] sm:$0xff]
      %v2032 = vld [vmem:[%s3 + $0x1d0] sm:$0xff]
      %v2033 = vld [vmem:[%s3 + $0x1d8] sm:$0xff]
      %v2034 = vld [vmem:[%s3 + $0x1e0] sm:$0xff]
      %v2035 = vld [vmem:[%s3 + $0x1e8] sm:$0xff]
      %v2036 = vld [vmem:[%s3 + $0x1f0] sm:$0xff]
      %v2037 = vld [vmem:[%s3 + $0x1f8] sm:$0xff]
      %v2042 = vrot.slane %v1970, 2
      %v2043 = vrot.slane %v1972, 2
      %v2044 = vsel %vm1174, %v2042, %v2043
      %v2045 = vrot.slane %v1971, 2
      %v2046 = vrot.slane %v1973, 2
      %v2047 = vsel %vm1174, %v2045, %v2046
      %v2084 = vunpack.c.l.b16 %v2006
      %v2085 = vunpack.c.h.b16 %v2006
      %v2086 = vunpack.c.l.b16 %v2007
      %v2087 = vunpack.c.h.b16 %v2007
      %v2088 = vunpack.c.l.b16 %v2008
      %v2089 = vunpack.c.h.b16 %v2008
      %v2090 = vunpack.c.l.b16 %v2009
      %v2091 = vunpack.c.h.b16 %v2009
      %v2092 = vunpack.c.l.b16 %v2010
      %v2093 = vunpack.c.h.b16 %v2010
      %v2094 = vunpack.c.l.b16 %v2011
      %v2095 = vunpack.c.h.b16 %v2011
      %v2096 = vunpack.c.l.b16 %v2012
      %v2097 = vunpack.c.h.b16 %v2012
      %v2098 = vunpack.c.l.b16 %v2013
      %v2099 = vunpack.c.h.b16 %v2013
      %v2100 = vunpack.c.l.b16 %v2014
      %v2101 = vunpack.c.h.b16 %v2014
      %v2102 = vunpack.c.l.b16 %v2015
      %v2103 = vunpack.c.h.b16 %v2015
      %v2104 = vunpack.c.l.b16 %v2016
      %v2105 = vunpack.c.h.b16 %v2016
      %v2106 = vunpack.c.l.b16 %v2017
      %v2107 = vunpack.c.h.b16 %v2017
      %v2108 = vunpack.c.l.b16 %v2018
      %v2109 = vunpack.c.h.b16 %v2018
      %v2110 = vunpack.c.l.b16 %v2019
      %v2111 = vunpack.c.h.b16 %v2019
      %v2112 = vunpack.c.l.b16 %v2020
      %v2113 = vunpack.c.h.b16 %v2020
      %v2114 = vunpack.c.l.b16 %v2021
      %v2115 = vunpack.c.h.b16 %v2021
      %v2116 = vunpack.c.l.b16 %v2022
      %v2117 = vunpack.c.h.b16 %v2022
      %v2118 = vunpack.c.l.b16 %v2023
      %v2119 = vunpack.c.h.b16 %v2023
      %v2120 = vunpack.c.l.b16 %v2024
      %v2121 = vunpack.c.h.b16 %v2024
      %v2122 = vunpack.c.l.b16 %v2025
      %v2123 = vunpack.c.h.b16 %v2025
      %v2124 = vunpack.c.l.b16 %v2026
      %v2125 = vunpack.c.h.b16 %v2026
      %v2126 = vunpack.c.l.b16 %v2027
      %v2127 = vunpack.c.h.b16 %v2027
      %v2128 = vunpack.c.l.b16 %v2028
      %v2129 = vunpack.c.h.b16 %v2028
      %v2130 = vunpack.c.l.b16 %v2029
      %v2131 = vunpack.c.h.b16 %v2029
      %v2132 = vunpack.c.l.b16 %v2030
      %v2133 = vunpack.c.h.b16 %v2030
      %v2134 = vunpack.c.l.b16 %v2031
      %v2135 = vunpack.c.h.b16 %v2031
      %v2136 = vunpack.c.l.b16 %v2032
      %v2137 = vunpack.c.h.b16 %v2032
      %v2138 = vunpack.c.l.b16 %v2033
      %v2139 = vunpack.c.h.b16 %v2033
      %v2140 = vunpack.c.l.b16 %v2034
      %v2141 = vunpack.c.h.b16 %v2034
      %v2142 = vunpack.c.l.b16 %v2035
      %v2143 = vunpack.c.h.b16 %v2035
      %v2144 = vunpack.c.l.b16 %v2036
      %v2145 = vunpack.c.h.b16 %v2036
      %v2146 = vunpack.c.l.b16 %v2037
      %v2147 = vunpack.c.h.b16 %v2037
      %v2148 = vpack.c.b16 %v2086, %v2084
      %v2149 = vpack.c.b16 %v2087, %v2085
      %v2150 = vpack.c.b16 %v2090, %v2088
      %v2151 = vpack.c.b16 %v2091, %v2089
      %v2152 = vpack.c.b16 %v2094, %v2092
      %v2153 = vpack.c.b16 %v2095, %v2093
      %v2154 = vpack.c.b16 %v2098, %v2096
      %v2155 = vpack.c.b16 %v2099, %v2097
      %v2156 = vpack.c.b16 %v2102, %v2100
      %v2157 = vpack.c.b16 %v2103, %v2101
      %v2158 = vpack.c.b16 %v2106, %v2104
      %v2159 = vpack.c.b16 %v2107, %v2105
      %v2160 = vpack.c.b16 %v2110, %v2108
      %v2161 = vpack.c.b16 %v2111, %v2109
      %v2162 = vpack.c.b16 %v2114, %v2112
      %v2163 = vpack.c.b16 %v2115, %v2113
      %v2164 = vpack.c.b16 %v2118, %v2116
      %v2165 = vpack.c.b16 %v2119, %v2117
      %v2166 = vpack.c.b16 %v2122, %v2120
      %v2167 = vpack.c.b16 %v2123, %v2121
      %v2168 = vpack.c.b16 %v2126, %v2124
      %v2169 = vpack.c.b16 %v2127, %v2125
      %v2170 = vpack.c.b16 %v2130, %v2128
      %v2171 = vpack.c.b16 %v2131, %v2129
      %v2172 = vpack.c.b16 %v2134, %v2132
      %v2173 = vpack.c.b16 %v2135, %v2133
      %v2174 = vpack.c.b16 %v2138, %v2136
      %v2175 = vpack.c.b16 %v2139, %v2137
      %v2176 = vpack.c.b16 %v2142, %v2140
      %v2177 = vpack.c.b16 %v2143, %v2141
      %v2178 = vpack.c.b16 %v2146, %v2144
      %v2179 = vpack.c.b16 %v2147, %v2145
      %2212 = vmatprep.subr.bf16.mxu0 %v2149
      %2213 = vmatpush1.bf16.msra.mxu0 %v2148
      %2214 = vmatprep.subr.bf16.mxu0 %v2151
      %2215 = vmatpush1.bf16.msra.mxu0 %v2150
      %2216 = vmatprep.subr.bf16.mxu0 %v2153
      %2217 = vmatpush1.bf16.msra.mxu0 %v2152
      %2218 = vmatprep.subr.bf16.mxu0 %v2155
      %2219 = vmatpush1.bf16.msra.mxu0 %v2154
      %2220 = vmatprep.subr.bf16.mxu0 %v2157
      %2221 = vmatpush1.bf16.msra.mxu0 %v2156
      %2222 = vmatprep.subr.bf16.mxu0 %v2159
      %2223 = vmatpush1.bf16.msra.mxu0 %v2158
      %2224 = vmatprep.subr.bf16.mxu0 %v2161
      %2225 = vmatpush1.bf16.msra.mxu0 %v2160
      %2226 = vmatprep.subr.bf16.mxu0 %v2163
      %2227 = vmatpush1.bf16.msra.mxu0 %v2162
      %2228 = vmatprep.subr.bf16.mxu0 %v2165
      %2229 = vmatpush1.bf16.msra.mxu0 %v2164
      %2230 = vmatprep.subr.bf16.mxu0 %v2167
      %2231 = vmatpush1.bf16.msra.mxu0 %v2166
      %2232 = vmatprep.subr.bf16.mxu0 %v2169
      %2233 = vmatpush1.bf16.msra.mxu0 %v2168
      %2234 = vmatprep.subr.bf16.mxu0 %v2171
      %2235 = vmatpush1.bf16.msra.mxu0 %v2170
      %2236 = vmatprep.subr.bf16.mxu0 %v2173
      %2237 = vmatpush1.bf16.msra.mxu0 %v2172
      %2238 = vmatprep.subr.bf16.mxu0 %v2175
      %2239 = vmatpush1.bf16.msra.mxu0 %v2174
      %2240 = vmatprep.subr.bf16.mxu0 %v2177
      %2241 = vmatpush1.bf16.msra.mxu0 %v2176
      %2242 = vmatprep.subr.bf16.mxu0 %v2179
      %2243 = vmatpush1.bf16.msra.mxu0 %v2178
      %2244 = vmatprep.mubr.bf16.mxu0 %v2047
      %2245 = vmatmul.mubr.bf16.gmra.mrb[0].mxu0 %v2044
      %v2246 = vpop.f32.mrb[0].mxu0
      %v2247 = vadd.f32 0.0, %v2246
      %v2248 = vpop.f32.mrb[0].mxu0
      %v2249 = vadd.f32 0.0, %v2248
      %v2250 = vpop.f32.mrb[0].mxu0
      %v2251 = vadd.f32 0.0, %v2250
      %v2252 = vpop.f32.mrb[0].mxu0
      %v2253 = vadd.f32 0.0, %v2252
      %2254 = vmatprep.mubr.bf16.mxu0 %v2046
      %2255 = vmatmul.mubr.bf16.gmra.mrb[0].mxu0 %v2043
      %v2256 = vpop.f32.mrb[0].mxu0
      %v2257 = vadd.f32 0.0, %v2256
      %v2258 = vpop.f32.mrb[0].mxu0
      %v2259 = vadd.f32 0.0, %v2258
      %v2260 = vpop.f32.mrb[0].mxu0
      %v2261 = vpop.f32.mrb[0].mxu0
      %2262 = vdwg.mxu0
      %v2295 = vunpack.c.l.b16 %v1974
      %v2296 = vunpack.c.h.b16 %v1974
      %v2297 = vunpack.c.l.b16 %v1975
      %v2298 = vunpack.c.h.b16 %v1975
      %v2299 = vunpack.c.l.b16 %v1976
      %v2300 = vunpack.c.h.b16 %v1976
      %v2301 = vunpack.c.l.b16 %v1977
      %v2302 = vunpack.c.h.b16 %v1977
      %v2303 = vunpack.c.l.b16 %v1978
      %v2304 = vunpack.c.h.b16 %v1978
      %v2305 = vunpack.c.l.b16 %v1979
      %v2306 = vunpack.c.h.b16 %v1979
      %v2307 = vunpack.c.l.b16 %v1980
      %v2308 = vunpack.c.h.b16 %v1980
      %v2309 = vunpack.c.l.b16 %v1981
      %v2310 = vunpack.c.h.b16 %v1981
      %v2311 = vunpack.c.l.b16 %v1982
      %v2312 = vunpack.c.h.b16 %v1982
      %v2313 = vunpack.c.l.b16 %v1983
      %v2314 = vunpack.c.h.b16 %v1983
      %v2315 = vunpack.c.l.b16 %v1984
      %v2316 = vunpack.c.h.b16 %v1984
      %v2317 = vunpack.c.l.b16 %v1985
      %v2318 = vunpack.c.h.b16 %v1985
      %v2319 = vunpack.c.l.b16 %v1986
      %v2320 = vunpack.c.h.b16 %v1986
      %v2321 = vunpack.c.l.b16 %v1987
      %v2322 = vunpack.c.h.b16 %v1987
      %v2323 = vunpack.c.l.b16 %v1988
      %v2324 = vunpack.c.h.b16 %v1988
      %v2325 = vunpack.c.l.b16 %v1989
      %v2326 = vunpack.c.h.b16 %v1989
      %v2327 = vunpack.c.l.b16 %v1990
      %v2328 = vunpack.c.h.b16 %v1990
      %v2329 = vunpack.c.l.b16 %v1991
      %v2330 = vunpack.c.h.b16 %v1991
      %v2331 = vunpack.c.l.b16 %v1992
      %v2332 = vunpack.c.h.b16 %v1992
      %v2333 = vunpack.c.l.b16 %v1993
      %v2334 = vunpack.c.h.b16 %v1993
      %v2335 = vunpack.c.l.b16 %v1994
      %v2336 = vunpack.c.h.b16 %v1994
      %v2337 = vunpack.c.l.b16 %v1995
      %v2338 = vunpack.c.h.b16 %v1995
      %v2339 = vunpack.c.l.b16 %v1996
      %v2340 = vunpack.c.h.b16 %v1996
      %v2341 = vunpack.c.l.b16 %v1997
      %v2342 = vunpack.c.h.b16 %v1997
      %v2343 = vunpack.c.l.b16 %v1998
      %v2344 = vunpack.c.h.b16 %v1998
      %v2345 = vunpack.c.l.b16 %v1999
      %v2346 = vunpack.c.h.b16 %v1999
      %v2347 = vunpack.c.l.b16 %v2000
      %v2348 = vunpack.c.h.b16 %v2000
      %v2349 = vunpack.c.l.b16 %v2001
      %v2350 = vunpack.c.h.b16 %v2001
      %v2351 = vunpack.c.l.b16 %v2002
      %v2352 = vunpack.c.h.b16 %v2002
      %v2353 = vunpack.c.l.b16 %v2003
      %v2354 = vunpack.c.h.b16 %v2003
      %v2355 = vunpack.c.l.b16 %v2004
      %v2356 = vunpack.c.h.b16 %v2004
      %v2357 = vunpack.c.l.b16 %v2005
      %v2358 = vunpack.c.h.b16 %v2005
      %v2359 = vpack.c.b16 %v2297, %v2295
      %v2360 = vpack.c.b16 %v2298, %v2296
      %v2361 = vpack.c.b16 %v2301, %v2299
      %v2362 = vpack.c.b16 %v2302, %v2300
      %v2363 = vpack.c.b16 %v2305, %v2303
      %v2364 = vpack.c.b16 %v2306, %v2304
      %v2365 = vpack.c.b16 %v2309, %v2307
      %v2366 = vpack.c.b16 %v2310, %v2308
      %v2367 = vpack.c.b16 %v2313, %v2311
      %v2368 = vpack.c.b16 %v2314, %v2312
      %v2369 = vpack.c.b16 %v2317, %v2315
      %v2370 = vpack.c.b16 %v2318, %v2316
      %v2371 = vpack.c.b16 %v2321, %v2319
      %v2372 = vpack.c.b16 %v2322, %v2320
      %v2373 = vpack.c.b16 %v2325, %v2323
      %v2374 = vpack.c.b16 %v2326, %v2324
      %v2375 = vpack.c.b16 %v2329, %v2327
      %v2376 = vpack.c.b16 %v2330, %v2328
      %v2377 = vpack.c.b16 %v2333, %v2331
      %v2378 = vpack.c.b16 %v2334, %v2332
      %v2379 = vpack.c.b16 %v2337, %v2335
      %v2380 = vpack.c.b16 %v2338, %v2336
      %v2381 = vpack.c.b16 %v2341, %v2339
      %v2382 = vpack.c.b16 %v2342, %v2340
      %v2383 = vpack.c.b16 %v2345, %v2343
      %v2384 = vpack.c.b16 %v2346, %v2344
      %v2385 = vpack.c.b16 %v2349, %v2347
      %v2386 = vpack.c.b16 %v2350, %v2348
      %v2387 = vpack.c.b16 %v2353, %v2351
      %v2388 = vpack.c.b16 %v2354, %v2352
      %v2389 = vpack.c.b16 %v2357, %v2355
      %v2390 = vpack.c.b16 %v2358, %v2356
      %2423 = vmatprep.subr.bf16.mxu0 %v2360
      %2424 = vmatpush1.bf16.msra.mxu0 %v2359
      %2425 = vmatprep.subr.bf16.mxu0 %v2362
      %2426 = vmatpush1.bf16.msra.mxu0 %v2361
      %2427 = vmatprep.subr.bf16.mxu0 %v2364
      %2428 = vmatpush1.bf16.msra.mxu0 %v2363
      %2429 = vmatprep.subr.bf16.mxu0 %v2366
      %2430 = vmatpush1.bf16.msra.mxu0 %v2365
      %2431 = vmatprep.subr.bf16.mxu0 %v2368
      %2432 = vmatpush1.bf16.msra.mxu0 %v2367
      %2433 = vmatprep.subr.bf16.mxu0 %v2370
      %2434 = vmatpush1.bf16.msra.mxu0 %v2369
      %2435 = vmatprep.subr.bf16.mxu0 %v2372
      %2436 = vmatpush1.bf16.msra.mxu0 %v2371
      %2437 = vmatprep.subr.bf16.mxu0 %v2374
      %2438 = vmatpush1.bf16.msra.mxu0 %v2373
      %2439 = vmatprep.subr.bf16.mxu0 %v2376
      %2440 = vmatpush1.bf16.msra.mxu0 %v2375
      %2441 = vmatprep.subr.bf16.mxu0 %v2378
      %2442 = vmatpush1.bf16.msra.mxu0 %v2377
      %2443 = vmatprep.subr.bf16.mxu0 %v2380
      %2444 = vmatpush1.bf16.msra.mxu0 %v2379
      %2445 = vmatprep.subr.bf16.mxu0 %v2382
      %2446 = vmatpush1.bf16.msra.mxu0 %v2381
      %2447 = vmatprep.subr.bf16.mxu0 %v2384
      %2448 = vmatpush1.bf16.msra.mxu0 %v2383
      %2449 = vmatprep.subr.bf16.mxu0 %v2386
      %2450 = vmatpush1.bf16.msra.mxu0 %v2385
      %2451 = vmatprep.subr.bf16.mxu0 %v2388
      %2452 = vmatpush1.bf16.msra.mxu0 %v2387
      %2453 = vmatprep.subr.bf16.mxu0 %v2390
      %2454 = vmatpush1.bf16.msra.mxu0 %v2389
      %2455 = vmatprep.mubr.bf16.mxu0 %v1971
      %2456 = vmatmul.mubr.bf16.gmra.mrb[0].mxu0 %v1970
      %v2457 = vpop.f32.mrb[0].mxu0
      %v2458 = vadd.f32 %v2247, %v2457
      %v2459 = vpop.f32.mrb[0].mxu0
      %v2460 = vadd.f32 %v2249, %v2459
      %v2461 = vpop.f32.mrb[0].mxu0
      %v2462 = vadd.f32 %v2251, %v2461
      %v2463 = vpop.f32.mrb[0].mxu0
      %v2464 = vadd.f32 %v2253, %v2463
      %2465 = vmatprep.mubr.bf16.mxu0 %v1973
      %2466 = vmatmul.mubr.bf16.gmra.mrb[0].mxu0 %v1972
      %v2467 = vpop.f32.mrb[0].mxu0
      %v2468 = vadd.f32 %v2257, %v2467
      %v2469 = vpop.f32.mrb[0].mxu0
      %v2470 = vadd.f32 %v2259, %v2469
      %v2471 = vpop.f32.mrb[0].mxu0
      %v2472 = vpop.f32.mrb[0].mxu0
      %2473 = vdwg.mxu0
      %v2474 = vld [vmem:[%s3 + $0x200] sm:$0xff]
      %v2475 = vld [vmem:[%s3 + $0x208] sm:$0xff]
      %v2476 = vld [vmem:[%s3 + $0x210] sm:$0xff]
      %v2477 = vld [vmem:[%s3 + $0x218] sm:$0xff]
      %v2478 = vld [vmem:[%s3 + $0x220] sm:$0xff]
      %v2479 = vld [vmem:[%s3 + $0x228] sm:$0xff]
      %v2480 = vld [vmem:[%s3 + $0x230] sm:$0xff]
      %v2481 = vld [vmem:[%s3 + $0x238] sm:$0xff]
      %v2482 = vld [vmem:[%s3 + $0x240] sm:$0xff]
      %v2483 = vld [vmem:[%s3 + $0x248] sm:$0xff]
      %v2484 = vld [vmem:[%s3 + $0x250] sm:$0xff]
      %v2485 = vld [vmem:[%s3 + $0x258] sm:$0xff]
      %v2486 = vld [vmem:[%s3 + $0x260] sm:$0xff]
      %v2487 = vld [vmem:[%s3 + $0x268] sm:$0xff]
      %v2488 = vld [vmem:[%s3 + $0x270] sm:$0xff]
      %v2489 = vld [vmem:[%s3 + $0x278] sm:$0xff]
      %v2490 = vld [vmem:[%s3 + $0x280] sm:$0xff]
      %v2491 = vld [vmem:[%s3 + $0x288] sm:$0xff]
      %v2492 = vld [vmem:[%s3 + $0x290] sm:$0xff]
      %v2493 = vld [vmem:[%s3 + $0x298] sm:$0xff]
      %v2494 = vld [vmem:[%s3 + $0x2a0] sm:$0xff]
      %v2495 = vld [vmem:[%s3 + $0x2a8] sm:$0xff]
      %v2496 = vld [vmem:[%s3 + $0x2b0] sm:$0xff]
      %v2497 = vld [vmem:[%s3 + $0x2b8] sm:$0xff]
      %v2498 = vld [vmem:[%s3 + $0x2c0] sm:$0xff]
      %v2499 = vld [vmem:[%s3 + $0x2c8] sm:$0xff]
      %v2500 = vld [vmem:[%s3 + $0x2d0] sm:$0xff]
      %v2501 = vld [vmem:[%s3 + $0x2d8] sm:$0xff]
      %v2502 = vld [vmem:[%s3 + $0x2e0] sm:$0xff]
      %v2503 = vld [vmem:[%s3 + $0x2e8] sm:$0xff]
      %v2504 = vld [vmem:[%s3 + $0x2f0] sm:$0xff]
      %v2505 = vld [vmem:[%s3 + $0x2f8] sm:$0xff]
      %vm2506 = vcmask 1043456
      %v2507 = vrot.slane %v1970, 4
      %v2508 = vrot.slane %v1972, 4
      %v2509 = vsel %vm2506, %v2507, %v2508
      %v2510 = vrot.slane %v1971, 4
      %v2511 = vrot.slane %v1973, 4
      %v2512 = vsel %vm2506, %v2510, %v2511
      %v2549 = vunpack.c.l.b16 %v2474
      %v2550 = vunpack.c.h.b16 %v2474
      %v2551 = vunpack.c.l.b16 %v2475
      %v2552 = vunpack.c.h.b16 %v2475
      %v2553 = vunpack.c.l.b16 %v2476
      %v2554 = vunpack.c.h.b16 %v2476
      %v2555 = vunpack.c.l.b16 %v2477
      %v2556 = vunpack.c.h.b16 %v2477
      %v2557 = vunpack.c.l.b16 %v2478
      %v2558 = vunpack.c.h.b16 %v2478
      %v2559 = vunpack.c.l.b16 %v2479
      %v2560 = vunpack.c.h.b16 %v2479
      %v2561 = vunpack.c.l.b16 %v2480
      %v2562 = vunpack.c.h.b16 %v2480
      %v2563 = vunpack.c.l.b16 %v2481
      %v2564 = vunpack.c.h.b16 %v2481
      %v2565 = vunpack.c.l.b16 %v2482
      %v2566 = vunpack.c.h.b16 %v2482
      %v2567 = vunpack.c.l.b16 %v2483
      %v2568 = vunpack.c.h.b16 %v2483
      %v2569 = vunpack.c.l.b16 %v2484
      %v2570 = vunpack.c.h.b16 %v2484
      %v2571 = vunpack.c.l.b16 %v2485
      %v2572 = vunpack.c.h.b16 %v2485
      %v2573 = vunpack.c.l.b16 %v2486
      %v2574 = vunpack.c.h.b16 %v2486
      %v2575 = vunpack.c.l.b16 %v2487
      %v2576 = vunpack.c.h.b16 %v2487
      %v2577 = vunpack.c.l.b16 %v2488
      %v2578 = vunpack.c.h.b16 %v2488
      %v2579 = vunpack.c.l.b16 %v2489
      %v2580 = vunpack.c.h.b16 %v2489
      %v2581 = vunpack.c.l.b16 %v2490
      %v2582 = vunpack.c.h.b16 %v2490
      %v2583 = vunpack.c.l.b16 %v2491
      %v2584 = vunpack.c.h.b16 %v2491
      %v2585 = vunpack.c.l.b16 %v2492
      %v2586 = vunpack.c.h.b16 %v2492
      %v2587 = vunpack.c.l.b16 %v2493
      %v2588 = vunpack.c.h.b16 %v2493
      %v2589 = vunpack.c.l.b16 %v2494
      %v2590 = vunpack.c.h.b16 %v2494
      %v2591 = vunpack.c.l.b16 %v2495
      %v2592 = vunpack.c.h.b16 %v2495
      %v2593 = vunpack.c.l.b16 %v2496
      %v2594 = vunpack.c.h.b16 %v2496
      %v2595 = vunpack.c.l.b16 %v2497
      %v2596 = vunpack.c.h.b16 %v2497
      %v2597 = vunpack.c.l.b16 %v2498
      %v2598 = vunpack.c.h.b16 %v2498
      %v2599 = vunpack.c.l.b16 %v2499
      %v2600 = vunpack.c.h.b16 %v2499
      %v2601 = vunpack.c.l.b16 %v2500
      %v2602 = vunpack.c.h.b16 %v2500
      %v2603 = vunpack.c.l.b16 %v2501
      %v2604 = vunpack.c.h.b16 %v2501
      %v2605 = vunpack.c.l.b16 %v2502
      %v2606 = vunpack.c.h.b16 %v2502
      %v2607 = vunpack.c.l.b16 %v2503
      %v2608 = vunpack.c.h.b16 %v2503
      %v2609 = vunpack.c.l.b16 %v2504
      %v2610 = vunpack.c.h.b16 %v2504
      %v2611 = vunpack.c.l.b16 %v2505
      %v2612 = vunpack.c.h.b16 %v2505
      %v2613 = vpack.c.b16 %v2551, %v2549
      %v2614 = vpack.c.b16 %v2552, %v2550
      %v2615 = vpack.c.b16 %v2555, %v2553
      %v2616 = vpack.c.b16 %v2556, %v2554
      %v2617 = vpack.c.b16 %v2559, %v2557
      %v2618 = vpack.c.b16 %v2560, %v2558
      %v2619 = vpack.c.b16 %v2563, %v2561
      %v2620 = vpack.c.b16 %v2564, %v2562
      %v2621 = vpack.c.b16 %v2567, %v2565
      %v2622 = vpack.c.b16 %v2568, %v2566
      %v2623 = vpack.c.b16 %v2571, %v2569
      %v2624 = vpack.c.b16 %v2572, %v2570
      %v2625 = vpack.c.b16 %v2575, %v2573
      %v2626 = vpack.c.b16 %v2576, %v2574
      %v2627 = vpack.c.b16 %v2579, %v2577
      %v2628 = vpack.c.b16 %v2580, %v2578
      %v2629 = vpack.c.b16 %v2583, %v2581
      %v2630 = vpack.c.b16 %v2584, %v2582
      %v2631 = vpack.c.b16 %v2587, %v2585
      %v2632 = vpack.c.b16 %v2588, %v2586
      %v2633 = vpack.c.b16 %v2591, %v2589
      %v2634 = vpack.c.b16 %v2592, %v2590
      %v2635 = vpack.c.b16 %v2595, %v2593
      %v2636 = vpack.c.b16 %v2596, %v2594
      %v2637 = vpack.c.b16 %v2599, %v2597
      %v2638 = vpack.c.b16 %v2600, %v2598
      %v2639 = vpack.c.b16 %v2603, %v2601
      %v2640 = vpack.c.b16 %v2604, %v2602
      %v2641 = vpack.c.b16 %v2607, %v2605
      %v2642 = vpack.c.b16 %v2608, %v2606
      %v2643 = vpack.c.b16 %v2611, %v2609
      %v2644 = vpack.c.b16 %v2612, %v2610
      %2677 = vmatprep.subr.bf16.mxu0 %v2614
      %2678 = vmatpush1.bf16.msra.mxu0 %v2613
      %2679 = vmatprep.subr.bf16.mxu0 %v2616
      %2680 = vmatpush1.bf16.msra.mxu0 %v2615
      %2681 = vmatprep.subr.bf16.mxu0 %v2618
      %2682 = vmatpush1.bf16.msra.mxu0 %v2617
      %2683 = vmatprep.subr.bf16.mxu0 %v2620
      %2684 = vmatpush1.bf16.msra.mxu0 %v2619
      %2685 = vmatprep.subr.bf16.mxu0 %v2622
      %2686 = vmatpush1.bf16.msra.mxu0 %v2621
      %2687 = vmatprep.subr.bf16.mxu0 %v2624
      %2688 = vmatpush1.bf16.msra.mxu0 %v2623
      %2689 = vmatprep.subr.bf16.mxu0 %v2626
      %2690 = vmatpush1.bf16.msra.mxu0 %v2625
      %2691 = vmatprep.subr.bf16.mxu0 %v2628
      %2692 = vmatpush1.bf16.msra.mxu0 %v2627
      %2693 = vmatprep.subr.bf16.mxu0 %v2630
      %2694 = vmatpush1.bf16.msra.mxu0 %v2629
      %2695 = vmatprep.subr.bf16.mxu0 %v2632
      %2696 = vmatpush1.bf16.msra.mxu0 %v2631
      %2697 = vmatprep.subr.bf16.mxu0 %v2634
      %2698 = vmatpush1.bf16.msra.mxu0 %v2633
      %2699 = vmatprep.subr.bf16.mxu0 %v2636
      %2700 = vmatpush1.bf16.msra.mxu0 %v2635
      %2701 = vmatprep.subr.bf16.mxu0 %v2638
      %2702 = vmatpush1.bf16.msra.mxu0 %v2637
      %2703 = vmatprep.subr.bf16.mxu0 %v2640
      %2704 = vmatpush1.bf16.msra.mxu0 %v2639
      %2705 = vmatprep.subr.bf16.mxu0 %v2642
      %2706 = vmatpush1.bf16.msra.mxu0 %v2641
      %2707 = vmatprep.subr.bf16.mxu0 %v2644
      %2708 = vmatpush1.bf16.msra.mxu0 %v2643
      %2709 = vmatprep.mubr.bf16.mxu0 %v2512
      %2710 = vmatmul.mubr.bf16.gmra.mrb[0].mxu0 %v2509
      %v2711 = vpop.f32.mrb[0].mxu0
      %v2712 = vadd.f32 0.0, %v2711
      %v2713 = vpop.f32.mrb[0].mxu0
      %v2714 = vadd.f32 0.0, %v2713
      %v2715 = vpop.f32.mrb[0].mxu0
      %v2716 = vadd.f32 0.0, %v2715
      %v2717 = vpop.f32.mrb[0].mxu0
      %v2718 = vadd.f32 0.0, %v2717
      %2719 = vmatprep.mubr.bf16.mxu0 %v2511
      %2720 = vmatmul.mubr.bf16.gmra.mrb[0].mxu0 %v2508
      %v2721 = vpop.f32.mrb[0].mxu0
      %v2722 = vadd.f32 0.0, %v2721
      %v2723 = vpop.f32.mrb[0].mxu0
      %v2724 = vadd.f32 0.0, %v2723
      %v2725 = vpop.f32.mrb[0].mxu0
      %v2726 = vpop.f32.mrb[0].mxu0
      %2727 = vdwg.mxu0
      %v2728 = vadd.f32 %v2458, %v2712
      %v2729 = vadd.f32 %v2460, %v2714
      %v2730 = vadd.f32 %v2462, %v2716
      %v2731 = vadd.f32 %v2464, %v2718
      %v2732 = vadd.f32 %v2468, %v2722
      %v2733 = vadd.f32 %v2470, %v2724
      %v2734 = vld [vmem:[%s3 + $0x300] sm:$0xff]
      %v2735 = vld [vmem:[%s3 + $0x308] sm:$0xff]
      %v2736 = vld [vmem:[%s3 + $0x310] sm:$0xff]
      %v2737 = vld [vmem:[%s3 + $0x318] sm:$0xff]
      %v2738 = vld [vmem:[%s3 + $0x320] sm:$0xff]
      %v2739 = vld [vmem:[%s3 + $0x328] sm:$0xff]
      %v2740 = vld [vmem:[%s3 + $0x330] sm:$0xff]
      %v2741 = vld [vmem:[%s3 + $0x338] sm:$0xff]
      %v2742 = vld [vmem:[%s3 + $0x340] sm:$0xff]
      %v2743 = vld [vmem:[%s3 + $0x348] sm:$0xff]
      %v2744 = vld [vmem:[%s3 + $0x350] sm:$0xff]
      %v2745 = vld [vmem:[%s3 + $0x358] sm:$0xff]
      %v2746 = vld [vmem:[%s3 + $0x360] sm:$0xff]
      %v2747 = vld [vmem:[%s3 + $0x368] sm:$0xff]
      %v2748 = vld [vmem:[%s3 + $0x370] sm:$0xff]
      %v2749 = vld [vmem:[%s3 + $0x378] sm:$0xff]
      %v2750 = vld [vmem:[%s3 + $0x380] sm:$0xff]
      %v2751 = vld [vmem:[%s3 + $0x388] sm:$0xff]
      %v2752 = vld [vmem:[%s3 + $0x390] sm:$0xff]
      %v2753 = vld [vmem:[%s3 + $0x398] sm:$0xff]
      %v2754 = vld [vmem:[%s3 + $0x3a0] sm:$0xff]
      %v2755 = vld [vmem:[%s3 + $0x3a8] sm:$0xff]
      %v2756 = vld [vmem:[%s3 + $0x3b0] sm:$0xff]
      %v2757 = vld [vmem:[%s3 + $0x3b8] sm:$0xff]
      %v2758 = vld [vmem:[%s3 + $0x3c0] sm:$0xff]
      %v2759 = vld [vmem:[%s3 + $0x3c8] sm:$0xff]
      %v2760 = vld [vmem:[%s3 + $0x3d0] sm:$0xff]
      %v2761 = vld [vmem:[%s3 + $0x3d8] sm:$0xff]
      %v2762 = vld [vmem:[%s3 + $0x3e0] sm:$0xff]
      %v2763 = vld [vmem:[%s3 + $0x3e8] sm:$0xff]
      %v2764 = vld [vmem:[%s3 + $0x3f0] sm:$0xff]
      %v2765 = vld [vmem:[%s3 + $0x3f8] sm:$0xff]
      %vm2766 = vcmask 1041408
      %v2767 = vrot.slane %v1970, 6
      %v2768 = vrot.slane %v1972, 6
      %v2769 = vsel %vm2766, %v2767, %v2768
      %v2770 = vrot.slane %v1971, 6
      %v2771 = vrot.slane %v1973, 6
      %v2772 = vsel %vm2766, %v2770, %v2771
      %v2809 = vunpack.c.l.b16 %v2734
      %v2810 = vunpack.c.h.b16 %v2734
      %v2811 = vunpack.c.l.b16 %v2735
      %v2812 = vunpack.c.h.b16 %v2735
      %v2813 = vunpack.c.l.b16 %v2736
      %v2814 = vunpack.c.h.b16 %v2736
      %v2815 = vunpack.c.l.b16 %v2737
      %v2816 = vunpack.c.h.b16 %v2737
      %v2817 = vunpack.c.l.b16 %v2738
      %v2818 = vunpack.c.h.b16 %v2738
      %v2819 = vunpack.c.l.b16 %v2739
      %v2820 = vunpack.c.h.b16 %v2739
      %v2821 = vunpack.c.l.b16 %v2740
      %v2822 = vunpack.c.h.b16 %v2740
      %v2823 = vunpack.c.l.b16 %v2741
      %v2824 = vunpack.c.h.b16 %v2741
      %v2825 = vunpack.c.l.b16 %v2742
      %v2826 = vunpack.c.h.b16 %v2742
      %v2827 = vunpack.c.l.b16 %v2743
      %v2828 = vunpack.c.h.b16 %v2743
      %v2829 = vunpack.c.l.b16 %v2744
      %v2830 = vunpack.c.h.b16 %v2744
      %v2831 = vunpack.c.l.b16 %v2745
      %v2832 = vunpack.c.h.b16 %v2745
      %v2833 = vunpack.c.l.b16 %v2746
      %v2834 = vunpack.c.h.b16 %v2746
      %v2835 = vunpack.c.l.b16 %v2747
      %v2836 = vunpack.c.h.b16 %v2747
      %v2837 = vunpack.c.l.b16 %v2748
      %v2838 = vunpack.c.h.b16 %v2748
      %v2839 = vunpack.c.l.b16 %v2749
      %v2840 = vunpack.c.h.b16 %v2749
      %v2841 = vunpack.c.l.b16 %v2750
      %v2842 = vunpack.c.h.b16 %v2750
      %v2843 = vunpack.c.l.b16 %v2751
      %v2844 = vunpack.c.h.b16 %v2751
      %v2845 = vunpack.c.l.b16 %v2752
      %v2846 = vunpack.c.h.b16 %v2752
      %v2847 = vunpack.c.l.b16 %v2753
      %v2848 = vunpack.c.h.b16 %v2753
      %v2849 = vunpack.c.l.b16 %v2754
      %v2850 = vunpack.c.h.b16 %v2754
      %v2851 = vunpack.c.l.b16 %v2755
      %v2852 = vunpack.c.h.b16 %v2755
      %v2853 = vunpack.c.l.b16 %v2756
      %v2854 = vunpack.c.h.b16 %v2756
      %v2855 = vunpack.c.l.b16 %v2757
      %v2856 = vunpack.c.h.b16 %v2757
      %v2857 = vunpack.c.l.b16 %v2758
      %v2858 = vunpack.c.h.b16 %v2758
      %v2859 = vunpack.c.l.b16 %v2759
      %v2860 = vunpack.c.h.b16 %v2759
      %v2861 = vunpack.c.l.b16 %v2760
      %v2862 = vunpack.c.h.b16 %v2760
      %v2863 = vunpack.c.l.b16 %v2761
      %v2864 = vunpack.c.h.b16 %v2761
      %v2865 = vunpack.c.l.b16 %v2762
      %v2866 = vunpack.c.h.b16 %v2762
      %v2867 = vunpack.c.l.b16 %v2763
      %v2868 = vunpack.c.h.b16 %v2763
      %v2869 = vunpack.c.l.b16 %v2764
      %v2870 = vunpack.c.h.b16 %v2764
      %v2871 = vunpack.c.l.b16 %v2765
      %v2872 = vunpack.c.h.b16 %v2765
      %v2873 = vpack.c.b16 %v2811, %v2809
      %v2874 = vpack.c.b16 %v2812, %v2810
      %v2875 = vpack.c.b16 %v2815, %v2813
      %v2876 = vpack.c.b16 %v2816, %v2814
      %v2877 = vpack.c.b16 %v2819, %v2817
      %v2878 = vpack.c.b16 %v2820, %v2818
      %v2879 = vpack.c.b16 %v2823, %v2821
      %v2880 = vpack.c.b16 %v2824, %v2822
      %v2881 = vpack.c.b16 %v2827, %v2825
      %v2882 = vpack.c.b16 %v2828, %v2826
      %v2883 = vpack.c.b16 %v2831, %v2829
      %v2884 = vpack.c.b16 %v2832, %v2830
      %v2885 = vpack.c.b16 %v2835, %v2833
      %v2886 = vpack.c.b16 %v2836, %v2834
      %v2887 = vpack.c.b16 %v2839, %v2837
      %v2888 = vpack.c.b16 %v2840, %v2838
      %v2889 = vpack.c.b16 %v2843, %v2841
      %v2890 = vpack.c.b16 %v2844, %v2842
      %v2891 = vpack.c.b16 %v2847, %v2845
      %v2892 = vpack.c.b16 %v2848, %v2846
      %v2893 = vpack.c.b16 %v2851, %v2849
      %v2894 = vpack.c.b16 %v2852, %v2850
      %v2895 = vpack.c.b16 %v2855, %v2853
      %v2896 = vpack.c.b16 %v2856, %v2854
      %v2897 = vpack.c.b16 %v2859, %v2857
      %v2898 = vpack.c.b16 %v2860, %v2858
      %v2899 = vpack.c.b16 %v2863, %v2861
      %v2900 = vpack.c.b16 %v2864, %v2862
      %v2901 = vpack.c.b16 %v2867, %v2865
      %v2902 = vpack.c.b16 %v2868, %v2866
      %v2903 = vpack.c.b16 %v2871, %v2869
      %v2904 = vpack.c.b16 %v2872, %v2870
      %2937 = vmatprep.subr.bf16.mxu0 %v2874
      %2938 = vmatpush1.bf16.msra.mxu0 %v2873
      %2939 = vmatprep.subr.bf16.mxu0 %v2876
      %2940 = vmatpush1.bf16.msra.mxu0 %v2875
      %2941 = vmatprep.subr.bf16.mxu0 %v2878
      %2942 = vmatpush1.bf16.msra.mxu0 %v2877
      %2943 = vmatprep.subr.bf16.mxu0 %v2880
      %2944 = vmatpush1.bf16.msra.mxu0 %v2879
      %2945 = vmatprep.subr.bf16.mxu0 %v2882
      %2946 = vmatpush1.bf16.msra.mxu0 %v2881
      %2947 = vmatprep.subr.bf16.mxu0 %v2884
      %2948 = vmatpush1.bf16.msra.mxu0 %v2883
      %2949 = vmatprep.subr.bf16.mxu0 %v2886
      %2950 = vmatpush1.bf16.msra.mxu0 %v2885
      %2951 = vmatprep.subr.bf16.mxu0 %v2888
      %2952 = vmatpush1.bf16.msra.mxu0 %v2887
      %2953 = vmatprep.subr.bf16.mxu0 %v2890
      %2954 = vmatpush1.bf16.msra.mxu0 %v2889
      %2955 = vmatprep.subr.bf16.mxu0 %v2892
      %2956 = vmatpush1.bf16.msra.mxu0 %v2891
      %2957 = vmatprep.subr.bf16.mxu0 %v2894
      %2958 = vmatpush1.bf16.msra.mxu0 %v2893
      %2959 = vmatprep.subr.bf16.mxu0 %v2896
      %2960 = vmatpush1.bf16.msra.mxu0 %v2895
      %2961 = vmatprep.subr.bf16.mxu0 %v2898
      %2962 = vmatpush1.bf16.msra.mxu0 %v2897
      %2963 = vmatprep.subr.bf16.mxu0 %v2900
      %2964 = vmatpush1.bf16.msra.mxu0 %v2899
      %2965 = vmatprep.subr.bf16.mxu0 %v2902
      %2966 = vmatpush1.bf16.msra.mxu0 %v2901
      %2967 = vmatprep.subr.bf16.mxu0 %v2904
      %2968 = vmatpush1.bf16.msra.mxu0 %v2903
      %2969 = vmatprep.mubr.bf16.mxu0 %v2772
      %2970 = vmatmul.mubr.bf16.gmra.mrb[0].mxu0 %v2769
      %v2971 = vpop.f32.mrb[0].mxu0
      %v2972 = vadd.f32 0.0, %v2971
      %v2973 = vpop.f32.mrb[0].mxu0
      %v2974 = vadd.f32 0.0, %v2973
      %v2975 = vpop.f32.mrb[0].mxu0
      %v2976 = vadd.f32 0.0, %v2975
      %v2977 = vpop.f32.mrb[0].mxu0
      %v2978 = vadd.f32 0.0, %v2977
      %2979 = vmatprep.mubr.bf16.mxu0 %v2771
      %2980 = vmatmul.mubr.bf16.gmra.mrb[0].mxu0 %v2768
      %v2981 = vpop.f32.mrb[0].mxu0
      %v2982 = vadd.f32 0.0, %v2981
      %v2983 = vpop.f32.mrb[0].mxu0
      %v2984 = vadd.f32 0.0, %v2983
      %v2985 = vpop.f32.mrb[0].mxu0
      %v2986 = vpop.f32.mrb[0].mxu0
      %2987 = vdwg.mxu0
      %v2988 = vadd.f32 %v2728, %v2972
      %v2989 = vadd.f32 %v2729, %v2974
      %v2990 = vadd.f32 %v2730, %v2976
      %v2991 = vadd.f32 %v2731, %v2978
      %v2992 = vadd.f32 %v2732, %v2982
      %v2993 = vadd.f32 %v2733, %v2984
      %v2994 = vld [vmem:[%s4] sm:$0x3]
      %v2996 = vlaneseq
      %v2997 = vshrl.u32 %v2996, 7
      %v2998 = vsub.s32 0, %v2997
      %v2999 = vrot.slane %v2994, %v2998
      %v3000 = vlaneseq
      %v3001 = vshrl.u32 %v3000, 7
      %v3002 = vsub.s32 1, %v3001
      %v3003 = vrot.slane %v2994, %v3002
      %v3006 = vadd.f32 %v2988, %v2999
      %v3007 = vadd.f32 %v2989, %v3003
      %v3008 = vadd.f32 %v2990, %v2999
      %v3009 = vadd.f32 %v2991, %v3003
      %v3010 = vadd.f32 %v2992, %v2999
      %v3011 = vadd.f32 %v2993, %v3003
      %v3012 = vmax.f32 %v3006, 0.0
      %v3013 = vmax.f32 %v3007, 0.0
      %v3014 = vmax.f32 %v3008, 0.0
      %v3015 = vmax.f32 %v3009, 0.0
      %v3016 = vmax.f32 %v3010, 0.0
      %v3017 = vmax.f32 %v3011, 0.0
      %v3018 = vpack.c.bf16 %v3014, %v3012
      %v3019 = vpack.c.bf16 %v3015, %v3013
      %v3020 = vpack.c.bf16 %v3016, %v3016
      %v3021 = vpack.c.bf16 %v3017, %v3017
      %v3022 = vld [vmem:[%s5] sm:$0xf]
      %v3023 = vld [vmem:[%s5 + $0x4] sm:$0xf]
      %v3024 = vld [vmem:[%s5 + $0x8] sm:$0xf]
      %v3025 = vld [vmem:[%s5 + $0xc] sm:$0xf]
      %v3026 = vld [vmem:[%s5 + $0x10] sm:$0xf]
      %v3027 = vld [vmem:[%s5 + $0x14] sm:$0xf]
      %v3028 = vld [vmem:[%s5 + $0x18] sm:$0xf]
      %v3029 = vld [vmem:[%s5 + $0x1c] sm:$0xf]
      %v3030 = vld [vmem:[%s5 + $0x20] sm:$0xf]
      %v3031 = vld [vmem:[%s5 + $0x24] sm:$0xf]
      %v3032 = vld [vmem:[%s5 + $0x28] sm:$0xf]
      %v3033 = vld [vmem:[%s5 + $0x2c] sm:$0xf]
      %v3034 = vld [vmem:[%s5 + $0x30] sm:$0xf]
      %v3035 = vld [vmem:[%s5 + $0x34] sm:$0xf]
      %v3036 = vld [vmem:[%s5 + $0x38] sm:$0xf]
      %v3037 = vld [vmem:[%s5 + $0x3c] sm:$0xf]
      %v3038 = vld [vmem:[%s5 + $0x40] sm:$0xf]
      %v3039 = vld [vmem:[%s5 + $0x44] sm:$0xf]
      %v3040 = vld [vmem:[%s5 + $0x48] sm:$0xf]
      %v3041 = vld [vmem:[%s5 + $0x4c] sm:$0xf]
      %v3042 = vld [vmem:[%s5 + $0x50] sm:$0xf]
      %v3043 = vld [vmem:[%s5 + $0x54] sm:$0xf]
      %v3044 = vld [vmem:[%s5 + $0x58] sm:$0xf]
      %v3045 = vld [vmem:[%s5 + $0x5c] sm:$0xf]
      %v3046 = vld [vmem:[%s5 + $0x60] sm:$0xf]
      %v3047 = vld [vmem:[%s5 + $0x64] sm:$0xf]
      %v3048 = vld [vmem:[%s5 + $0x68] sm:$0xf]
      %v3049 = vld [vmem:[%s5 + $0x6c] sm:$0xf]
      %v3050 = vld [vmem:[%s5 + $0x70] sm:$0xf]
      %v3051 = vld [vmem:[%s5 + $0x74] sm:$0xf]
      %v3052 = vld [vmem:[%s5 + $0x78] sm:$0xf]
      %v3053 = vld [vmem:[%s5 + $0x7c] sm:$0xf]
      %v3054 = vld [vmem:[%s5 + $0x80] sm:$0xf]
      %v3055 = vld [vmem:[%s5 + $0x84] sm:$0xf]
      %v3056 = vld [vmem:[%s5 + $0x88] sm:$0xf]
      %v3057 = vld [vmem:[%s5 + $0x8c] sm:$0xf]
      %v3058 = vld [vmem:[%s5 + $0x90] sm:$0xf]
      %v3059 = vld [vmem:[%s5 + $0x94] sm:$0xf]
      %v3060 = vld [vmem:[%s5 + $0x98] sm:$0xf]
      %v3061 = vld [vmem:[%s5 + $0x9c] sm:$0xf]
      %v3062 = vld [vmem:[%s5 + $0xa0] sm:$0xf]
      %v3063 = vld [vmem:[%s5 + $0xa4] sm:$0xf]
      %v3064 = vld [vmem:[%s5 + $0xa8] sm:$0xf]
      %v3065 = vld [vmem:[%s5 + $0xac] sm:$0xf]
      %v3066 = vld [vmem:[%s5 + $0xb0] sm:$0xf]
      %v3067 = vld [vmem:[%s5 + $0xb4] sm:$0xf]
      %v3068 = vld [vmem:[%s5 + $0xb8] sm:$0xf]
      %v3069 = vld [vmem:[%s5 + $0xbc] sm:$0xf]
      %v3072 = vrot.slane %v3018, 4
      %v3073 = vrot.slane %v3019, 4
      %v3099 = vunpack.c.l.b16 %v3046
      %v3100 = vunpack.c.l.b16 %v3047
      %v3101 = vunpack.c.l.b16 %v3048
      %v3102 = vunpack.c.l.b16 %v3049
      %v3103 = vunpack.c.l.b16 %v3050
      %v3104 = vunpack.c.l.b16 %v3051
      %v3105 = vunpack.c.l.b16 %v3052
      %v3106 = vunpack.c.l.b16 %v3053
      %v3107 = vunpack.c.l.b16 %v3054
      %v3108 = vunpack.c.l.b16 %v3055
      %v3109 = vunpack.c.l.b16 %v3056
      %v3110 = vunpack.c.l.b16 %v3057
      %v3111 = vunpack.c.l.b16 %v3058
      %v3112 = vunpack.c.l.b16 %v3059
      %v3113 = vunpack.c.l.b16 %v3060
      %v3114 = vunpack.c.l.b16 %v3061
      %v3115 = vunpack.c.l.b16 %v3062
      %v3116 = vunpack.c.l.b16 %v3063
      %v3117 = vunpack.c.l.b16 %v3064
      %v3118 = vunpack.c.l.b16 %v3065
      %v3119 = vunpack.c.l.b16 %v3066
      %v3120 = vunpack.c.l.b16 %v3067
      %v3121 = vunpack.c.l.b16 %v3068
      %v3122 = vunpack.c.l.b16 %v3069
      %v3123 = vpack.c.b16 %v3100, %v3099
      %v3124 = vpack.c.b16 %v3102, %v3101
      %v3125 = vpack.c.b16 %v3104, %v3103
      %v3126 = vpack.c.b16 %v3106, %v3105
      %v3127 = vpack.c.b16 %v3108, %v3107
      %v3128 = vpack.c.b16 %v3110, %v3109
      %v3129 = vpack.c.b16 %v3112, %v3111
      %v3130 = vpack.c.b16 %v3114, %v3113
      %v3131 = vpack.c.b16 %v3116, %v3115
      %v3132 = vpack.c.b16 %v3118, %v3117
      %v3133 = vpack.c.b16 %v3120, %v3119
      %v3134 = vpack.c.b16 %v3122, %v3121
      %vm3147 = vcmask 523264
      %v3149 = vsel %vm3147, %v3073, 0
      %3151 = vmatprep.subr.bf16.mxu0 0
      %3152 = vmatpush1.bf16.msra.mxu0 %v3123
      %3153 = vmatprep.subr.bf16.mxu0 0
      %3154 = vmatpush1.bf16.msra.mxu0 %v3124
      %3155 = vmatprep.subr.bf16.mxu0 0
      %3156 = vmatpush1.bf16.msra.mxu0 %v3125
      %3157 = vmatprep.subr.bf16.mxu0 0
      %3158 = vmatpush1.bf16.msra.mxu0 %v3126
      %3159 = vmatprep.subr.bf16.mxu0 0
      %3160 = vmatpush1.bf16.msra.mxu0 %v3127
      %3161 = vmatprep.subr.bf16.mxu0 0
      %3162 = vmatpush1.bf16.msra.mxu0 %v3128
      %3163 = vmatprep.subr.bf16.mxu0 0
      %3164 = vmatpush1.bf16.msra.mxu0 %v3129
      %3165 = vmatprep.subr.bf16.mxu0 0
      %3166 = vmatpush1.bf16.msra.mxu0 %v3130
      %3167 = vmatprep.subr.bf16.mxu0 0
      %3168 = vmatpush1.bf16.msra.mxu0 %v3131
      %3169 = vmatprep.subr.bf16.mxu0 0
      %3170 = vmatpush1.bf16.msra.mxu0 %v3132
      %3171 = vmatprep.subr.bf16.mxu0 0
      %3172 = vmatpush1.bf16.msra.mxu0 %v3133
      %3173 = vmatprep.subr.bf16.mxu0 0
      %3174 = vmatpush1.bf16.msra.mxu0 %v3134
      %3175 = vmatprep.subr.bf16.mxu0 0
      %3176 = vmatpush1.bf16.msra.mxu0 0
      %3177 = vmatprep.subr.bf16.mxu0 0
      %3178 = vmatpush1.bf16.msra.mxu0 0
      %3179 = vmatprep.subr.bf16.mxu0 0
      %3180 = vmatpush1.bf16.msra.mxu0 0
      %3181 = vmatprep.subr.bf16.mxu0 0
      %3182 = vmatpush1.bf16.msra.mxu0 0
      %3183 = vmatprep.mubr.bf16.mxu0 %v3149
      %3184 = vmatmul.mubr.bf16.gmra.mrb[0].mxu0 %v3072
      %v3185 = vpop.f32.mrb[0].mxu0
      %v3186 = vadd.f32 0.0, %v3185
      %v3187 = vpop.f32.mrb[0].mxu0
      %v3188 = vpop.f32.mrb[0].mxu0
      %v3189 = vpop.f32.mrb[0].mxu0
      %3190 = vdwg.mxu0
      %v3215 = vunpack.c.l.b16 %v3022
      %v3216 = vunpack.c.l.b16 %v3023
      %v3217 = vunpack.c.l.b16 %v3024
      %v3218 = vunpack.c.l.b16 %v3025
      %v3219 = vunpack.c.l.b16 %v3026
      %v3220 = vunpack.c.l.b16 %v3027
      %v3221 = vunpack.c.l.b16 %v3028
      %v3222 = vunpack.c.l.b16 %v3029
      %v3223 = vunpack.c.l.b16 %v3030
      %v3224 = vunpack.c.l.b16 %v3031
      %v3225 = vunpack.c.l.b16 %v3032
      %v3226 = vunpack.c.l.b16 %v3033
      %v3227 = vunpack.c.l.b16 %v3034
      %v3228 = vunpack.c.l.b16 %v3035
      %v3229 = vunpack.c.l.b16 %v3036
      %v3230 = vunpack.c.l.b16 %v3037
      %v3231 = vunpack.c.l.b16 %v3038
      %v3232 = vunpack.c.l.b16 %v3039
      %v3233 = vunpack.c.l.b16 %v3040
      %v3234 = vunpack.c.l.b16 %v3041
      %v3235 = vunpack.c.l.b16 %v3042
      %v3236 = vunpack.c.l.b16 %v3043
      %v3237 = vunpack.c.l.b16 %v3044
      %v3238 = vunpack.c.l.b16 %v3045
      %v3239 = vpack.c.b16 %v3216, %v3215
      %v3240 = vpack.c.b16 %v3218, %v3217
      %v3241 = vpack.c.b16 %v3220, %v3219
      %v3242 = vpack.c.b16 %v3222, %v3221
      %v3243 = vpack.c.b16 %v3224, %v3223
      %v3244 = vpack.c.b16 %v3226, %v3225
      %v3245 = vpack.c.b16 %v3228, %v3227
      %v3246 = vpack.c.b16 %v3230, %v3229
      %v3247 = vpack.c.b16 %v3232, %v3231
      %v3248 = vpack.c.b16 %v3234, %v3233
      %v3249 = vpack.c.b16 %v3236, %v3235
      %v3250 = vpack.c.b16 %v3238, %v3237
      %v3264 = vsel %vm3147, %v3019, 0
      %3266 = vmatprep.subr.bf16.mxu0 0
      %3267 = vmatpush1.bf16.msra.mxu0 %v3239
      %3268 = vmatprep.subr.bf16.mxu0 0
      %3269 = vmatpush1.bf16.msra.mxu0 %v3240
      %3270 = vmatprep.subr.bf16.mxu0 0
      %3271 = vmatpush1.bf16.msra.mxu0 %v3241
      %3272 = vmatprep.subr.bf16.mxu0 0
      %3273 = vmatpush1.bf16.msra.mxu0 %v3242
      %3274 = vmatprep.subr.bf16.mxu0 0
      %3275 = vmatpush1.bf16.msra.mxu0 %v3243
      %3276 = vmatprep.subr.bf16.mxu0 0
      %3277 = vmatpush1.bf16.msra.mxu0 %v3244
      %3278 = vmatprep.subr.bf16.mxu0 0
      %3279 = vmatpush1.bf16.msra.mxu0 %v3245
      %3280 = vmatprep.subr.bf16.mxu0 0
      %3281 = vmatpush1.bf16.msra.mxu0 %v3246
      %3282 = vmatprep.subr.bf16.mxu0 0
      %3283 = vmatpush1.bf16.msra.mxu0 %v3247
      %3284 = vmatprep.subr.bf16.mxu0 0
      %3285 = vmatpush1.bf16.msra.mxu0 %v3248
      %3286 = vmatprep.subr.bf16.mxu0 0
      %3287 = vmatpush1.bf16.msra.mxu0 %v3249
      %3288 = vmatprep.subr.bf16.mxu0 0
      %3289 = vmatpush1.bf16.msra.mxu0 %v3250
      %3290 = vmatprep.subr.bf16.mxu0 0
      %3291 = vmatpush1.bf16.msra.mxu0 0
      %3292 = vmatprep.subr.bf16.mxu0 0
      %3293 = vmatpush1.bf16.msra.mxu0 0
      %3294 = vmatprep.subr.bf16.mxu0 0
      %3295 = vmatpush1.bf16.msra.mxu0 0
      %3296 = vmatprep.subr.bf16.mxu0 0
      %3297 = vmatpush1.bf16.msra.mxu0 0
      %3298 = vmatprep.mubr.bf16.mxu0 %v3264
      %3299 = vmatmul.mubr.bf16.gmra.mrb[0].mxu0 %v3018
      %v3300 = vpop.f32.mrb[0].mxu0
      %v3301 = vadd.f32 %v3186, %v3300
      %v3302 = vpop.f32.mrb[0].mxu0
      %v3303 = vpop.f32.mrb[0].mxu0
      %v3304 = vpop.f32.mrb[0].mxu0
      %3305 = vdwg.mxu0
      %v3306 = vld [vmem:[%s5 + $0xc0] sm:$0xf]
      %v3307 = vld [vmem:[%s5 + $0xc4] sm:$0xf]
      %v3308 = vld [vmem:[%s5 + $0xc8] sm:$0xf]
      %v3309 = vld [vmem:[%s5 + $0xcc] sm:$0xf]
      %v3310 = vld [vmem:[%s5 + $0xd0] sm:$0xf]
      %v3311 = vld [vmem:[%s5 + $0xd4] sm:$0xf]
      %v3312 = vld [vmem:[%s5 + $0xd8] sm:$0xf]
      %v3313 = vld [vmem:[%s5 + $0xdc] sm:$0xf]
      %v3314 = vld [vmem:[%s5 + $0xe0] sm:$0xf]
      %v3315 = vld [vmem:[%s5 + $0xe4] sm:$0xf]
      %v3316 = vld [vmem:[%s5 + $0xe8] sm:$0xf]
      %v3317 = vld [vmem:[%s5 + $0xec] sm:$0xf]
      %v3318 = vld [vmem:[%s5 + $0xf0] sm:$0xf]
      %v3319 = vld [vmem:[%s5 + $0xf4] sm:$0xf]
      %v3320 = vld [vmem:[%s5 + $0xf8] sm:$0xf]
      %v3321 = vld [vmem:[%s5 + $0xfc] sm:$0xf]
      %v3322 = vld [vmem:[%s5 + $0x100] sm:$0xf]
      %v3323 = vld [vmem:[%s5 + $0x104] sm:$0xf]
      %v3324 = vld [vmem:[%s5 + $0x108] sm:$0xf]
      %v3325 = vld [vmem:[%s5 + $0x10c] sm:$0xf]
      %v3326 = vld [vmem:[%s5 + $0x110] sm:$0xf]
      %v3327 = vld [vmem:[%s5 + $0x114] sm:$0xf]
      %v3328 = vld [vmem:[%s5 + $0x118] sm:$0xf]
      %v3329 = vld [vmem:[%s5 + $0x11c] sm:$0xf]
      %v3354 = vunpack.c.l.b16 %v3306
      %v3355 = vunpack.c.l.b16 %v3307
      %v3356 = vunpack.c.l.b16 %v3308
      %v3357 = vunpack.c.l.b16 %v3309
      %v3358 = vunpack.c.l.b16 %v3310
      %v3359 = vunpack.c.l.b16 %v3311
      %v3360 = vunpack.c.l.b16 %v3312
      %v3361 = vunpack.c.l.b16 %v3313
      %v3362 = vunpack.c.l.b16 %v3314
      %v3363 = vunpack.c.l.b16 %v3315
      %v3364 = vunpack.c.l.b16 %v3316
      %v3365 = vunpack.c.l.b16 %v3317
      %v3366 = vunpack.c.l.b16 %v3318
      %v3367 = vunpack.c.l.b16 %v3319
      %v3368 = vunpack.c.l.b16 %v3320
      %v3369 = vunpack.c.l.b16 %v3321
      %v3370 = vunpack.c.l.b16 %v3322
      %v3371 = vunpack.c.l.b16 %v3323
      %v3372 = vunpack.c.l.b16 %v3324
      %v3373 = vunpack.c.l.b16 %v3325
      %v3374 = vunpack.c.l.b16 %v3326
      %v3375 = vunpack.c.l.b16 %v3327
      %v3376 = vunpack.c.l.b16 %v3328
      %v3377 = vunpack.c.l.b16 %v3329
      %v3378 = vpack.c.b16 %v3355, %v3354
      %v3379 = vpack.c.b16 %v3357, %v3356
      %v3380 = vpack.c.b16 %v3359, %v3358
      %v3381 = vpack.c.b16 %v3361, %v3360
      %v3382 = vpack.c.b16 %v3363, %v3362
      %v3383 = vpack.c.b16 %v3365, %v3364
      %v3384 = vpack.c.b16 %v3367, %v3366
      %v3385 = vpack.c.b16 %v3369, %v3368
      %v3386 = vpack.c.b16 %v3371, %v3370
      %v3387 = vpack.c.b16 %v3373, %v3372
      %v3388 = vpack.c.b16 %v3375, %v3374
      %v3389 = vpack.c.b16 %v3377, %v3376
      %v3403 = vsel %vm3147, %v3021, 0
      %3405 = vmatprep.subr.bf16.mxu0 0
      %3406 = vmatpush1.bf16.msra.mxu0 %v3378
      %3407 = vmatprep.subr.bf16.mxu0 0
      %3408 = vmatpush1.bf16.msra.mxu0 %v3379
      %3409 = vmatprep.subr.bf16.mxu0 0
      %3410 = vmatpush1.bf16.msra.mxu0 %v3380
      %3411 = vmatprep.subr.bf16.mxu0 0
      %3412 = vmatpush1.bf16.msra.mxu0 %v3381
      %3413 = vmatprep.subr.bf16.mxu0 0
      %3414 = vmatpush1.bf16.msra.mxu0 %v3382
      %3415 = vmatprep.subr.bf16.mxu0 0
      %3416 = vmatpush1.bf16.msra.mxu0 %v3383
      %3417 = vmatprep.subr.bf16.mxu0 0
      %3418 = vmatpush1.bf16.msra.mxu0 %v3384
      %3419 = vmatprep.subr.bf16.mxu0 0
      %3420 = vmatpush1.bf16.msra.mxu0 %v3385
      %3421 = vmatprep.subr.bf16.mxu0 0
      %3422 = vmatpush1.bf16.msra.mxu0 %v3386
      %3423 = vmatprep.subr.bf16.mxu0 0
      %3424 = vmatpush1.bf16.msra.mxu0 %v3387
      %3425 = vmatprep.subr.bf16.mxu0 0
      %3426 = vmatpush1.bf16.msra.mxu0 %v3388
      %3427 = vmatprep.subr.bf16.mxu0 0
      %3428 = vmatpush1.bf16.msra.mxu0 %v3389
      %3429 = vmatprep.subr.bf16.mxu0 0
      %3430 = vmatpush1.bf16.msra.mxu0 0
      %3431 = vmatprep.subr.bf16.mxu0 0
      %3432 = vmatpush1.bf16.msra.mxu0 0
      %3433 = vmatprep.subr.bf16.mxu0 0
      %3434 = vmatpush1.bf16.msra.mxu0 0
      %3435 = vmatprep.subr.bf16.mxu0 0
      %3436 = vmatpush1.bf16.msra.mxu0 0
      %3437 = vmatprep.mubr.bf16.mxu0 %v3403
      %3438 = vmatmul.mubr.bf16.gmra.mrb[0].mxu0 %v3020
      %v3439 = vpop.f32.mrb[0].mxu0
      %v3440 = vadd.f32 0.0, %v3439
      %v3441 = vpop.f32.mrb[0].mxu0
      %v3442 = vpop.f32.mrb[0].mxu0
      %v3443 = vpop.f32.mrb[0].mxu0
      %3444 = vdwg.mxu0
      %v3445 = vadd.f32 %v3301, %v3440
      %v3446 = vld [vmem:[%s6] sm:$0x1]
      %v3447 = vadd.f32 %v3445, %v3446
      %v3448 = vmax.f32 %v3447, 0.0
      %v3449 = vpack.c.bf16 %v3448, %v3448
      %v3450 = vld [vmem:[%s7] sm:$0xff]
      %v3451 = vld [vmem:[%s7 + $0x8] sm:$0xff]
      %v3452 = vld [vmem:[%s7 + $0x10] sm:$0xff]
      %v3453 = vld [vmem:[%s7 + $0x18] sm:$0xff]
      %v3454 = vld [vmem:[%s7 + $0x20] sm:$0xff]
      %v3455 = vld [vmem:[%s7 + $0x28] sm:$0xff]
      %v3456 = vld [vmem:[%s7 + $0x30] sm:$0xff]
      %v3457 = vld [vmem:[%s7 + $0x38] sm:$0xff]
      %v3458 = vld [vmem:[%s7 + $0x40] sm:$0xff]
      %v3459 = vld [vmem:[%s7 + $0x48] sm:$0xff]
      %v3460 = vld [vmem:[%s7 + $0x50] sm:$0xff]
      %v3461 = vld [vmem:[%s7 + $0x58] sm:$0xff]
      %v3462 = vld [vmem:[%s7 + $0x60] sm:$0xff]
      %v3463 = vld [vmem:[%s7 + $0x68] sm:$0xff]
      %v3464 = vld [vmem:[%s7 + $0x70] sm:$0xff]
      %v3465 = vld [vmem:[%s7 + $0x78] sm:$0xff]
      %v3466 = vld [vmem:[%s8] sm:$0xf]
      %v3483 = vunpack.c.l.b16 %v3450
      %v3484 = vunpack.c.h.b16 %v3450
      %v3485 = vunpack.c.l.b16 %v3451
      %v3486 = vunpack.c.h.b16 %v3451
      %v3487 = vunpack.c.l.b16 %v3452
      %v3488 = vunpack.c.h.b16 %v3452
      %v3489 = vunpack.c.l.b16 %v3453
      %v3490 = vunpack.c.h.b16 %v3453
      %v3491 = vunpack.c.l.b16 %v3454
      %v3492 = vunpack.c.h.b16 %v3454
      %v3493 = vunpack.c.l.b16 %v3455
      %v3494 = vunpack.c.h.b16 %v3455
      %v3495 = vunpack.c.l.b16 %v3456
      %v3496 = vunpack.c.h.b16 %v3456
      %v3497 = vunpack.c.l.b16 %v3457
      %v3498 = vunpack.c.h.b16 %v3457
      %v3499 = vunpack.c.l.b16 %v3458
      %v3500 = vunpack.c.h.b16 %v3458
      %v3501 = vunpack.c.l.b16 %v3459
      %v3502 = vunpack.c.h.b16 %v3459
      %v3503 = vunpack.c.l.b16 %v3460
      %v3504 = vunpack.c.h.b16 %v3460
      %v3505 = vunpack.c.l.b16 %v3461
      %v3506 = vunpack.c.h.b16 %v3461
      %v3507 = vunpack.c.l.b16 %v3462
      %v3508 = vunpack.c.h.b16 %v3462
      %v3509 = vunpack.c.l.b16 %v3463
      %v3510 = vunpack.c.h.b16 %v3463
      %v3511 = vunpack.c.l.b16 %v3464
      %v3512 = vunpack.c.h.b16 %v3464
      %v3513 = vunpack.c.l.b16 %v3465
      %v3514 = vunpack.c.h.b16 %v3465
      %v3515 = vpack.c.b16 %v3487, %v3483
      %v3516 = vpack.c.b16 %v3488, %v3484
      %v3517 = vpack.c.b16 %v3489, %v3485
      %v3518 = vpack.c.b16 %v3490, %v3486
      %v3519 = vpack.c.b16 %v3495, %v3491
      %v3520 = vpack.c.b16 %v3496, %v3492
      %v3521 = vpack.c.b16 %v3497, %v3493
      %v3522 = vpack.c.b16 %v3498, %v3494
      %v3523 = vpack.c.b16 %v3503, %v3499
      %v3524 = vpack.c.b16 %v3504, %v3500
      %v3525 = vpack.c.b16 %v3505, %v3501
      %v3526 = vpack.c.b16 %v3506, %v3502
      %v3527 = vpack.c.b16 %v3511, %v3507
      %v3528 = vpack.c.b16 %v3512, %v3508
      %v3529 = vpack.c.b16 %v3513, %v3509
      %v3530 = vpack.c.b16 %v3514, %v3510
      %v3548 = vlaneseq
      %v3549 = vshrl.u32 %v3548, 7
      %v3550 = vsub.s32 0, %v3549
      %v3551 = vrot.slane %v3466, %v3550
      %v3552 = vlaneseq
      %v3553 = vshrl.u32 %v3552, 7
      %v3554 = vsub.s32 1, %v3553
      %v3555 = vrot.slane %v3466, %v3554
      %v3556 = vlaneseq
      %v3557 = vshrl.u32 %v3556, 7
      %v3558 = vsub.s32 2, %v3557
      %v3559 = vrot.slane %v3466, %v3558
      %v3560 = vlaneseq
      %v3561 = vshrl.u32 %v3560, 7
      %v3562 = vsub.s32 3, %v3561
      %v3563 = vrot.slane %v3466, %v3562
      %v3569 = vsel %vm3147, %v3449, 0
      %3571 = vmatprep.subr.bf16.mxu0 %v3516
      %3572 = vmatpush1.bf16.msra.mxu0 %v3515
      %3573 = vmatprep.subr.bf16.mxu0 %v3520
      %3574 = vmatpush1.bf16.msra.mxu0 %v3519
      %3575 = vmatprep.subr.bf16.mxu0 %v3524
      %3576 = vmatpush1.bf16.msra.mxu0 %v3523
      %3577 = vmatprep.subr.bf16.mxu0 %v3528
      %3578 = vmatpush1.bf16.msra.mxu0 %v3527
      %3579 = vmatprep.subr.bf16.mxu0 0
      %3580 = vmatpush1.bf16.msra.mxu0 0
      %3581 = vmatprep.subr.bf16.mxu0 0
      %3582 = vmatpush1.bf16.msra.mxu0 0
      %3583 = vmatprep.subr.bf16.mxu0 0
      %3584 = vmatpush1.bf16.msra.mxu0 0
      %3585 = vmatprep.subr.bf16.mxu0 0
      %3586 = vmatpush1.bf16.msra.mxu0 0
      %3587 = vmatprep.subr.bf16.mxu0 0
      %3588 = vmatpush1.bf16.msra.mxu0 0
      %3589 = vmatprep.subr.bf16.mxu0 0
      %3590 = vmatpush1.bf16.msra.mxu0 0
      %3591 = vmatprep.subr.bf16.mxu0 0
      %3592 = vmatpush1.bf16.msra.mxu0 0
      %3593 = vmatprep.subr.bf16.mxu0 0
      %3594 = vmatpush1.bf16.msra.mxu0 0
      %3595 = vmatprep.subr.bf16.mxu0 0
      %3596 = vmatpush1.bf16.msra.mxu0 0
      %3597 = vmatprep.subr.bf16.mxu0 0
      %3598 = vmatpush1.bf16.msra.mxu0 0
      %3599 = vmatprep.subr.bf16.mxu0 0
      %3600 = vmatpush1.bf16.msra.mxu0 0
      %3601 = vmatprep.subr.bf16.mxu0 0
      %3602 = vmatpush1.bf16.msra.mxu0 0
      %3603 = vmatprep.mubr.bf16.mxu0 0
      %3604 = vmatmul.mubr.bf16.gmra.mrb[0].mxu0 %v3569
      %v3605 = vpop.f32.mrb[0].mxu0
      %v3606 = vadd.f32 %v3551, %v3605
      %v3607 = vpop.f32.mrb[0].mxu0
      %v3608 = vadd.f32 %v3555, %v3607
      %v3609 = vpop.f32.mrb[0].mxu0
      %v3610 = vpop.f32.mrb[0].mxu0
      %3611 = vdwg.mxu0
      %3612 = vmatprep.subr.bf16.mxu0 %v3518
      %3613 = vmatpush1.bf16.msra.mxu0 %v3517
      %3614 = vmatprep.subr.bf16.mxu0 %v3522
      %3615 = vmatpush1.bf16.msra.mxu0 %v3521
      %3616 = vmatprep.subr.bf16.mxu0 %v3526
      %3617 = vmatpush1.bf16.msra.mxu0 %v3525
      %3618 = vmatprep.subr.bf16.mxu0 %v3530
      %3619 = vmatpush1.bf16.msra.mxu0 %v3529
      %3620 = vmatprep.subr.bf16.mxu0 0
      %3621 = vmatpush1.bf16.msra.mxu0 0
      %3622 = vmatprep.subr.bf16.mxu0 0
      %3623 = vmatpush1.bf16.msra.mxu0 0
      %3624 = vmatprep.subr.bf16.mxu0 0
      %3625 = vmatpush1.bf16.msra.mxu0 0
      %3626 = vmatprep.subr.bf16.mxu0 0
      %3627 = vmatpush1.bf16.msra.mxu0 0
      %3628 = vmatprep.subr.bf16.mxu0 0
      %3629 = vmatpush1.bf16.msra.mxu0 0
      %3630 = vmatprep.subr.bf16.mxu0 0
      %3631 = vmatpush1.bf16.msra.mxu0 0
      %3632 = vmatprep.subr.bf16.mxu0 0
      %3633 = vmatpush1.bf16.msra.mxu0 0
      %3634 = vmatprep.subr.bf16.mxu0 0
      %3635 = vmatpush1.bf16.msra.mxu0 0
      %3636 = vmatprep.subr.bf16.mxu0 0
      %3637 = vmatpush1.bf16.msra.mxu0 0
      %3638 = vmatprep.subr.bf16.mxu0 0
      %3639 = vmatpush1.bf16.msra.mxu0 0
      %3640 = vmatprep.subr.bf16.mxu0 0
      %3641 = vmatpush1.bf16.msra.mxu0 0
      %3642 = vmatprep.subr.bf16.mxu0 0
      %3643 = vmatpush1.bf16.msra.mxu0 0
      %3644 = vmatprep.mubr.bf16.mxu0 0
      %3645 = vmatmul.mubr.bf16.gmra.mrb[0].mxu0 %v3569
      %v3646 = vpop.f32.mrb[0].mxu0
      %v3647 = vadd.f32 %v3559, %v3646
      %v3648 = vpop.f32.mrb[0].mxu0
      %v3649 = vadd.f32 %v3563, %v3648
      %v3650 = vpop.f32.mrb[0].mxu0
      %v3651 = vpop.f32.mrb[0].mxu0
      %3652 = vdwg.mxu0
      %v3653 = vmax.f32 %v3606, 0.0
      %v3654 = vmax.f32 %v3608, 0.0
      %v3655 = vmax.f32 %v3647, 0.0
      %v3656 = vmax.f32 %v3649, 0.0
      %v3657 = vpack.c.bf16 %v3653, %v3653
      %v3658 = vpack.c.bf16 %v3654, %v3654
      %v3659 = vpack.c.bf16 %v3655, %v3655
      %v3660 = vpack.c.bf16 %v3656, %v3656
      %v3661 = vld [vmem:[%s9] sm:$0xff]
      %v3662 = vld [vmem:[%s9 + $0x8] sm:$0xff]
      %v3663 = vld [vmem:[%s9 + $0x10] sm:$0xff]
      %v3664 = vld [vmem:[%s9 + $0x18] sm:$0xff]
      %v3665 = vld [vmem:[%s9 + $0x20] sm:$0xff]
      %v3666 = vld [vmem:[%s9 + $0x28] sm:$0xff]
      %v3667 = vld [vmem:[%s9 + $0x30] sm:$0xff]
      %v3668 = vld [vmem:[%s9 + $0x38] sm:$0xff]
      %v3669 = vld [vmem:[%s9 + $0x40] sm:$0xff]
      %v3670 = vld [vmem:[%s9 + $0x48] sm:$0xff]
      %v3671 = vld [vmem:[%s9 + $0x50] sm:$0xff]
      %v3672 = vld [vmem:[%s9 + $0x58] sm:$0xff]
      %v3673 = vld [vmem:[%s9 + $0x60] sm:$0xff]
      %v3674 = vld [vmem:[%s9 + $0x68] sm:$0xff]
      %v3675 = vld [vmem:[%s9 + $0x70] sm:$0xff]
      %v3676 = vld [vmem:[%s9 + $0x78] sm:$0xff]
      %v3677 = vld [vmem:[%s9 + $0x80] sm:$0xff]
      %v3678 = vld [vmem:[%s9 + $0x88] sm:$0xff]
      %v3679 = vld [vmem:[%s9 + $0x90] sm:$0xff]
      %v3680 = vld [vmem:[%s9 + $0x98] sm:$0xff]
      %v3681 = vld [vmem:[%s9 + $0xa0] sm:$0xff]
      %v3682 = vld [vmem:[%s9 + $0xa8] sm:$0xff]
      %v3683 = vld [vmem:[%s9 + $0xb0] sm:$0xff]
      %v3684 = vld [vmem:[%s9 + $0xb8] sm:$0xff]
      %v3685 = vld [vmem:[%s9 + $0xc0] sm:$0xff]
      %v3686 = vld [vmem:[%s9 + $0xc8] sm:$0xff]
      %v3687 = vld [vmem:[%s9 + $0xd0] sm:$0xff]
      %v3688 = vld [vmem:[%s9 + $0xd8] sm:$0xff]
      %v3689 = vld [vmem:[%s9 + $0xe0] sm:$0xff]
      %v3690 = vld [vmem:[%s9 + $0xe8] sm:$0xff]
      %v3691 = vld [vmem:[%s9 + $0xf0] sm:$0xff]
      %v3692 = vld [vmem:[%s9 + $0xf8] sm:$0xff]
      %v3693 = vld [vmem:[%s9 + $0x100] sm:$0xff]
      %v3694 = vld [vmem:[%s9 + $0x108] sm:$0xff]
      %v3695 = vld [vmem:[%s9 + $0x110] sm:$0xff]
      %v3696 = vld [vmem:[%s9 + $0x118] sm:$0xff]
      %v3697 = vld [vmem:[%s9 + $0x120] sm:$0xff]
      %v3698 = vld [vmem:[%s9 + $0x128] sm:$0xff]
      %v3699 = vld [vmem:[%s9 + $0x130] sm:$0xff]
      %v3700 = vld [vmem:[%s9 + $0x138] sm:$0xff]
      %v3701 = vld [vmem:[%s9 + $0x140] sm:$0xff]
      %v3702 = vld [vmem:[%s9 + $0x148] sm:$0xff]
      %v3703 = vld [vmem:[%s9 + $0x150] sm:$0xff]
      %v3704 = vld [vmem:[%s9 + $0x158] sm:$0xff]
      %v3705 = vld [vmem:[%s9 + $0x160] sm:$0xff]
      %v3706 = vld [vmem:[%s9 + $0x168] sm:$0xff]
      %v3707 = vld [vmem:[%s9 + $0x170] sm:$0xff]
      %v3708 = vld [vmem:[%s9 + $0x178] sm:$0xff]
      %v3709 = vld [vmem:[%s9 + $0x180] sm:$0xff]
      %v3710 = vld [vmem:[%s9 + $0x188] sm:$0xff]
      %v3711 = vld [vmem:[%s9 + $0x190] sm:$0xff]
      %v3712 = vld [vmem:[%s9 + $0x198] sm:$0xff]
      %v3713 = vld [vmem:[%s9 + $0x1a0] sm:$0xff]
      %v3714 = vld [vmem:[%s9 + $0x1a8] sm:$0xff]
      %v3715 = vld [vmem:[%s9 + $0x1b0] sm:$0xff]
      %v3716 = vld [vmem:[%s9 + $0x1b8] sm:$0xff]
      %v3717 = vld [vmem:[%s9 + $0x1c0] sm:$0xff]
      %v3718 = vld [vmem:[%s9 + $0x1c8] sm:$0xff]
      %v3719 = vld [vmem:[%s9 + $0x1d0] sm:$0xff]
      %v3720 = vld [vmem:[%s9 + $0x1d8] sm:$0xff]
      %v3721 = vld [vmem:[%s9 + $0x1e0] sm:$0xff]
      %v3722 = vld [vmem:[%s9 + $0x1e8] sm:$0xff]
      %v3723 = vld [vmem:[%s9 + $0x1f0] sm:$0xff]
      %v3724 = vld [vmem:[%s9 + $0x1f8] sm:$0xff]
      %v3725 = vld [vmem:[%s9 + $0x200] sm:$0xff]
      %v3726 = vld [vmem:[%s9 + $0x208] sm:$0xff]
      %v3727 = vld [vmem:[%s9 + $0x210] sm:$0xff]
      %v3728 = vld [vmem:[%s9 + $0x218] sm:$0xff]
      %v3729 = vld [vmem:[%s9 + $0x220] sm:$0xff]
      %v3730 = vld [vmem:[%s9 + $0x228] sm:$0xff]
      %v3731 = vld [vmem:[%s9 + $0x230] sm:$0xff]
      %v3732 = vld [vmem:[%s9 + $0x238] sm:$0xff]
      %v3733 = vld [vmem:[%s9 + $0x240] sm:$0xff]
      %v3734 = vld [vmem:[%s9 + $0x248] sm:$0xff]
      %v3735 = vld [vmem:[%s9 + $0x250] sm:$0xff]
      %v3736 = vld [vmem:[%s9 + $0x258] sm:$0xff]
      %v3737 = vld [vmem:[%s9 + $0x260] sm:$0xff]
      %v3738 = vld [vmem:[%s9 + $0x268] sm:$0xff]
      %v3739 = vld [vmem:[%s9 + $0x270] sm:$0xff]
      %v3740 = vld [vmem:[%s9 + $0x278] sm:$0xff]
      %v3741 = vld [vmem:[%s9 + $0x280] sm:$0xff]
      %v3742 = vld [vmem:[%s9 + $0x288] sm:$0xff]
      %v3743 = vld [vmem:[%s9 + $0x290] sm:$0xff]
      %v3744 = vld [vmem:[%s9 + $0x298] sm:$0xff]
      %v3745 = vld [vmem:[%s9 + $0x2a0] sm:$0xff]
      %v3746 = vld [vmem:[%s9 + $0x2a8] sm:$0xff]
      %v3747 = vld [vmem:[%s9 + $0x2b0] sm:$0xff]
      %v3748 = vld [vmem:[%s9 + $0x2b8] sm:$0xff]
      %v3749 = vld [vmem:[%s9 + $0x2c0] sm:$0xff]
      %v3750 = vld [vmem:[%s9 + $0x2c8] sm:$0xff]
      %v3751 = vld [vmem:[%s9 + $0x2d0] sm:$0xff]
      %v3752 = vld [vmem:[%s9 + $0x2d8] sm:$0xff]
      %v3753 = vld [vmem:[%s9 + $0x2e0] sm:$0xff]
      %v3754 = vld [vmem:[%s9 + $0x2e8] sm:$0xff]
      %v3755 = vld [vmem:[%s9 + $0x2f0] sm:$0xff]
      %v3756 = vld [vmem:[%s9 + $0x2f8] sm:$0xff]
      %v3757 = vld [vmem:[%s9 + $0x300] sm:$0xff]
      %v3758 = vld [vmem:[%s9 + $0x308] sm:$0xff]
      %v3759 = vld [vmem:[%s9 + $0x310] sm:$0xff]
      %v3760 = vld [vmem:[%s9 + $0x318] sm:$0xff]
      %v3761 = vld [vmem:[%s9 + $0x320] sm:$0xff]
      %v3762 = vld [vmem:[%s9 + $0x328] sm:$0xff]
      %v3763 = vld [vmem:[%s9 + $0x330] sm:$0xff]
      %v3764 = vld [vmem:[%s9 + $0x338] sm:$0xff]
      %v3765 = vld [vmem:[%s9 + $0x340] sm:$0xff]
      %v3766 = vld [vmem:[%s9 + $0x348] sm:$0xff]
      %v3767 = vld [vmem:[%s9 + $0x350] sm:$0xff]
      %v3768 = vld [vmem:[%s9 + $0x358] sm:$0xff]
      %v3769 = vld [vmem:[%s9 + $0x360] sm:$0xff]
      %v3770 = vld [vmem:[%s9 + $0x368] sm:$0xff]
      %v3771 = vld [vmem:[%s9 + $0x370] sm:$0xff]
      %v3772 = vld [vmem:[%s9 + $0x378] sm:$0xff]
      %v3773 = vld [vmem:[%s9 + $0x380] sm:$0xff]
      %v3774 = vld [vmem:[%s9 + $0x388] sm:$0xff]
      %v3775 = vld [vmem:[%s9 + $0x390] sm:$0xff]
      %v3776 = vld [vmem:[%s9 + $0x398] sm:$0xff]
      %v3777 = vld [vmem:[%s9 + $0x3a0] sm:$0xff]
      %v3778 = vld [vmem:[%s9 + $0x3a8] sm:$0xff]
      %v3779 = vld [vmem:[%s9 + $0x3b0] sm:$0xff]
      %v3780 = vld [vmem:[%s9 + $0x3b8] sm:$0xff]
      %v3781 = vld [vmem:[%s9 + $0x3c0] sm:$0xff]
      %v3782 = vld [vmem:[%s9 + $0x3c8] sm:$0xff]
      %v3783 = vld [vmem:[%s9 + $0x3d0] sm:$0xff]
      %v3784 = vld [vmem:[%s9 + $0x3d8] sm:$0xff]
      %v3785 = vld [vmem:[%s9 + $0x3e0] sm:$0xff]
      %v3786 = vld [vmem:[%s9 + $0x3e8] sm:$0xff]
      %v3787 = vld [vmem:[%s9 + $0x3f0] sm:$0xff]
      %v3788 = vld [vmem:[%s9 + $0x3f8] sm:$0xff]
      %v3789 = vld [vmem:[%s9 + $0x400] sm:$0xff]
      %v3790 = vld [vmem:[%s9 + $0x408] sm:$0xff]
      %v3791 = vld [vmem:[%s9 + $0x410] sm:$0xff]
      %v3792 = vld [vmem:[%s9 + $0x418] sm:$0xff]
      %v3793 = vld [vmem:[%s9 + $0x420] sm:$0xff]
      %v3794 = vld [vmem:[%s9 + $0x428] sm:$0xff]
      %v3795 = vld [vmem:[%s9 + $0x430] sm:$0xff]
      %v3796 = vld [vmem:[%s9 + $0x438] sm:$0xff]
      %v3797 = vld [vmem:[%s9 + $0x440] sm:$0xff]
      %v3798 = vld [vmem:[%s9 + $0x448] sm:$0xff]
      %v3799 = vld [vmem:[%s9 + $0x450] sm:$0xff]
      %v3800 = vld [vmem:[%s9 + $0x458] sm:$0xff]
      %v3801 = vld [vmem:[%s9 + $0x460] sm:$0xff]
      %v3802 = vld [vmem:[%s9 + $0x468] sm:$0xff]
      %v3803 = vld [vmem:[%s9 + $0x470] sm:$0xff]
      %v3804 = vld [vmem:[%s9 + $0x478] sm:$0xff]
      %v3805 = vld [vmem:[%s9 + $0x480] sm:$0xff]
      %v3806 = vld [vmem:[%s9 + $0x488] sm:$0xff]
      %v3807 = vld [vmem:[%s9 + $0x490] sm:$0xff]
      %v3808 = vld [vmem:[%s9 + $0x498] sm:$0xff]
      %v3809 = vld [vmem:[%s9 + $0x4a0] sm:$0xff]
      %v3810 = vld [vmem:[%s9 + $0x4a8] sm:$0xff]
      %v3811 = vld [vmem:[%s9 + $0x4b0] sm:$0xff]
      %v3812 = vld [vmem:[%s9 + $0x4b8] sm:$0xff]
      %v3813 = vld [vmem:[%s9 + $0x4c0] sm:$0xff]
      %v3814 = vld [vmem:[%s9 + $0x4c8] sm:$0xff]
      %v3815 = vld [vmem:[%s9 + $0x4d0] sm:$0xff]
      %v3816 = vld [vmem:[%s9 + $0x4d8] sm:$0xff]
      %v3817 = vld [vmem:[%s9 + $0x4e0] sm:$0xff]
      %v3818 = vld [vmem:[%s9 + $0x4e8] sm:$0xff]
      %v3819 = vld [vmem:[%s9 + $0x4f0] sm:$0xff]
      %v3820 = vld [vmem:[%s9 + $0x4f8] sm:$0xff]
      %v3821 = vld [vmem:[%s9 + $0x500] sm:$0xff]
      %v3822 = vld [vmem:[%s9 + $0x508] sm:$0xff]
      %v3823 = vld [vmem:[%s9 + $0x510] sm:$0xff]
      %v3824 = vld [vmem:[%s9 + $0x518] sm:$0xff]
      %v3825 = vld [vmem:[%s9 + $0x520] sm:$0xff]
      %v3826 = vld [vmem:[%s9 + $0x528] sm:$0xff]
      %v3827 = vld [vmem:[%s9 + $0x530] sm:$0xff]
      %v3828 = vld [vmem:[%s9 + $0x538] sm:$0xff]
      %v3829 = vld [vmem:[%s9 + $0x540] sm:$0xff]
      %v3830 = vld [vmem:[%s9 + $0x548] sm:$0xff]
      %v3831 = vld [vmem:[%s9 + $0x550] sm:$0xff]
      %v3832 = vld [vmem:[%s9 + $0x558] sm:$0xff]
      %v3833 = vld [vmem:[%s9 + $0x560] sm:$0xff]
      %v3834 = vld [vmem:[%s9 + $0x568] sm:$0xff]
      %v3835 = vld [vmem:[%s9 + $0x570] sm:$0xff]
      %v3836 = vld [vmem:[%s9 + $0x578] sm:$0xff]
      %v3837 = vld [vmem:[%s9 + $0x580] sm:$0xff]
      %v3838 = vld [vmem:[%s9 + $0x588] sm:$0xff]
      %v3839 = vld [vmem:[%s9 + $0x590] sm:$0xff]
      %v3840 = vld [vmem:[%s9 + $0x598] sm:$0xff]
      %v3841 = vld [vmem:[%s9 + $0x5a0] sm:$0xff]
      %v3842 = vld [vmem:[%s9 + $0x5a8] sm:$0xff]
      %v3843 = vld [vmem:[%s9 + $0x5b0] sm:$0xff]
      %v3844 = vld [vmem:[%s9 + $0x5b8] sm:$0xff]
      %v3845 = vld [vmem:[%s9 + $0x5c0] sm:$0xff]
      %v3846 = vld [vmem:[%s9 + $0x5c8] sm:$0xff]
      %v3847 = vld [vmem:[%s9 + $0x5d0] sm:$0xff]
      %v3848 = vld [vmem:[%s9 + $0x5d8] sm:$0xff]
      %v3849 = vld [vmem:[%s9 + $0x5e0] sm:$0xff]
      %v3850 = vld [vmem:[%s9 + $0x5e8] sm:$0xff]
      %v3851 = vld [vmem:[%s9 + $0x5f0] sm:$0xff]
      %v3852 = vld [vmem:[%s9 + $0x5f8] sm:$0xff]
      %v3853 = vld [vmem:[%s10] sm:$0x3f]
      %v4046 = vunpack.c.l.b16 %v3661
      %v4047 = vunpack.c.h.b16 %v3661
      %v4048 = vunpack.c.l.b16 %v3662
      %v4049 = vunpack.c.h.b16 %v3662
      %v4050 = vunpack.c.l.b16 %v3663
      %v4051 = vunpack.c.h.b16 %v3663
      %v4052 = vunpack.c.l.b16 %v3664
      %v4053 = vunpack.c.h.b16 %v3664
      %v4054 = vunpack.c.l.b16 %v3665
      %v4055 = vunpack.c.h.b16 %v3665
      %v4056 = vunpack.c.l.b16 %v3666
      %v4057 = vunpack.c.h.b16 %v3666
      %v4058 = vunpack.c.l.b16 %v3667
      %v4059 = vunpack.c.h.b16 %v3667
      %v4060 = vunpack.c.l.b16 %v3668
      %v4061 = vunpack.c.h.b16 %v3668
      %v4062 = vunpack.c.l.b16 %v3669
      %v4063 = vunpack.c.h.b16 %v3669
      %v4064 = vunpack.c.l.b16 %v3670
      %v4065 = vunpack.c.h.b16 %v3670
      %v4066 = vunpack.c.l.b16 %v3671
      %v4067 = vunpack.c.h.b16 %v3671
      %v4068 = vunpack.c.l.b16 %v3672
      %v4069 = vunpack.c.h.b16 %v3672
      %v4070 = vunpack.c.l.b16 %v3673
      %v4071 = vunpack.c.h.b16 %v3673
      %v4072 = vunpack.c.l.b16 %v3674
      %v4073 = vunpack.c.h.b16 %v3674
      %v4074 = vunpack.c.l.b16 %v3675
      %v4075 = vunpack.c.h.b16 %v3675
      %v4076 = vunpack.c.l.b16 %v3676
      %v4077 = vunpack.c.h.b16 %v3676
      %v4078 = vunpack.c.l.b16 %v3677
      %v4079 = vunpack.c.h.b16 %v3677
      %v4080 = vunpack.c.l.b16 %v3678
      %v4081 = vunpack.c.h.b16 %v3678
      %v4082 = vunpack.c.l.b16 %v3679
      %v4083 = vunpack.c.h.b16 %v3679
      %v4084 = vunpack.c.l.b16 %v3680
      %v4085 = vunpack.c.h.b16 %v3680
      %v4086 = vunpack.c.l.b16 %v3681
      %v4087 = vunpack.c.h.b16 %v3681
      %v4088 = vunpack.c.l.b16 %v3682
      %v4089 = vunpack.c.h.b16 %v3682
      %v4090 = vunpack.c.l.b16 %v3683
      %v4091 = vunpack.c.h.b16 %v3683
      %v4092 = vunpack.c.l.b16 %v3684
      %v4093 = vunpack.c.h.b16 %v3684
      %v4094 = vunpack.c.l.b16 %v3685
      %v4095 = vunpack.c.h.b16 %v3685
      %v4096 = vunpack.c.l.b16 %v3686
      %v4097 = vunpack.c.h.b16 %v3686
      %v4098 = vunpack.c.l.b16 %v3687
      %v4099 = vunpack.c.h.b16 %v3687
      %v4100 = vunpack.c.l.b16 %v3688
      %v4101 = vunpack.c.h.b16 %v3688
      %v4102 = vunpack.c.l.b16 %v3689
      %v4103 = vunpack.c.h.b16 %v3689
      %v4104 = vunpack.c.l.b16 %v3690
      %v4105 = vunpack.c.h.b16 %v3690
      %v4106 = vunpack.c.l.b16 %v3691
      %v4107 = vunpack.c.h.b16 %v3691
      %v4108 = vunpack.c.l.b16 %v3692
      %v4109 = vunpack.c.h.b16 %v3692
      %v4110 = vunpack.c.l.b16 %v3693
      %v4111 = vunpack.c.h.b16 %v3693
      %v4112 = vunpack.c.l.b16 %v3694
      %v4113 = vunpack.c.h.b16 %v3694
      %v4114 = vunpack.c.l.b16 %v3695
      %v4115 = vunpack.c.h.b16 %v3695
      %v4116 = vunpack.c.l.b16 %v3696
      %v4117 = vunpack.c.h.b16 %v3696
      %v4118 = vunpack.c.l.b16 %v3697
      %v4119 = vunpack.c.h.b16 %v3697
      %v4120 = vunpack.c.l.b16 %v3698
      %v4121 = vunpack.c.h.b16 %v3698
      %v4122 = vunpack.c.l.b16 %v3699
      %v4123 = vunpack.c.h.b16 %v3699
      %v4124 = vunpack.c.l.b16 %v3700
      %v4125 = vunpack.c.h.b16 %v3700
      %v4126 = vunpack.c.l.b16 %v3701
      %v4127 = vunpack.c.h.b16 %v3701
      %v4128 = vunpack.c.l.b16 %v3702
      %v4129 = vunpack.c.h.b16 %v3702
      %v4130 = vunpack.c.l.b16 %v3703
      %v4131 = vunpack.c.h.b16 %v3703
      %v4132 = vunpack.c.l.b16 %v3704
      %v4133 = vunpack.c.h.b16 %v3704
      %v4134 = vunpack.c.l.b16 %v3705
      %v4135 = vunpack.c.h.b16 %v3705
      %v4136 = vunpack.c.l.b16 %v3706
      %v4137 = vunpack.c.h.b16 %v3706
      %v4138 = vunpack.c.l.b16 %v3707
      %v4139 = vunpack.c.h.b16 %v3707
      %v4140 = vunpack.c.l.b16 %v3708
      %v4141 = vunpack.c.h.b16 %v3708
      %v4142 = vunpack.c.l.b16 %v3709
      %v4143 = vunpack.c.h.b16 %v3709
      %v4144 = vunpack.c.l.b16 %v3710
      %v4145 = vunpack.c.h.b16 %v3710
      %v4146 = vunpack.c.l.b16 %v3711
      %v4147 = vunpack.c.h.b16 %v3711
      %v4148 = vunpack.c.l.b16 %v3712
      %v4149 = vunpack.c.h.b16 %v3712
      %v4150 = vunpack.c.l.b16 %v3713
      %v4151 = vunpack.c.h.b16 %v3713
      %v4152 = vunpack.c.l.b16 %v3714
      %v4153 = vunpack.c.h.b16 %v3714
      %v4154 = vunpack.c.l.b16 %v3715
      %v4155 = vunpack.c.h.b16 %v3715
      %v4156 = vunpack.c.l.b16 %v3716
      %v4157 = vunpack.c.h.b16 %v3716
      %v4158 = vunpack.c.l.b16 %v3717
      %v4159 = vunpack.c.h.b16 %v3717
      %v4160 = vunpack.c.l.b16 %v3718
      %v4161 = vunpack.c.h.b16 %v3718
      %v4162 = vunpack.c.l.b16 %v3719
      %v4163 = vunpack.c.h.b16 %v3719
      %v4164 = vunpack.c.l.b16 %v3720
      %v4165 = vunpack.c.h.b16 %v3720
      %v4166 = vunpack.c.l.b16 %v3721
      %v4167 = vunpack.c.h.b16 %v3721
      %v4168 = vunpack.c.l.b16 %v3722
      %v4169 = vunpack.c.h.b16 %v3722
      %v4170 = vunpack.c.l.b16 %v3723
      %v4171 = vunpack.c.h.b16 %v3723
      %v4172 = vunpack.c.l.b16 %v3724
      %v4173 = vunpack.c.h.b16 %v3724
      %v4174 = vunpack.c.l.b16 %v3725
      %v4175 = vunpack.c.h.b16 %v3725
      %v4176 = vunpack.c.l.b16 %v3726
      %v4177 = vunpack.c.h.b16 %v3726
      %v4178 = vunpack.c.l.b16 %v3727
      %v4179 = vunpack.c.h.b16 %v3727
      %v4180 = vunpack.c.l.b16 %v3728
      %v4181 = vunpack.c.h.b16 %v3728
      %v4182 = vunpack.c.l.b16 %v3729
      %v4183 = vunpack.c.h.b16 %v3729
      %v4184 = vunpack.c.l.b16 %v3730
      %v4185 = vunpack.c.h.b16 %v3730
      %v4186 = vunpack.c.l.b16 %v3731
      %v4187 = vunpack.c.h.b16 %v3731
      %v4188 = vunpack.c.l.b16 %v3732
      %v4189 = vunpack.c.h.b16 %v3732
      %v4190 = vunpack.c.l.b16 %v3733
      %v4191 = vunpack.c.h.b16 %v3733
      %v4192 = vunpack.c.l.b16 %v3734
      %v4193 = vunpack.c.h.b16 %v3734
      %v4194 = vunpack.c.l.b16 %v3735
      %v4195 = vunpack.c.h.b16 %v3735
      %v4196 = vunpack.c.l.b16 %v3736
      %v4197 = vunpack.c.h.b16 %v3736
      %v4198 = vunpack.c.l.b16 %v3737
      %v4199 = vunpack.c.h.b16 %v3737
      %v4200 = vunpack.c.l.b16 %v3738
      %v4201 = vunpack.c.h.b16 %v3738
      %v4202 = vunpack.c.l.b16 %v3739
      %v4203 = vunpack.c.h.b16 %v3739
      %v4204 = vunpack.c.l.b16 %v3740
      %v4205 = vunpack.c.h.b16 %v3740
      %v4206 = vunpack.c.l.b16 %v3741
      %v4207 = vunpack.c.h.b16 %v3741
      %v4208 = vunpack.c.l.b16 %v3742
      %v4209 = vunpack.c.h.b16 %v3742
      %v4210 = vunpack.c.l.b16 %v3743
      %v4211 = vunpack.c.h.b16 %v3743
      %v4212 = vunpack.c.l.b16 %v3744
      %v4213 = vunpack.c.h.b16 %v3744
      %v4214 = vunpack.c.l.b16 %v3745
      %v4215 = vunpack.c.h.b16 %v3745
      %v4216 = vunpack.c.l.b16 %v3746
      %v4217 = vunpack.c.h.b16 %v3746
      %v4218 = vunpack.c.l.b16 %v3747
      %v4219 = vunpack.c.h.b16 %v3747
      %v4220 = vunpack.c.l.b16 %v3748
      %v4221 = vunpack.c.h.b16 %v3748
      %v4222 = vunpack.c.l.b16 %v3749
      %v4223 = vunpack.c.h.b16 %v3749
      %v4224 = vunpack.c.l.b16 %v3750
      %v4225 = vunpack.c.h.b16 %v3750
      %v4226 = vunpack.c.l.b16 %v3751
      %v4227 = vunpack.c.h.b16 %v3751
      %v4228 = vunpack.c.l.b16 %v3752
      %v4229 = vunpack.c.h.b16 %v3752
      %v4230 = vunpack.c.l.b16 %v3753
      %v4231 = vunpack.c.h.b16 %v3753
      %v4232 = vunpack.c.l.b16 %v3754
      %v4233 = vunpack.c.h.b16 %v3754
      %v4234 = vunpack.c.l.b16 %v3755
      %v4235 = vunpack.c.h.b16 %v3755
      %v4236 = vunpack.c.l.b16 %v3756
      %v4237 = vunpack.c.h.b16 %v3756
      %v4238 = vunpack.c.l.b16 %v3757
      %v4239 = vunpack.c.h.b16 %v3757
      %v4240 = vunpack.c.l.b16 %v3758
      %v4241 = vunpack.c.h.b16 %v3758
      %v4242 = vunpack.c.l.b16 %v3759
      %v4243 = vunpack.c.h.b16 %v3759
      %v4244 = vunpack.c.l.b16 %v3760
      %v4245 = vunpack.c.h.b16 %v3760
      %v4246 = vunpack.c.l.b16 %v3761
      %v4247 = vunpack.c.h.b16 %v3761
      %v4248 = vunpack.c.l.b16 %v3762
      %v4249 = vunpack.c.h.b16 %v3762
      %v4250 = vunpack.c.l.b16 %v3763
      %v4251 = vunpack.c.h.b16 %v3763
      %v4252 = vunpack.c.l.b16 %v3764
      %v4253 = vunpack.c.h.b16 %v3764
      %v4254 = vunpack.c.l.b16 %v3765
      %v4255 = vunpack.c.h.b16 %v3765
      %v4256 = vunpack.c.l.b16 %v3766
      %v4257 = vunpack.c.h.b16 %v3766
      %v4258 = vunpack.c.l.b16 %v3767
      %v4259 = vunpack.c.h.b16 %v3767
      %v4260 = vunpack.c.l.b16 %v3768
      %v4261 = vunpack.c.h.b16 %v3768
      %v4262 = vunpack.c.l.b16 %v3769
      %v4263 = vunpack.c.h.b16 %v3769
      %v4264 = vunpack.c.l.b16 %v3770
      %v4265 = vunpack.c.h.b16 %v3770
      %v4266 = vunpack.c.l.b16 %v3771
      %v4267 = vunpack.c.h.b16 %v3771
      %v4268 = vunpack.c.l.b16 %v3772
      %v4269 = vunpack.c.h.b16 %v3772
      %v4270 = vunpack.c.l.b16 %v3773
      %v4271 = vunpack.c.h.b16 %v3773
      %v4272 = vunpack.c.l.b16 %v3774
      %v4273 = vunpack.c.h.b16 %v3774
      %v4274 = vunpack.c.l.b16 %v3775
      %v4275 = vunpack.c.h.b16 %v3775
      %v4276 = vunpack.c.l.b16 %v3776
      %v4277 = vunpack.c.h.b16 %v3776
      %v4278 = vunpack.c.l.b16 %v3777
      %v4279 = vunpack.c.h.b16 %v3777
      %v4280 = vunpack.c.l.b16 %v3778
      %v4281 = vunpack.c.h.b16 %v3778
      %v4282 = vunpack.c.l.b16 %v3779
      %v4283 = vunpack.c.h.b16 %v3779
      %v4284 = vunpack.c.l.b16 %v3780
      %v4285 = vunpack.c.h.b16 %v3780
      %v4286 = vunpack.c.l.b16 %v3781
      %v4287 = vunpack.c.h.b16 %v3781
      %v4288 = vunpack.c.l.b16 %v3782
      %v4289 = vunpack.c.h.b16 %v3782
      %v4290 = vunpack.c.l.b16 %v3783
      %v4291 = vunpack.c.h.b16 %v3783
      %v4292 = vunpack.c.l.b16 %v3784
      %v4293 = vunpack.c.h.b16 %v3784
      %v4294 = vunpack.c.l.b16 %v3785
      %v4295 = vunpack.c.h.b16 %v3785
      %v4296 = vunpack.c.l.b16 %v3786
      %v4297 = vunpack.c.h.b16 %v3786
      %v4298 = vunpack.c.l.b16 %v3787
      %v4299 = vunpack.c.h.b16 %v3787
      %v4300 = vunpack.c.l.b16 %v3788
      %v4301 = vunpack.c.h.b16 %v3788
      %v4302 = vunpack.c.l.b16 %v3789
      %v4303 = vunpack.c.h.b16 %v3789
      %v4304 = vunpack.c.l.b16 %v3790
      %v4305 = vunpack.c.h.b16 %v3790
      %v4306 = vunpack.c.l.b16 %v3791
      %v4307 = vunpack.c.h.b16 %v3791
      %v4308 = vunpack.c.l.b16 %v3792
      %v4309 = vunpack.c.h.b16 %v3792
      %v4310 = vunpack.c.l.b16 %v3793
      %v4311 = vunpack.c.h.b16 %v3793
      %v4312 = vunpack.c.l.b16 %v3794
      %v4313 = vunpack.c.h.b16 %v3794
      %v4314 = vunpack.c.l.b16 %v3795
      %v4315 = vunpack.c.h.b16 %v3795
      %v4316 = vunpack.c.l.b16 %v3796
      %v4317 = vunpack.c.h.b16 %v3796
      %v4318 = vunpack.c.l.b16 %v3797
      %v4319 = vunpack.c.h.b16 %v3797
      %v4320 = vunpack.c.l.b16 %v3798
      %v4321 = vunpack.c.h.b16 %v3798
      %v4322 = vunpack.c.l.b16 %v3799
      %v4323 = vunpack.c.h.b16 %v3799
      %v4324 = vunpack.c.l.b16 %v3800
      %v4325 = vunpack.c.h.b16 %v3800
      %v4326 = vunpack.c.l.b16 %v3801
      %v4327 = vunpack.c.h.b16 %v3801
      %v4328 = vunpack.c.l.b16 %v3802
      %v4329 = vunpack.c.h.b16 %v3802
      %v4330 = vunpack.c.l.b16 %v3803
      %v4331 = vunpack.c.h.b16 %v3803
      %v4332 = vunpack.c.l.b16 %v3804
      %v4333 = vunpack.c.h.b16 %v3804
      %v4334 = vunpack.c.l.b16 %v3805
      %v4335 = vunpack.c.h.b16 %v3805
      %v4336 = vunpack.c.l.b16 %v3806
      %v4337 = vunpack.c.h.b16 %v3806
      %v4338 = vunpack.c.l.b16 %v3807
      %v4339 = vunpack.c.h.b16 %v3807
      %v4340 = vunpack.c.l.b16 %v3808
      %v4341 = vunpack.c.h.b16 %v3808
      %v4342 = vunpack.c.l.b16 %v3809
      %v4343 = vunpack.c.h.b16 %v3809
      %v4344 = vunpack.c.l.b16 %v3810
      %v4345 = vunpack.c.h.b16 %v3810
      %v4346 = vunpack.c.l.b16 %v3811
      %v4347 = vunpack.c.h.b16 %v3811
      %v4348 = vunpack.c.l.b16 %v3812
      %v4349 = vunpack.c.h.b16 %v3812
      %v4350 = vunpack.c.l.b16 %v3813
      %v4351 = vunpack.c.h.b16 %v3813
      %v4352 = vunpack.c.l.b16 %v3814
      %v4353 = vunpack.c.h.b16 %v3814
      %v4354 = vunpack.c.l.b16 %v3815
      %v4355 = vunpack.c.h.b16 %v3815
      %v4356 = vunpack.c.l.b16 %v3816
      %v4357 = vunpack.c.h.b16 %v3816
      %v4358 = vunpack.c.l.b16 %v3817
      %v4359 = vunpack.c.h.b16 %v3817
      %v4360 = vunpack.c.l.b16 %v3818
      %v4361 = vunpack.c.h.b16 %v3818
      %v4362 = vunpack.c.l.b16 %v3819
      %v4363 = vunpack.c.h.b16 %v3819
      %v4364 = vunpack.c.l.b16 %v3820
      %v4365 = vunpack.c.h.b16 %v3820
      %v4366 = vunpack.c.l.b16 %v3821
      %v4367 = vunpack.c.h.b16 %v3821
      %v4368 = vunpack.c.l.b16 %v3822
      %v4369 = vunpack.c.h.b16 %v3822
      %v4370 = vunpack.c.l.b16 %v3823
      %v4371 = vunpack.c.h.b16 %v3823
      %v4372 = vunpack.c.l.b16 %v3824
      %v4373 = vunpack.c.h.b16 %v3824
      %v4374 = vunpack.c.l.b16 %v3825
      %v4375 = vunpack.c.h.b16 %v3825
      %v4376 = vunpack.c.l.b16 %v3826
      %v4377 = vunpack.c.h.b16 %v3826
      %v4378 = vunpack.c.l.b16 %v3827
      %v4379 = vunpack.c.h.b16 %v3827
      %v4380 = vunpack.c.l.b16 %v3828
      %v4381 = vunpack.c.h.b16 %v3828
      %v4382 = vunpack.c.l.b16 %v3829
      %v4383 = vunpack.c.h.b16 %v3829
      %v4384 = vunpack.c.l.b16 %v3830
      %v4385 = vunpack.c.h.b16 %v3830
      %v4386 = vunpack.c.l.b16 %v3831
      %v4387 = vunpack.c.h.b16 %v3831
      %v4388 = vunpack.c.l.b16 %v3832
      %v4389 = vunpack.c.h.b16 %v3832
      %v4390 = vunpack.c.l.b16 %v3833
      %v4391 = vunpack.c.h.b16 %v3833
      %v4392 = vunpack.c.l.b16 %v3834
      %v4393 = vunpack.c.h.b16 %v3834
      %v4394 = vunpack.c.l.b16 %v3835
      %v4395 = vunpack.c.h.b16 %v3835
      %v4396 = vunpack.c.l.b16 %v3836
      %v4397 = vunpack.c.h.b16 %v3836
      %v4398 = vunpack.c.l.b16 %v3837
      %v4399 = vunpack.c.h.b16 %v3837
      %v4400 = vunpack.c.l.b16 %v3838
      %v4401 = vunpack.c.h.b16 %v3838
      %v4402 = vunpack.c.l.b16 %v3839
      %v4403 = vunpack.c.h.b16 %v3839
      %v4404 = vunpack.c.l.b16 %v3840
      %v4405 = vunpack.c.h.b16 %v3840
      %v4406 = vunpack.c.l.b16 %v3841
      %v4407 = vunpack.c.h.b16 %v3841
      %v4408 = vunpack.c.l.b16 %v3842
      %v4409 = vunpack.c.h.b16 %v3842
      %v4410 = vunpack.c.l.b16 %v3843
      %v4411 = vunpack.c.h.b16 %v3843
      %v4412 = vunpack.c.l.b16 %v3844
      %v4413 = vunpack.c.h.b16 %v3844
      %v4414 = vunpack.c.l.b16 %v3845
      %v4415 = vunpack.c.h.b16 %v3845
      %v4416 = vunpack.c.l.b16 %v3846
      %v4417 = vunpack.c.h.b16 %v3846
      %v4418 = vunpack.c.l.b16 %v3847
      %v4419 = vunpack.c.h.b16 %v3847
      %v4420 = vunpack.c.l.b16 %v3848
      %v4421 = vunpack.c.h.b16 %v3848
      %v4422 = vunpack.c.l.b16 %v3849
      %v4423 = vunpack.c.h.b16 %v3849
      %v4424 = vunpack.c.l.b16 %v3850
      %v4425 = vunpack.c.h.b16 %v3850
      %v4426 = vunpack.c.l.b16 %v3851
      %v4427 = vunpack.c.h.b16 %v3851
      %v4428 = vunpack.c.l.b16 %v3852
      %v4429 = vunpack.c.h.b16 %v3852
      %v4430 = vpack.c.b16 %v4052, %v4046
      %v4431 = vpack.c.b16 %v4053, %v4047
      %v4432 = vpack.c.b16 %v4054, %v4048
      %v4433 = vpack.c.b16 %v4055, %v4049
      %v4434 = vpack.c.b16 %v4056, %v4050
      %v4435 = vpack.c.b16 %v4057, %v4051
      %v4436 = vpack.c.b16 %v4064, %v4058
      %v4437 = vpack.c.b16 %v4065, %v4059
      %v4438 = vpack.c.b16 %v4066, %v4060
      %v4439 = vpack.c.b16 %v4067, %v4061
      %v4440 = vpack.c.b16 %v4068, %v4062
      %v4441 = vpack.c.b16 %v4069, %v4063
      %v4442 = vpack.c.b16 %v4076, %v4070
      %v4443 = vpack.c.b16 %v4077, %v4071
      %v4444 = vpack.c.b16 %v4078, %v4072
      %v4445 = vpack.c.b16 %v4079, %v4073
      %v4446 = vpack.c.b16 %v4080, %v4074
      %v4447 = vpack.c.b16 %v4081, %v4075
      %v4448 = vpack.c.b16 %v4088, %v4082
      %v4449 = vpack.c.b16 %v4089, %v4083
      %v4450 = vpack.c.b16 %v4090, %v4084
      %v4451 = vpack.c.b16 %v4091, %v4085
      %v4452 = vpack.c.b16 %v4092, %v4086
      %v4453 = vpack.c.b16 %v4093, %v4087
      %v4454 = vpack.c.b16 %v4100, %v4094
      %v4455 = vpack.c.b16 %v4101, %v4095
      %v4456 = vpack.c.b16 %v4102, %v4096
      %v4457 = vpack.c.b16 %v4103, %v4097
      %v4458 = vpack.c.b16 %v4104, %v4098
      %v4459 = vpack.c.b16 %v4105, %v4099
      %v4460 = vpack.c.b16 %v4112, %v4106
      %v4461 = vpack.c.b16 %v4113, %v4107
      %v4462 = vpack.c.b16 %v4114, %v4108
      %v4463 = vpack.c.b16 %v4115, %v4109
      %v4464 = vpack.c.b16 %v4116, %v4110
      %v4465 = vpack.c.b16 %v4117, %v4111
      %v4466 = vpack.c.b16 %v4124, %v4118
      %v4467 = vpack.c.b16 %v4125, %v4119
      %v4468 = vpack.c.b16 %v4126, %v4120
      %v4469 = vpack.c.b16 %v4127, %v4121
      %v4470 = vpack.c.b16 %v4128, %v4122
      %v4471 = vpack.c.b16 %v4129, %v4123
      %v4472 = vpack.c.b16 %v4136, %v4130
      %v4473 = vpack.c.b16 %v4137, %v4131
      %v4474 = vpack.c.b16 %v4138, %v4132
      %v4475 = vpack.c.b16 %v4139, %v4133
      %v4476 = vpack.c.b16 %v4140, %v4134
      %v4477 = vpack.c.b16 %v4141, %v4135
      %v4478 = vpack.c.b16 %v4148, %v4142
      %v4479 = vpack.c.b16 %v4149, %v4143
      %v4480 = vpack.c.b16 %v4150, %v4144
      %v4481 = vpack.c.b16 %v4151, %v4145
      %v4482 = vpack.c.b16 %v4152, %v4146
      %v4483 = vpack.c.b16 %v4153, %v4147
      %v4484 = vpack.c.b16 %v4160, %v4154
      %v4485 = vpack.c.b16 %v4161, %v4155
      %v4486 = vpack.c.b16 %v4162, %v4156
      %v4487 = vpack.c.b16 %v4163, %v4157
      %v4488 = vpack.c.b16 %v4164, %v4158
      %v4489 = vpack.c.b16 %v4165, %v4159
      %v4490 = vpack.c.b16 %v4172, %v4166
      %v4491 = vpack.c.b16 %v4173, %v4167
      %v4492 = vpack.c.b16 %v4174, %v4168
      %v4493 = vpack.c.b16 %v4175, %v4169
      %v4494 = vpack.c.b16 %v4176, %v4170
      %v4495 = vpack.c.b16 %v4177, %v4171
      %v4496 = vpack.c.b16 %v4184, %v4178
      %v4497 = vpack.c.b16 %v4185, %v4179
      %v4498 = vpack.c.b16 %v4186, %v4180
      %v4499 = vpack.c.b16 %v4187, %v4181
      %v4500 = vpack.c.b16 %v4188, %v4182
      %v4501 = vpack.c.b16 %v4189, %v4183
      %v4502 = vpack.c.b16 %v4196, %v4190
      %v4503 = vpack.c.b16 %v4197, %v4191
      %v4504 = vpack.c.b16 %v4198, %v4192
      %v4505 = vpack.c.b16 %v4199, %v4193
      %v4506 = vpack.c.b16 %v4200, %v4194
      %v4507 = vpack.c.b16 %v4201, %v4195
      %v4508 = vpack.c.b16 %v4208, %v4202
      %v4509 = vpack.c.b16 %v4209, %v4203
      %v4510 = vpack.c.b16 %v4210, %v4204
      %v4511 = vpack.c.b16 %v4211, %v4205
      %v4512 = vpack.c.b16 %v4212, %v4206
      %v4513 = vpack.c.b16 %v4213, %v4207
      %v4514 = vpack.c.b16 %v4220, %v4214
      %v4515 = vpack.c.b16 %v4221, %v4215
      %v4516 = vpack.c.b16 %v4222, %v4216
      %v4517 = vpack.c.b16 %v4223, %v4217
      %v4518 = vpack.c.b16 %v4224, %v4218
      %v4519 = vpack.c.b16 %v4225, %v4219
      %v4520 = vpack.c.b16 %v4232, %v4226
      %v4521 = vpack.c.b16 %v4233, %v4227
      %v4522 = vpack.c.b16 %v4234, %v4228
      %v4523 = vpack.c.b16 %v4235, %v4229
      %v4524 = vpack.c.b16 %v4236, %v4230
      %v4525 = vpack.c.b16 %v4237, %v4231
      %v4526 = vpack.c.b16 %v4244, %v4238
      %v4527 = vpack.c.b16 %v4245, %v4239
      %v4528 = vpack.c.b16 %v4246, %v4240
      %v4529 = vpack.c.b16 %v4247, %v4241
      %v4530 = vpack.c.b16 %v4248, %v4242
      %v4531 = vpack.c.b16 %v4249, %v4243
      %v4532 = vpack.c.b16 %v4256, %v4250
      %v4533 = vpack.c.b16 %v4257, %v4251
      %v4534 = vpack.c.b16 %v4258, %v4252
      %v4535 = vpack.c.b16 %v4259, %v4253
      %v4536 = vpack.c.b16 %v4260, %v4254
      %v4537 = vpack.c.b16 %v4261, %v4255
      %v4538 = vpack.c.b16 %v4268, %v4262
      %v4539 = vpack.c.b16 %v4269, %v4263
      %v4540 = vpack.c.b16 %v4270, %v4264
      %v4541 = vpack.c.b16 %v4271, %v4265
      %v4542 = vpack.c.b16 %v4272, %v4266
      %v4543 = vpack.c.b16 %v4273, %v4267
      %v4544 = vpack.c.b16 %v4280, %v4274
      %v4545 = vpack.c.b16 %v4281, %v4275
      %v4546 = vpack.c.b16 %v4282, %v4276
      %v4547 = vpack.c.b16 %v4283, %v4277
      %v4548 = vpack.c.b16 %v4284, %v4278
      %v4549 = vpack.c.b16 %v4285, %v4279
      %v4550 = vpack.c.b16 %v4292, %v4286
      %v4551 = vpack.c.b16 %v4293, %v4287
      %v4552 = vpack.c.b16 %v4294, %v4288
      %v4553 = vpack.c.b16 %v4295, %v4289
      %v4554 = vpack.c.b16 %v4296, %v4290
      %v4555 = vpack.c.b16 %v4297, %v4291
      %v4556 = vpack.c.b16 %v4304, %v4298
      %v4557 = vpack.c.b16 %v4305, %v4299
      %v4558 = vpack.c.b16 %v4306, %v4300
      %v4559 = vpack.c.b16 %v4307, %v4301
      %v4560 = vpack.c.b16 %v4308, %v4302
      %v4561 = vpack.c.b16 %v4309, %v4303
      %v4562 = vpack.c.b16 %v4316, %v4310
      %v4563 = vpack.c.b16 %v4317, %v4311
      %v4564 = vpack.c.b16 %v4318, %v4312
      %v4565 = vpack.c.b16 %v4319, %v4313
      %v4566 = vpack.c.b16 %v4320, %v4314
      %v4567 = vpack.c.b16 %v4321, %v4315
      %v4568 = vpack.c.b16 %v4328, %v4322
      %v4569 = vpack.c.b16 %v4329, %v4323
      %v4570 = vpack.c.b16 %v4330, %v4324
      %v4571 = vpack.c.b16 %v4331, %v4325
      %v4572 = vpack.c.b16 %v4332, %v4326
      %v4573 = vpack.c.b16 %v4333, %v4327
      %v4574 = vpack.c.b16 %v4340, %v4334
      %v4575 = vpack.c.b16 %v4341, %v4335
      %v4576 = vpack.c.b16 %v4342, %v4336
      %v4577 = vpack.c.b16 %v4343, %v4337
      %v4578 = vpack.c.b16 %v4344, %v4338
      %v4579 = vpack.c.b16 %v4345, %v4339
      %v4580 = vpack.c.b16 %v4352, %v4346
      %v4581 = vpack.c.b16 %v4353, %v4347
      %v4582 = vpack.c.b16 %v4354, %v4348
      %v4583 = vpack.c.b16 %v4355, %v4349
      %v4584 = vpack.c.b16 %v4356, %v4350
      %v4585 = vpack.c.b16 %v4357, %v4351
      %v4586 = vpack.c.b16 %v4364, %v4358
      %v4587 = vpack.c.b16 %v4365, %v4359
      %v4588 = vpack.c.b16 %v4366, %v4360
      %v4589 = vpack.c.b16 %v4367, %v4361
      %v4590 = vpack.c.b16 %v4368, %v4362
      %v4591 = vpack.c.b16 %v4369, %v4363
      %v4592 = vpack.c.b16 %v4376, %v4370
      %v4593 = vpack.c.b16 %v4377, %v4371
      %v4594 = vpack.c.b16 %v4378, %v4372
      %v4595 = vpack.c.b16 %v4379, %v4373
      %v4596 = vpack.c.b16 %v4380, %v4374
      %v4597 = vpack.c.b16 %v4381, %v4375
      %v4598 = vpack.c.b16 %v4388, %v4382
      %v4599 = vpack.c.b16 %v4389, %v4383
      %v4600 = vpack.c.b16 %v4390, %v4384
      %v4601 = vpack.c.b16 %v4391, %v4385
      %v4602 = vpack.c.b16 %v4392, %v4386
      %v4603 = vpack.c.b16 %v4393, %v4387
      %v4604 = vpack.c.b16 %v4400, %v4394
      %v4605 = vpack.c.b16 %v4401, %v4395
      %v4606 = vpack.c.b16 %v4402, %v4396
      %v4607 = vpack.c.b16 %v4403, %v4397
      %v4608 = vpack.c.b16 %v4404, %v4398
      %v4609 = vpack.c.b16 %v4405, %v4399
      %v4610 = vpack.c.b16 %v4412, %v4406
      %v4611 = vpack.c.b16 %v4413, %v4407
      %v4612 = vpack.c.b16 %v4414, %v4408
      %v4613 = vpack.c.b16 %v4415, %v4409
      %v4614 = vpack.c.b16 %v4416, %v4410
      %v4615 = vpack.c.b16 %v4417, %v4411
      %v4616 = vpack.c.b16 %v4424, %v4418
      %v4617 = vpack.c.b16 %v4425, %v4419
      %v4618 = vpack.c.b16 %v4426, %v4420
      %v4619 = vpack.c.b16 %v4427, %v4421
      %v4620 = vpack.c.b16 %v4428, %v4422
      %v4621 = vpack.c.b16 %v4429, %v4423
      %v4815 = vlaneseq
      %v4816 = vshrl.u32 %v4815, 7
      %v4817 = vsub.s32 0, %v4816
      %v4818 = vrot.slane %v3853, %v4817
      %v4819 = vlaneseq
      %v4820 = vshrl.u32 %v4819, 7
      %v4821 = vsub.s32 1, %v4820
      %v4822 = vrot.slane %v3853, %v4821
      %v4823 = vlaneseq
      %v4824 = vshrl.u32 %v4823, 7
      %v4825 = vsub.s32 2, %v4824
      %v4826 = vrot.slane %v3853, %v4825
      %v4827 = vlaneseq
      %v4828 = vshrl.u32 %v4827, 7
      %v4829 = vsub.s32 3, %v4828
      %v4830 = vrot.slane %v3853, %v4829
      %v4831 = vlaneseq
      %v4832 = vshrl.u32 %v4831, 7
      %v4833 = vsub.s32 4, %v4832
      %v4834 = vrot.slane %v3853, %v4833
      %v4835 = vlaneseq
      %v4836 = vshrl.u32 %v4835, 7
      %v4837 = vsub.s32 5, %v4836
      %v4838 = vrot.slane %v3853, %v4837
      %4845 = vmatprep.subr.bf16.mxu0 %v4431
      %4846 = vmatpush1.bf16.msra.mxu0 %v4430
      %4847 = vmatprep.subr.bf16.mxu0 %v4437
      %4848 = vmatpush1.bf16.msra.mxu0 %v4436
      %4849 = vmatprep.subr.bf16.mxu0 %v4443
      %4850 = vmatpush1.bf16.msra.mxu0 %v4442
      %4851 = vmatprep.subr.bf16.mxu0 %v4449
      %4852 = vmatpush1.bf16.msra.mxu0 %v4448
      %4853 = vmatprep.subr.bf16.mxu0 %v4455
      %4854 = vmatpush1.bf16.msra.mxu0 %v4454
      %4855 = vmatprep.subr.bf16.mxu0 %v4461
      %4856 = vmatpush1.bf16.msra.mxu0 %v4460
      %4857 = vmatprep.subr.bf16.mxu0 %v4467
      %4858 = vmatpush1.bf16.msra.mxu0 %v4466
      %4859 = vmatprep.subr.bf16.mxu0 %v4473
      %4860 = vmatpush1.bf16.msra.mxu0 %v4472
      %4861 = vmatprep.subr.bf16.mxu0 %v4479
      %4862 = vmatpush1.bf16.msra.mxu0 %v4478
      %4863 = vmatprep.subr.bf16.mxu0 %v4485
      %4864 = vmatpush1.bf16.msra.mxu0 %v4484
      %4865 = vmatprep.subr.bf16.mxu0 %v4491
      %4866 = vmatpush1.bf16.msra.mxu0 %v4490
      %4867 = vmatprep.subr.bf16.mxu0 %v4497
      %4868 = vmatpush1.bf16.msra.mxu0 %v4496
      %4869 = vmatprep.subr.bf16.mxu0 %v4503
      %4870 = vmatpush1.bf16.msra.mxu0 %v4502
      %4871 = vmatprep.subr.bf16.mxu0 %v4509
      %4872 = vmatpush1.bf16.msra.mxu0 %v4508
      %4873 = vmatprep.subr.bf16.mxu0 %v4515
      %4874 = vmatpush1.bf16.msra.mxu0 %v4514
      %4875 = vmatprep.subr.bf16.mxu0 %v4521
      %4876 = vmatpush1.bf16.msra.mxu0 %v4520
      %4877 = vmatprep.mubr.bf16.mxu0 %v3658
      %4878 = vmatmul.mubr.bf16.gmra.mrb[0].mxu0 %v3657
      %v4879 = vpop.f32.mrb[0].mxu0
      %v4880 = vadd.f32 %v4818, %v4879
      %v4881 = vpop.f32.mrb[0].mxu0
      %v4882 = vadd.f32 %v4822, %v4881
      %v4883 = vpop.f32.mrb[0].mxu0
      %v4884 = vpop.f32.mrb[0].mxu0
      %4885 = vdwg.mxu0
      %4886 = vmatprep.subr.bf16.mxu0 %v4527
      %4887 = vmatpush1.bf16.msra.mxu0 %v4526
      %4888 = vmatprep.subr.bf16.mxu0 %v4533
      %4889 = vmatpush1.bf16.msra.mxu0 %v4532
      %4890 = vmatprep.subr.bf16.mxu0 %v4539
      %4891 = vmatpush1.bf16.msra.mxu0 %v4538
      %4892 = vmatprep.subr.bf16.mxu0 %v4545
      %4893 = vmatpush1.bf16.msra.mxu0 %v4544
      %4894 = vmatprep.subr.bf16.mxu0 %v4551
      %4895 = vmatpush1.bf16.msra.mxu0 %v4550
      %4896 = vmatprep.subr.bf16.mxu0 %v4557
      %4897 = vmatpush1.bf16.msra.mxu0 %v4556
      %4898 = vmatprep.subr.bf16.mxu0 %v4563
      %4899 = vmatpush1.bf16.msra.mxu0 %v4562
      %4900 = vmatprep.subr.bf16.mxu0 %v4569
      %4901 = vmatpush1.bf16.msra.mxu0 %v4568
      %4902 = vmatprep.subr.bf16.mxu0 %v4575
      %4903 = vmatpush1.bf16.msra.mxu0 %v4574
      %4904 = vmatprep.subr.bf16.mxu0 %v4581
      %4905 = vmatpush1.bf16.msra.mxu0 %v4580
      %4906 = vmatprep.subr.bf16.mxu0 %v4587
      %4907 = vmatpush1.bf16.msra.mxu0 %v4586
      %4908 = vmatprep.subr.bf16.mxu0 %v4593
      %4909 = vmatpush1.bf16.msra.mxu0 %v4592
      %4910 = vmatprep.subr.bf16.mxu0 %v4599
      %4911 = vmatpush1.bf16.msra.mxu0 %v4598
      %4912 = vmatprep.subr.bf16.mxu0 %v4605
      %4913 = vmatpush1.bf16.msra.mxu0 %v4604
      %4914 = vmatprep.subr.bf16.mxu0 %v4611
      %4915 = vmatpush1.bf16.msra.mxu0 %v4610
      %4916 = vmatprep.subr.bf16.mxu0 %v4617
      %4917 = vmatpush1.bf16.msra.mxu0 %v4616
      %4918 = vmatprep.mubr.bf16.mxu0 %v3660
      %4919 = vmatmul.mubr.bf16.gmra.mrb[0].mxu0 %v3659
      %v4920 = vpop.f32.mrb[0].mxu0
      %v4921 = vadd.f32 %v4880, %v4920
      %v4922 = vpop.f32.mrb[0].mxu0
      %v4923 = vadd.f32 %v4882, %v4922
      %v4924 = vpop.f32.mrb[0].mxu0
      %v4925 = vpop.f32.mrb[0].mxu0
      %4926 = vdwg.mxu0
      %4927 = vmatprep.subr.bf16.mxu0 %v4433
      %4928 = vmatpush1.bf16.msra.mxu0 %v4432
      %4929 = vmatprep.subr.bf16.mxu0 %v4439
      %4930 = vmatpush1.bf16.msra.mxu0 %v4438
      %4931 = vmatprep.subr.bf16.mxu0 %v4445
      %4932 = vmatpush1.bf16.msra.mxu0 %v4444
      %4933 = vmatprep.subr.bf16.mxu0 %v4451
      %4934 = vmatpush1.bf16.msra.mxu0 %v4450
      %4935 = vmatprep.subr.bf16.mxu0 %v4457
      %4936 = vmatpush1.bf16.msra.mxu0 %v4456
      %4937 = vmatprep.subr.bf16.mxu0 %v4463
      %4938 = vmatpush1.bf16.msra.mxu0 %v4462
      %4939 = vmatprep.subr.bf16.mxu0 %v4469
      %4940 = vmatpush1.bf16.msra.mxu0 %v4468
      %4941 = vmatprep.subr.bf16.mxu0 %v4475
      %4942 = vmatpush1.bf16.msra.mxu0 %v4474
      %4943 = vmatprep.subr.bf16.mxu0 %v4481
      %4944 = vmatpush1.bf16.msra.mxu0 %v4480
      %4945 = vmatprep.subr.bf16.mxu0 %v4487
      %4946 = vmatpush1.bf16.msra.mxu0 %v4486
      %4947 = vmatprep.subr.bf16.mxu0 %v4493
      %4948 = vmatpush1.bf16.msra.mxu0 %v4492
      %4949 = vmatprep.subr.bf16.mxu0 %v4499
      %4950 = vmatpush1.bf16.msra.mxu0 %v4498
      %4951 = vmatprep.subr.bf16.mxu0 %v4505
      %4952 = vmatpush1.bf16.msra.mxu0 %v4504
      %4953 = vmatprep.subr.bf16.mxu0 %v4511
      %4954 = vmatpush1.bf16.msra.mxu0 %v4510
      %4955 = vmatprep.subr.bf16.mxu0 %v4517
      %4956 = vmatpush1.bf16.msra.mxu0 %v4516
      %4957 = vmatprep.subr.bf16.mxu0 %v4523
      %4958 = vmatpush1.bf16.msra.mxu0 %v4522
      %4959 = vmatprep.mubr.bf16.mxu0 %v3658
      %4960 = vmatmul.mubr.bf16.gmra.mrb[0].mxu0 %v3657
      %v4961 = vpop.f32.mrb[0].mxu0
      %v4962 = vadd.f32 %v4826, %v4961
      %v4963 = vpop.f32.mrb[0].mxu0
      %v4964 = vadd.f32 %v4830, %v4963
      %v4965 = vpop.f32.mrb[0].mxu0
      %v4966 = vpop.f32.mrb[0].mxu0
      %4967 = vdwg.mxu0
      %4968 = vmatprep.subr.bf16.mxu0 %v4529
      %4969 = vmatpush1.bf16.msra.mxu0 %v4528
      %4970 = vmatprep.subr.bf16.mxu0 %v4535
      %4971 = vmatpush1.bf16.msra.mxu0 %v4534
      %4972 = vmatprep.subr.bf16.mxu0 %v4541
      %4973 = vmatpush1.bf16.msra.mxu0 %v4540
      %4974 = vmatprep.subr.bf16.mxu0 %v4547
      %4975 = vmatpush1.bf16.msra.mxu0 %v4546
      %4976 = vmatprep.subr.bf16.mxu0 %v4553
      %4977 = vmatpush1.bf16.msra.mxu0 %v4552
      %4978 = vmatprep.subr.bf16.mxu0 %v4559
      %4979 = vmatpush1.bf16.msra.mxu0 %v4558
      %4980 = vmatprep.subr.bf16.mxu0 %v4565
      %4981 = vmatpush1.bf16.msra.mxu0 %v4564
      %4982 = vmatprep.subr.bf16.mxu0 %v4571
      %4983 = vmatpush1.bf16.msra.mxu0 %v4570
      %4984 = vmatprep.subr.bf16.mxu0 %v4577
      %4985 = vmatpush1.bf16.msra.mxu0 %v4576
      %4986 = vmatprep.subr.bf16.mxu0 %v4583
      %4987 = vmatpush1.bf16.msra.mxu0 %v4582
      %4988 = vmatprep.subr.bf16.mxu0 %v4589
      %4989 = vmatpush1.bf16.msra.mxu0 %v4588
      %4990 = vmatprep.subr.bf16.mxu0 %v4595
      %4991 = vmatpush1.bf16.msra.mxu0 %v4594
      %4992 = vmatprep.subr.bf16.mxu0 %v4601
      %4993 = vmatpush1.bf16.msra.mxu0 %v4600
      %4994 = vmatprep.subr.bf16.mxu0 %v4607
      %4995 = vmatpush1.bf16.msra.mxu0 %v4606
      %4996 = vmatprep.subr.bf16.mxu0 %v4613
      %4997 = vmatpush1.bf16.msra.mxu0 %v4612
      %4998 = vmatprep.subr.bf16.mxu0 %v4619
      %4999 = vmatpush1.bf16.msra.mxu0 %v4618
      %5000 = vmatprep.mubr.bf16.mxu0 %v3660
      %5001 = vmatmul.mubr.bf16.gmra.mrb[0].mxu0 %v3659
      %v5002 = vpop.f32.mrb[0].mxu0
      %v5003 = vadd.f32 %v4962, %v5002
      %v5004 = vpop.f32.mrb[0].mxu0
      %v5005 = vadd.f32 %v4964, %v5004
      %v5006 = vpop.f32.mrb[0].mxu0
      %v5007 = vpop.f32.mrb[0].mxu0
      %5008 = vdwg.mxu0
      %5009 = vmatprep.subr.bf16.mxu0 %v4435
      %5010 = vmatpush1.bf16.msra.mxu0 %v4434
      %5011 = vmatprep.subr.bf16.mxu0 %v4441
      %5012 = vmatpush1.bf16.msra.mxu0 %v4440
      %5013 = vmatprep.subr.bf16.mxu0 %v4447
      %5014 = vmatpush1.bf16.msra.mxu0 %v4446
      %5015 = vmatprep.subr.bf16.mxu0 %v4453
      %5016 = vmatpush1.bf16.msra.mxu0 %v4452
      %5017 = vmatprep.subr.bf16.mxu0 %v4459
      %5018 = vmatpush1.bf16.msra.mxu0 %v4458
      %5019 = vmatprep.subr.bf16.mxu0 %v4465
      %5020 = vmatpush1.bf16.msra.mxu0 %v4464
      %5021 = vmatprep.subr.bf16.mxu0 %v4471
      %5022 = vmatpush1.bf16.msra.mxu0 %v4470
      %5023 = vmatprep.subr.bf16.mxu0 %v4477
      %5024 = vmatpush1.bf16.msra.mxu0 %v4476
      %5025 = vmatprep.subr.bf16.mxu0 %v4483
      %5026 = vmatpush1.bf16.msra.mxu0 %v4482
      %5027 = vmatprep.subr.bf16.mxu0 %v4489
      %5028 = vmatpush1.bf16.msra.mxu0 %v4488
      %5029 = vmatprep.subr.bf16.mxu0 %v4495
      %5030 = vmatpush1.bf16.msra.mxu0 %v4494
      %5031 = vmatprep.subr.bf16.mxu0 %v4501
      %5032 = vmatpush1.bf16.msra.mxu0 %v4500
      %5033 = vmatprep.subr.bf16.mxu0 %v4507
      %5034 = vmatpush1.bf16.msra.mxu0 %v4506
      %5035 = vmatprep.subr.bf16.mxu0 %v4513
      %5036 = vmatpush1.bf16.msra.mxu0 %v4512
      %5037 = vmatprep.subr.bf16.mxu0 %v4519
      %5038 = vmatpush1.bf16.msra.mxu0 %v4518
      %5039 = vmatprep.subr.bf16.mxu0 %v4525
      %5040 = vmatpush1.bf16.msra.mxu0 %v4524
      %5041 = vmatprep.mubr.bf16.mxu0 %v3658
      %5042 = vmatmul.mubr.bf16.gmra.mrb[0].mxu0 %v3657
      %v5043 = vpop.f32.mrb[0].mxu0
      %v5044 = vadd.f32 %v4834, %v5043
      %v5045 = vpop.f32.mrb[0].mxu0
      %v5046 = vadd.f32 %v4838, %v5045
      %v5047 = vpop.f32.mrb[0].mxu0
      %v5048 = vpop.f32.mrb[0].mxu0
      %5049 = vdwg.mxu0
      %5050 = vmatprep.subr.bf16.mxu0 %v4531
      %5051 = vmatpush1.bf16.msra.mxu0 %v4530
      %5052 = vmatprep.subr.bf16.mxu0 %v4537
      %5053 = vmatpush1.bf16.msra.mxu0 %v4536
      %5054 = vmatprep.subr.bf16.mxu0 %v4543
      %5055 = vmatpush1.bf16.msra.mxu0 %v4542
      %5056 = vmatprep.subr.bf16.mxu0 %v4549
      %5057 = vmatpush1.bf16.msra.mxu0 %v4548
      %5058 = vmatprep.subr.bf16.mxu0 %v4555
      %5059 = vmatpush1.bf16.msra.mxu0 %v4554
      %5060 = vmatprep.subr.bf16.mxu0 %v4561
      %5061 = vmatpush1.bf16.msra.mxu0 %v4560
      %5062 = vmatprep.subr.bf16.mxu0 %v4567
      %5063 = vmatpush1.bf16.msra.mxu0 %v4566
      %5064 = vmatprep.subr.bf16.mxu0 %v4573
      %5065 = vmatpush1.bf16.msra.mxu0 %v4572
      %5066 = vmatprep.subr.bf16.mxu0 %v4579
      %5067 = vmatpush1.bf16.msra.mxu0 %v4578
      %5068 = vmatprep.subr.bf16.mxu0 %v4585
      %5069 = vmatpush1.bf16.msra.mxu0 %v4584
      %5070 = vmatprep.subr.bf16.mxu0 %v4591
      %5071 = vmatpush1.bf16.msra.mxu0 %v4590
      %5072 = vmatprep.subr.bf16.mxu0 %v4597
      %5073 = vmatpush1.bf16.msra.mxu0 %v4596
      %5074 = vmatprep.subr.bf16.mxu0 %v4603
      %5075 = vmatpush1.bf16.msra.mxu0 %v4602
      %5076 = vmatprep.subr.bf16.mxu0 %v4609
      %5077 = vmatpush1.bf16.msra.mxu0 %v4608
      %5078 = vmatprep.subr.bf16.mxu0 %v4615
      %5079 = vmatpush1.bf16.msra.mxu0 %v4614
      %5080 = vmatprep.subr.bf16.mxu0 %v4621
      %5081 = vmatpush1.bf16.msra.mxu0 %v4620
      %5082 = vmatprep.mubr.bf16.mxu0 %v3660
      %5083 = vmatmul.mubr.bf16.gmra.mrb[0].mxu0 %v3659
      %v5084 = vpop.f32.mrb[0].mxu0
      %v5085 = vadd.f32 %v5044, %v5084
      %v5086 = vpop.f32.mrb[0].mxu0
      %v5087 = vadd.f32 %v5046, %v5086
      %v5088 = vpop.f32.mrb[0].mxu0
      %v5089 = vpop.f32.mrb[0].mxu0
      %5090 = vdwg.mxu0
      %vm5091 = vcmask 1040384
      %v5092 = vsel %vm5091, %v4921, -inf
      %5093 = vmax.xlane.f32.xlu0 %v5092
      %v5094 = vpop.xlane.xlu0 %5093
      %v5095 = vsub.f32 %v4921, %v5094
      %v5096 = vmul.f32 %v5095, 1.442695
      %v5097 = vpow.pop %v5096
      %v5098 = vsel %vm5091, %v5097, 0.0
      %5099 = vadd.xlane.f32.xlu0 %v5098
      %v5100 = vpop.xlane.xlu0 %5099
      %v5101 = vrcp.pop %v5100
      %v5102 = vmul.f32 %v5097, %v5101
      %v5103 = vsel %vm5091, %v4923, -inf
      %5104 = vmax.xlane.f32.xlu0 %v5103
      %v5105 = vpop.xlane.xlu0 %5104
      %v5106 = vsub.f32 %v4923, %v5105
      %v5107 = vmul.f32 %v5106, 1.442695
      %v5108 = vpow.pop %v5107
      %v5109 = vsel %vm5091, %v5108, 0.0
      %5110 = vadd.xlane.f32.xlu0 %v5109
      %v5111 = vpop.xlane.xlu0 %5110
      %v5112 = vrcp.pop %v5111
      %v5113 = vmul.f32 %v5108, %v5112
      %v5114 = vsel %vm5091, %v5003, -inf
      %5115 = vmax.xlane.f32.xlu0 %v5114
      %v5116 = vpop.xlane.xlu0 %5115
      %v5117 = vsub.f32 %v5003, %v5116
      %v5118 = vmul.f32 %v5117, 1.442695
      %v5119 = vpow.pop %v5118
      %v5120 = vsel %vm5091, %v5119, 0.0
      %5121 = vadd.xlane.f32.xlu0 %v5120
      %v5122 = vpop.xlane.xlu0 %5121
      %v5123 = vrcp.pop %v5122
      %v5124 = vmul.f32 %v5119, %v5123
      %v5125 = vsel %vm5091, %v5005, -inf
      %5126 = vmax.xlane.f32.xlu0 %v5125
      %v5127 = vpop.xlane.xlu0 %5126
      %v5128 = vsub.f32 %v5005, %v5127
      %v5129 = vmul.f32 %v5128, 1.442695
      %v5130 = vpow.pop %v5129
      %v5131 = vsel %vm5091, %v5130, 0.0
      %5132 = vadd.xlane.f32.xlu0 %v5131
      %v5133 = vpop.xlane.xlu0 %5132
      %v5134 = vrcp.pop %v5133
      %v5135 = vmul.f32 %v5130, %v5134
      %v5136 = vsel %vm5091, %v5085, -inf
      %5137 = vmax.xlane.f32.xlu0 %v5136
      %v5138 = vpop.xlane.xlu0 %5137
      %v5139 = vsub.f32 %v5085, %v5138
      %v5140 = vmul.f32 %v5139, 1.442695
      %v5141 = vpow.pop %v5140
      %v5142 = vsel %vm5091, %v5141, 0.0
      %5143 = vadd.xlane.f32.xlu0 %v5142
      %v5144 = vpop.xlane.xlu0 %5143
      %v5145 = vrcp.pop %v5144
      %v5146 = vmul.f32 %v5141, %v5145
      %v5147 = vsel %vm5091, %v5087, -inf
      %5148 = vmax.xlane.f32.xlu0 %v5147
      %v5149 = vpop.xlane.xlu0 %5148
      %v5150 = vsub.f32 %v5087, %v5149
      %v5151 = vmul.f32 %v5150, 1.442695
      %v5152 = vpow.pop %v5151
      %v5153 = vsel %vm5091, %v5152, 0.0
      %5154 = vadd.xlane.f32.xlu0 %v5153
      %v5155 = vpop.xlane.xlu0 %5154
      %v5156 = vrcp.pop %v5155
      %v5157 = vmul.f32 %v5152, %v5156
      %v5164 = vcombine.low %v5102, %v5113
      %v5165 = vcombine.low %v5124, %v5135
      %v5166 = vcombine.low %v5146, %v5157
      %v5168 = vunpack.c.l.s4 1966171168
      %v5169 = vunpack.c.0.s8 %v5168
      %v5170 = vlaneseq
      %v5171 = vshrl.u32 %v5170, 7
      %v5172 = vsub.s32 %v5169, %v5171
      %v5173 = vrot.slane %v5164, %v5172
      %v5175 = vunpack.c.l.s4 1966171168
      %v5176 = vunpack.c.0.s8 %v5175
      %v5177 = vlaneseq
      %v5178 = vshrl.u32 %v5177, 7
      %v5179 = vsub.s32 %v5176, %v5178
      %v5180 = vrot.slane %v5165, %v5179
      %v5182 = vunpack.c.l.s4 1966171168
      %v5183 = vunpack.c.0.s8 %v5182
      %v5184 = vlaneseq
      %v5185 = vshrl.u32 %v5184, 7
      %v5186 = vsub.s32 %v5183, %v5185
      %v5187 = vrot.slane %v5166, %v5186
      %v5188 = vcombine.low %v5173, %v5180
      %v5190 = vunpack.c.l.s4 1966171168
      %v5191 = vunpack.c.0.s8 %v5190
      %v5192 = vlaneseq
      %v5193 = vshrl.u32 %v5192, 7
      %v5194 = vsub.s32 %v5191, %v5193
      %v5195 = vrot.slane %v5188, %v5194
      %v5197 = vunpack.c.l.s4 1966171168
      %v5198 = vunpack.c.0.s8 %v5197
      %v5199 = vlaneseq
      %v5200 = vshrl.u32 %v5199, 7
      %v5201 = vsub.s32 %v5198, %v5200
      %v5202 = vrot.slane %v5187, %v5201
      %v5203 = vcombine.low %v5195, %v5202
      %v5205 = vlaneseq
      %vm5206 = vcmp.ge.s32.totalorder %v5205, 0
      %vm5207 = vcmp.lt.s32.totalorder %v5205, 768
      %vm5208 = vmand %vm5206, %vm5207
      %5209 = vst.msk [vmem:[%s384] sm:$0x3f] %vm5208, %v5203
      %p5210 = scmp.lt.s32.totalorder %s22, 1
      %s5211 = scalar_select %p5210, %s22, 1
      %s5212 = smul.addr %s5211, 6
      %s5213 = scalar_lea.vmem %s11, %s5212
      // Predicated region
      $region65: #{forward.1} parent=63 // pred_check
        %p5214 = pneg %p276
      $region66: #{forward.1} parent=63 // pred_check_branch
        %5216 = sbr.rel (%p5214) target = $region68
      $region67: #{forward.1} parent=63 // pred_region
        _
      $region68: #{forward.1} parent=63 // pred_fallthru
        _
    $region64: #{forward.1} parent=5 // pred_fallthru
      _
    %p5217 = scmp.le.s32.totalorder 2, %s17
    // Predicated region
    $region69: #{forward.1} parent=5 // pred_check
      %p5218 = pneg %p5217
    $region70: #{forward.1} parent=5 // pred_check_branch
      %5220 = sbr.rel (%p5218) target = $region72
    $region71: #{forward.1} parent=5 // pred_region
      %s5221 = ssub.s32 %s17, 2
      // Predicated region
      $region73: #{forward.1} parent=71 // pred_check
        %p5222 = pneg %p282
      $region74: #{forward.1} parent=71 // pred_check_branch
        %5224 = sbr.rel (%p5222) target = $region76
      $region75: #{forward.1} parent=71 // pred_region
        %p5225 = scmp.lt.s32.totalorder %s23, 1
        %s5226 = scalar_select %p5225, %s23, 1
        %s5227 = smul.addr %s5226, 6
        %s5228 = scalar_lea.vmem %s11, %s5227
      $region76: #{forward.1} parent=71 // pred_fallthru
        _
    $region72: #{forward.1} parent=5 // pred_fallthru
      _
  $region6: #{forward.1} parent=0 // loop_footer
    %s21 = sadd.s32 1, %s17
  $region7: #{forward.1} parent=0 // loop_footer_branch
    %16 = sbr.rel target = $region3
  $region8: #{forward.1} parent=0 // loop_exit
    _

</llo_original>
